<compile_context>
chip_gen: v7x
topology: tpu7x:2x2x1
jax: 0.10.0
libtpu: 0.0.40
codegen_flags: <defaults>
</compile_context>

<pallas_src>
import functools

import jax
import jax.numpy as jnp
import numpy as np
from jax.experimental import pallas as pl
from jax.experimental.pallas import tpu as pltpu


def attention_kernel(C, num_heads, x_ref, qkvw_ref, projw_ref, projb_ref, o_ref):
    """One grid step: full multi-head self-attention for `block_b` batch items."""
    block_b, N, _ = x_ref.shape
    hd = C // num_heads
    BH = block_b * num_heads

    # ---- qkv projection: one (block_b*N, C) @ (C, 3C) bf16 GEMM, f32 acc ----
    x = x_ref[...].reshape(block_b * N, C).astype(jnp.bfloat16)
    qkv = jnp.dot(x, qkvw_ref[...], preferred_element_type=jnp.float32)
    qkv = qkv.astype(jnp.bfloat16)  # single cast pass (q scale pre-folded in weight)

    # Lane-aligned column slices of the flat (block_b*N, 3C) result (free static
    # views), then ONE reshape+transpose per tensor to (block_b*heads, N, hd).
    def heads_first(t2d):
        t = t2d.reshape(block_b, N, num_heads, hd)
        return jnp.transpose(t, (0, 2, 1, 3)).reshape(BH, N, hd)

    q = heads_first(qkv[:, 0 * C:1 * C])
    k = heads_first(qkv[:, 1 * C:2 * C])
    v = heads_first(qkv[:, 2 * C:3 * C])

    # ---- scores for ALL block_b*heads pairs in ONE batched dot_general ----
    s = jax.lax.dot_general(
        q, k,
        dimension_numbers=(((2,), (2,)), ((0,), (0,))),
        preferred_element_type=jnp.float32)            # (BH, N, N) f32

    # TODO(synk): relative-position-bias path (window_size != None) not
    # implemented; module default is window_size=None.

    # Numerically-stable softmax in f32; EUP reciprocal for the denominator.
    s = s - jnp.max(s, axis=-1, keepdims=True)
    p = jnp.exp(s)
    p = p * pl.reciprocal(jnp.sum(p, axis=-1, keepdims=True), approx=True)

    # ---- P @ V, one batched dot_general over block_b*heads ----
    o = jax.lax.dot_general(
        p.astype(jnp.bfloat16), v,
        dimension_numbers=(((2,), (1,)), ((0,), (0,))),
        preferred_element_type=jnp.float32)            # (BH, N, hd) f32

    # Single remaining output transpose: (b, h, N, hd) -> (b*N, h*hd) = (b*N, C).
    attn_out = jnp.transpose(
        o.astype(jnp.bfloat16).reshape(block_b, num_heads, N, hd),
        (0, 2, 1, 3)).reshape(block_b * N, C)

    # ---- output projection (bf16 GEMM, f32 acc, f32 bias add) ----
    y = jnp.dot(attn_out, projw_ref[...],
                preferred_element_type=jnp.float32) + projb_ref[...]
    o_ref[...] = y.reshape(block_b, N, C).astype(o_ref.dtype)


def _vmem_bytes_estimate(block_b, N, C, num_heads, io_itemsize):
    """Rough per-step VMEM footprint: intermediates + double-buffered operands."""
    BH = block_b * num_heads
    scores = BH * N * N * (4 + 4 + 2)              # s, p (f32) + p (bf16)
    qkv = block_b * N * 3 * C * (4 + 2)            # f32 accumulator + bf16 copy
    attn = block_b * N * C * (4 + 2 + 4)           # o f32, attn_out bf16, y f32
    io = 2 * 2 * block_b * N * C * io_itemsize     # double-buffered x / out tiles
    weights = 2 * (3 * C * C + C * C) * 2 + 2 * C * 4
    return scores + qkv + attn + io + weights


def attention_forward(x, qkv_w, proj_w, proj_b, num_heads, *, block_b=None,
                      vmem_limit_bytes=32 * 1024 * 1024):
    """x: (B, N, C).  qkv_w: (3C, C), proj_w: (C, C), proj_b: (C,) -- PyTorch layout."""
    B, N, C = x.shape
    hd = C // num_heads
    scale = hd ** -0.5

    if block_b is None:
        # Default: exactly two maximal "parallel" grid steps (one per TensorCore
        # on v7x).  On single-TC v5e/v6e pass block_b=B for one big step.
        block_b = B // 2 if (B % 2 == 0 and B >= 2) else B
    # Shrink block_b (to a divisor of B) if the f32 score tensor + intermediates
    # would overflow the scoped VMEM budget (coarse stand-in for KV tiling).
    budget = int(0.7 * vmem_limit_bytes)
    while (block_b > 1 and
           _vmem_bytes_estimate(block_b, N, C, num_heads, x.dtype.itemsize) > budget):
        block_b = max(d for d in range(1, block_b) if B % d == 0)
    assert B % block_b == 0, "B must be divisible by block_b"

    # One-time parameter prep (outside the kernel): pre-transpose to (in, out),
    # fold the q scale into the q-columns, cast weights to bf16.
    qkv_wT = jnp.concatenate(
        [qkv_w.T[:, :C] * scale, qkv_w.T[:, C:]], axis=1).astype(jnp.bfloat16)  # (C, 3C)
    proj_wT = proj_w.T.astype(jnp.bfloat16)                                     # (C, C)
    proj_b2 = proj_b.reshape(1, C).astype(jnp.float32)                          # (1, C)

    kernel = functools.partial(attention_kernel, C, num_heads)

    return pl.pallas_call(
        kernel,
        out_shape=jax.ShapeDtypeStruct((B, N, C), x.dtype),
        grid_spec=pltpu.PrefetchScalarGridSpec(
            num_scalar_prefetch=0,
            grid=(B // block_b,),
            in_specs=[
                pl.BlockSpec((block_b, N, C), lambda i: (i, 0, 0)),   # x (streamed)
                pl.BlockSpec((C, 3 * C), lambda i: (0, 0)),           # qkv weight (pre-T, q-scaled)
                pl.BlockSpec((C, C), lambda i: (0, 0)),               # proj weight (pre-T)
                pl.BlockSpec((1, C), lambda i: (0, 0)),               # proj bias
            ],
            out_specs=pl.BlockSpec((block_b, N, C), lambda i: (i, 0, 0)),
        ),
        compiler_params=pltpu.CompilerParams(
            dimension_semantics=("parallel",),
            vmem_limit_bytes=vmem_limit_bytes,
        ),
    )(x, qkv_wT, proj_wT, proj_b2)


def attention_ref(x, qkv_w, proj_w, proj_b, num_heads):
    """Plain-JAX f32 reference mirroring the PyTorch forward."""
    B, N, C = x.shape
    hd = C // num_heads
    scale = hd ** -0.5
    qkv = (x @ qkv_w.T).reshape(B, N, 3, num_heads, hd).transpose(2, 0, 3, 1, 4)
    q, k, v = qkv[0] * scale, qkv[1], qkv[2]
    attn = jnp.einsum('bhnd,bhmd->bhnm', q, k)
    attn = jax.nn.softmax(attn, axis=-1)
    o = jnp.einsum('bhnm,bhmd->bhnd', attn, v).transpose(0, 2, 1, 3).reshape(B, N, C)
    return o @ proj_w.T + proj_b


if __name__ == "__main__":
    # Small but (8,128)-aligned ViT-style shapes: batch=4, seq=16, dim=256,
    # 8 heads (head_dim=32).
    B, N, C = 4, 16, 256
    num_heads = 8

    key = jax.random.PRNGKey(0)
    k_x, k_qkv, k_pw, k_pb = jax.random.split(key, 4)

    x = jax.random.normal(k_x, (B, N, C), dtype=jnp.float32)
    qkv_w = 0.02 * jax.random.normal(k_qkv, (3 * C, C), dtype=jnp.float32)   # torch (out, in)
    proj_w = 0.02 * jax.random.normal(k_pw, (C, C), dtype=jnp.float32)
    proj_b = 0.02 * jax.random.normal(k_pb, (C,), dtype=jnp.float32)

    out = attention_forward(x, qkv_w, proj_w, proj_b, num_heads)
    out = jax.block_until_ready(out)

    ref = attention_ref(x, qkv_w, proj_w, proj_b, num_heads)
    # bf16 matmul inputs (f32 accumulate) + approx softmax reciprocal -> loosened tolerance.
    np.testing.assert_allclose(np.asarray(out), np.asarray(ref), atol=3e-3, rtol=2e-2)

    print("KERNEL_OK")
</pallas_src>

<mosaic_0001>
module attributes {stable_mosaic.version = 11 : i64} {
  func.func @attention_kernel(%arg0: i32, %arg1: memref<2x16x256xf32, #tpu.memory_space<vmem>>, %arg2: memref<256x768xbf16, #tpu.memory_space<vmem>>, %arg3: memref<256x256xbf16, #tpu.memory_space<vmem>>, %arg4: memref<1x256xf32, #tpu.memory_space<vmem>>, %arg5: memref<2x16x256xf32, #tpu.memory_space<vmem>>) attributes {dimension_semantics = [#tpu.dimension_semantics<parallel>], iteration_bounds = array<i64: 2>, scalar_prefetch = 0 : i64, scratch_operands = 0 : i64, tpu.core_type = #tpu.core_type<tc>, window_params = [{transform_indices = @transform_0, window_bounds = array<i64: 2, 16, 256>}, {pipeline_mode = #tpu.pipeline_mode<synchronous>, transform_indices = @transform_1, window_bounds = array<i64: 256, 768>}, {pipeline_mode = #tpu.pipeline_mode<synchronous>, transform_indices = @transform_2, window_bounds = array<i64: 256, 256>}, {pipeline_mode = #tpu.pipeline_mode<synchronous>, transform_indices = @transform_3, window_bounds = array<i64: 1, 256>}, {transform_indices = @transform_4, window_bounds = array<i64: 2, 16, 256>}]} {
    %c0 = arith.constant 0 : index
    %c0_0 = arith.constant 0 : index
    %c0_1 = arith.constant 0 : index
    %0 = vector.load %arg1[%c0, %c0_0, %c0_1] : memref<2x16x256xf32, #tpu.memory_space<vmem>>, vector<2x16x256xf32>
    %1 = vector.shape_cast %0 : vector<2x16x256xf32> to vector<32x256xf32>
    %2 = arith.truncf %1 : vector<32x256xf32> to vector<32x256xbf16>
    %c0_2 = arith.constant 0 : index
    %c0_3 = arith.constant 0 : index
    %3 = vector.load %arg2[%c0_2, %c0_3] : memref<256x768xbf16, #tpu.memory_space<vmem>>, vector<256x768xbf16>
    %cst = arith.constant dense<0.000000e+00> : vector<32x768xf32>
    %4 = tpu.matmul %2, %3, %cst {dimension_numbers = #tpu.dot_dimension_numbers<[1], [0], [0], [1], [0, 0, 1, 1], [], []>} : vector<32x256xbf16>, vector<256x768xbf16>, vector<32x768xf32> -> vector<32x768xf32>
    %5 = arith.truncf %4 : vector<32x768xf32> to vector<32x768xbf16>
    %6 = vector.extract_strided_slice %5 {offsets = [0, 0], sizes = [32, 256], strides = [1, 1]} : vector<32x768xbf16> to vector<32x256xbf16>
    %7 = vector.shape_cast %6 : vector<32x256xbf16> to vector<2x16x8x32xbf16>
    %8 = tpu.transpose %7, [0, 2, 1, 3] : vector<2x16x8x32xbf16> -> vector<2x8x16x32xbf16>
    %9 = vector.shape_cast %8 : vector<2x8x16x32xbf16> to vector<16x16x32xbf16>
    %10 = vector.extract_strided_slice %5 {offsets = [0, 256], sizes = [32, 256], strides = [1, 1]} : vector<32x768xbf16> to vector<32x256xbf16>
    %11 = vector.shape_cast %10 : vector<32x256xbf16> to vector<2x16x8x32xbf16>
    %12 = tpu.transpose %11, [0, 2, 1, 3] : vector<2x16x8x32xbf16> -> vector<2x8x16x32xbf16>
    %13 = vector.shape_cast %12 : vector<2x8x16x32xbf16> to vector<16x16x32xbf16>
    %14 = vector.extract_strided_slice %5 {offsets = [0, 512], sizes = [32, 256], strides = [1, 1]} : vector<32x768xbf16> to vector<32x256xbf16>
    %15 = vector.shape_cast %14 : vector<32x256xbf16> to vector<2x16x8x32xbf16>
    %16 = tpu.transpose %15, [0, 2, 1, 3] : vector<2x16x8x32xbf16> -> vector<2x8x16x32xbf16>
    %17 = vector.shape_cast %16 : vector<2x8x16x32xbf16> to vector<16x16x32xbf16>
    %cst_4 = arith.constant dense<0.000000e+00> : vector<16x16x16xf32>
    %18 = tpu.matmul %9, %13, %cst_4 {dimension_numbers = #tpu.dot_dimension_numbers<[2], [2], [1], [1], [0, 0, 0, 1, 1, 1], [0], [0]>} : vector<16x16x32xbf16>, vector<16x16x32xbf16>, vector<16x16x16xf32> -> vector<16x16x16xf32>
    %cst_5 = arith.constant dense<0xFF800000> : vector<16x16xf32>
    %19 = vector.multi_reduction <maximumf>, %18, %cst_5 [2] : vector<16x16x16xf32> to vector<16x16xf32>
    %20 = vector.shape_cast %19 : vector<16x16xf32> to vector<16x16x1xf32>
    %21 = vector.broadcast %20 : vector<16x16x1xf32> to vector<16x16x16xf32>
    %22 = arith.subf %18, %21 : vector<16x16x16xf32>
    %23 = math.exp %22 : vector<16x16x16xf32>
    %cst_6 = arith.constant dense<0.000000e+00> : vector<16x16xf32>
    %24 = vector.multi_reduction <add>, %23, %cst_6 [2] : vector<16x16x16xf32> to vector<16x16xf32>
    %25 = vector.shape_cast %24 : vector<16x16xf32> to vector<16x16x1xf32>
    %26 = tpu.reciprocal %25 {approx = true} : vector<16x16x1xf32> -> vector<16x16x1xf32>
    %27 = vector.broadcast %26 : vector<16x16x1xf32> to vector<16x16x16xf32>
    %28 = arith.mulf %23, %27 : vector<16x16x16xf32>
    %29 = arith.truncf %28 : vector<16x16x16xf32> to vector<16x16x16xbf16>
    %cst_7 = arith.constant dense<0.000000e+00> : vector<16x16x32xf32>
    %30 = tpu.matmul %29, %17, %cst_7 {dimension_numbers = #tpu.dot_dimension_numbers<[2], [1], [1], [2], [0, 0, 0, 1, 1, 2], [0], [0]>} : vector<16x16x16xbf16>, vector<16x16x32xbf16>, vector<16x16x32xf32> -> vector<16x16x32xf32>
    %31 = arith.truncf %30 : vector<16x16x32xf32> to vector<16x16x32xbf16>
    %32 = vector.shape_cast %31 : vector<16x16x32xbf16> to vector<2x8x16x32xbf16>
    %33 = tpu.transpose %32, [0, 2, 1, 3] : vector<2x8x16x32xbf16> -> vector<2x16x8x32xbf16>
    %34 = vector.shape_cast %33 : vector<2x16x8x32xbf16> to vector<32x256xbf16>
    %c0_8 = arith.constant 0 : index
    %c0_9 = arith.constant 0 : index
    %35 = vector.load %arg3[%c0_8, %c0_9] : memref<256x256xbf16, #tpu.memory_space<vmem>>, vector<256x256xbf16>
    %cst_10 = arith.constant dense<0.000000e+00> : vector<32x256xf32>
    %36 = tpu.matmul %34, %35, %cst_10 {dimension_numbers = #tpu.dot_dimension_numbers<[1], [0], [0], [1], [0, 0, 1, 1], [], []>} : vector<32x256xbf16>, vector<256x256xbf16>, vector<32x256xf32> -> vector<32x256xf32>
    %c0_11 = arith.constant 0 : index
    %c0_12 = arith.constant 0 : index
    %37 = vector.load %arg4[%c0_11, %c0_12] : memref<1x256xf32, #tpu.memory_space<vmem>>, vector<1x256xf32>
    %38 = vector.broadcast %37 : vector<1x256xf32> to vector<32x256xf32>
    %39 = arith.addf %36, %38 : vector<32x256xf32>
    %40 = vector.shape_cast %39 : vector<32x256xf32> to vector<2x16x256xf32>
    %c0_13 = arith.constant 0 : index
    %c0_14 = arith.constant 0 : index
    %c0_15 = arith.constant 0 : index
    %41 = vector.load %arg5[%c0_13, %c0_14, %c0_15] : memref<2x16x256xf32, #tpu.memory_space<vmem>>, vector<2x16x256xf32>
    tpu.vector_store %arg5[%c0_13, %c0_14, %c0_15], %40 {strides = array<i32>} : memref<2x16x256xf32, #tpu.memory_space<vmem>>, vector<2x16x256xf32>,
    return
  }
  func.func @transform_0(%arg0: i32) -> (i32, i32, i32) {
    %c0_i32 = arith.constant 0 : i32
    %c0_i32_0 = arith.constant 0 : i32
    %c0_i32_1 = arith.constant 0 : i32
    return %arg0, %c0_i32, %c0_i32_0 : i32, i32, i32
  }
  func.func @transform_1(%arg0: i32) -> (i32, i32) {
    %c0_i32 = arith.constant 0 : i32
    %c0_i32_0 = arith.constant 0 : i32
    %c0_i32_1 = arith.constant 0 : i32
    return %c0_i32, %c0_i32_0 : i32, i32
  }
  func.func @transform_2(%arg0: i32) -> (i32, i32) {
    %c0_i32 = arith.constant 0 : i32
    %c0_i32_0 = arith.constant 0 : i32
    %c0_i32_1 = arith.constant 0 : i32
    return %c0_i32, %c0_i32_0 : i32, i32
  }
  func.func @transform_3(%arg0: i32) -> (i32, i32) {
    %c0_i32 = arith.constant 0 : i32
    %c0_i32_0 = arith.constant 0 : i32
    %c0_i32_1 = arith.constant 0 : i32
    return %c0_i32, %c0_i32_0 : i32, i32
  }
  func.func @transform_4(%arg0: i32) -> (i32, i32, i32) {
    %c0_i32 = arith.constant 0 : i32
    %c0_i32_0 = arith.constant 0 : i32
    %c0_i32_1 = arith.constant 0 : i32
    return %arg0, %c0_i32, %c0_i32_0 : i32, i32, i32
  }
}

</mosaic_0001>

<llo_original>
// kernel: tpu_custom_call.1
$region0: #{tpu_custom_call.1}
  #allocation0 [shape = 'u32[]', space=smem, size = 0x4, offset = 0x4, fixed_abs, tag = 'smem constant byte address 0x4 - core index']
  #allocation1 [shape = 'u32[144,128]{1,0:T(1,128)}', space=vmem, size = 0x12000, scoped, tag = 'internal scratch']
  %s0 = inlined_call_operand.hbm [shape: f32[4,16,256], index: 0, kind: input, shape index: {}]
  %s1 = inlined_call_operand.hbm [shape: bf16[256,768], index: 1, kind: input, shape index: {}]
  %s2 = inlined_call_operand.hbm [shape: bf16[256,256], index: 2, kind: input, shape index: {}]
  %s3 = inlined_call_operand.vmem [shape: f32[1,256], index: 3, kind: input, shape index: {}]
  %s4 = inlined_call_operand.hbm [shape: f32[4,16,256], index: 4, kind: output, shape index: {}]
  %s5 = sld [smem:[#allocation0]]
  $region61: #{tpu_custom_call.1} parent=0
    _
  %s7 = ssub.s32 1, %s5
  %s8 = scalar_select 0, %s7, %s5
  $region1: #{tpu_custom_call.1} parent=0
    #allocation2 [shape = 'u8[65536]{0}', space=vmem, size = 0x10000, scoped, tag = 'input window, operand 0']
    #allocation3 [shape = 's32[2]{0}', space=sflag, size = 0x8, scoped, tag = 'scoped memory for tpu_custom_call.1']
    #allocation4 [shape = 's32[2]{0}', space=sflag, size = 0x8, scoped, tag = 'scoped memory for tpu_custom_call.1']
    #allocation5 [shape = 'u8[393216]{0}', space=vmem, size = 0x60000, scoped, tag = 'input window, operand 1, single buffered']
    #allocation6 [shape = 's32[1]{0}', space=sflag, size = 0x4, scoped, tag = 'scoped memory for tpu_custom_call.1']
    #allocation7 [shape = 'u8[131072]{0}', space=vmem, size = 0x20000, scoped, tag = 'input window, operand 2, single buffered']
    #allocation8 [shape = 'u8[65536]{0}', space=vmem, size = 0x10000, scoped, tag = 'output window, operand 0']
    %9 = vsyncpa [#allocation3], 0
    %s10 = scalar_lea.sflag [#allocation3], 1
    %11 = vsyncpa %s10, 0
    %12 = vsyncpa [#allocation6], 0
    %13 = vsyncpa [#allocation4], 0
    %s14 = scalar_lea.sflag [#allocation4], 1
    %15 = vsyncpa %s14, 0
    loop: start=0, step=1, limit=4
    $region2: #{tpu_custom_call.1} parent=1 // loop_pre_header
      _
    $region3: #{tpu_custom_call.1} parent=1 // loop_header
      %s17 = sphi 0, %s21
      %p18 = scmp.ge.s32.totalorder %s17, 4
      %s27 = sphi 0, %s29
      %s30 = sphi 0, %s27
      %s31 = sphi 0, %s30
      %s47 = sphi 0, %s31
      %s51 = sphi 0, %s51
      %s53 = sphi 0, %s51
      %s54 = sphi 0, %s53
      %s68 = sphi 0, %s54
      %s72 = sphi 0, %s72
      %s74 = sphi 0, %s72
      %s75 = sphi 0, %s74
      %s89 = sphi 0, %s75
      %s93 = sphi 0, %s93
      %s95 = sphi 0, %s93
      %s96 = sphi 0, %s95
      %s110 = sphi 0, %s96
      %s116 = sphi 0, %s118
      %s119 = sphi 0, %s116
      %s120 = sphi 0, %s119
      %s136 = sphi 0, %s120
    $region4: #{tpu_custom_call.1} parent=1 // loop_header_branch
      %20 = sbr.rel (%p18) target = $region8
    $region5: #{tpu_custom_call.1} parent=1 // loop_body
      %s22 = ssub.s32 %s17, 1
      %s23 = ssub.s32 %s17, 2
      %s24 = sadd.s32 %s17, 1
      %s25 = ssub.s32 %s17, %s24
      %p26 = scmp.eq.s32.totalorder %s25, 0
      %s28 = sadd.s32 %s27, 1
      %s29 = scalar_select %p26, %s27, %s28
      %p32 = pneg %p26
      %p33 = scmp.eq.s32.totalorder %s17, 1
      %p34 = por %p32, %p33
      %p35 = scmp.ne.s32.totalorder %s27, %s30
      %p36 = scmp.eq.s32.totalorder %s17, 0
      %p37 = por %p35, %p36
      %p38 = scmp.ne.s32.totalorder %s27, %s30
      %p39 = scmp.eq.s32.totalorder %s22, 1
      %p40 = por %p38, %p39
      %p41 = scmp.ne.s32.totalorder %s30, %s31
      %p42 = scmp.eq.s32.totalorder %s22, 0
      %p43 = por %p41, %p42
      %p44 = scmp.ne.s32.totalorder %s30, %s31
      %p45 = scmp.eq.s32.totalorder %s23, 1
      %p46 = por %p44, %p45
      %p48 = scmp.ne.s32.totalorder %s31, %s47
      %p49 = scmp.eq.s32.totalorder %s23, 0
      %p50 = por %p48, %p49
      %s52 = sadd.s32 %s51, 1
      %p55 = scmp.eq.s32.totalorder %s17, 1
      %p56 = scmp.ne.s32.totalorder %s51, %s53
      %p57 = scmp.eq.s32.totalorder %s17, 0
      %p58 = por %p56, %p57
      %p59 = scmp.ne.s32.totalorder %s51, %s53
      %p60 = scmp.eq.s32.totalorder %s22, 1
      %p61 = por %p59, %p60
      %p62 = scmp.ne.s32.totalorder %s53, %s54
      %p63 = scmp.eq.s32.totalorder %s22, 0
      %p64 = por %p62, %p63
      %p65 = scmp.ne.s32.totalorder %s53, %s54
      %p66 = scmp.eq.s32.totalorder %s23, 1
      %p67 = por %p65, %p66
      %p69 = scmp.ne.s32.totalorder %s54, %s68
      %p70 = scmp.eq.s32.totalorder %s23, 0
      %p71 = por %p69, %p70
      %s73 = sadd.s32 %s72, 1
      %p76 = scmp.eq.s32.totalorder %s17, 1
      %p77 = scmp.ne.s32.totalorder %s72, %s74
      %p78 = scmp.eq.s32.totalorder %s17, 0
      %p79 = por %p77, %p78
      %p80 = scmp.ne.s32.totalorder %s72, %s74
      %p81 = scmp.eq.s32.totalorder %s22, 1
      %p82 = por %p80, %p81
      %p83 = scmp.ne.s32.totalorder %s74, %s75
      %p84 = scmp.eq.s32.totalorder %s22, 0
      %p85 = por %p83, %p84
      %p86 = scmp.ne.s32.totalorder %s74, %s75
      %p87 = scmp.eq.s32.totalorder %s23, 1
      %p88 = por %p86, %p87
      %p90 = scmp.ne.s32.totalorder %s75, %s89
      %p91 = scmp.eq.s32.totalorder %s23, 0
      %p92 = por %p90, %p91
      %s94 = sadd.s32 %s93, 1
      %p97 = scmp.eq.s32.totalorder %s17, 1
      %p98 = scmp.ne.s32.totalorder %s93, %s95
      %p99 = scmp.eq.s32.totalorder %s17, 0
      %p100 = por %p98, %p99
      %p101 = scmp.ne.s32.totalorder %s93, %s95
      %p102 = scmp.eq.s32.totalorder %s22, 1
      %p103 = por %p101, %p102
      %p104 = scmp.ne.s32.totalorder %s95, %s96
      %p105 = scmp.eq.s32.totalorder %s22, 0
      %p106 = por %p104, %p105
      %p107 = scmp.ne.s32.totalorder %s95, %s96
      %p108 = scmp.eq.s32.totalorder %s23, 1
      %p109 = por %p107, %p108
      %p111 = scmp.ne.s32.totalorder %s96, %s110
      %p112 = scmp.eq.s32.totalorder %s23, 0
      %p113 = por %p111, %p112
      %s114 = ssub.s32 %s17, %s24
      %p115 = scmp.eq.s32.totalorder %s114, 0
      %s117 = sadd.s32 %s116, 1
      %s118 = scalar_select %p115, %s116, %s117
      %p121 = pneg %p115
      %p122 = scmp.eq.s32.totalorder %s17, 1
      %p123 = por %p121, %p122
      %p124 = scmp.ne.s32.totalorder %s116, %s119
      %p125 = scmp.eq.s32.totalorder %s17, 0
      %p126 = por %p124, %p125
      %p127 = scmp.ne.s32.totalorder %s116, %s119
      %p128 = scmp.eq.s32.totalorder %s22, 1
      %p129 = por %p127, %p128
      %p130 = scmp.ne.s32.totalorder %s119, %s120
      %p131 = scmp.eq.s32.totalorder %s22, 0
      %p132 = por %p130, %p131
      %p133 = scmp.ne.s32.totalorder %s119, %s120
      %p134 = scmp.eq.s32.totalorder %s23, 1
      %p135 = por %p133, %p134
      %p137 = scmp.ne.s32.totalorder %s120, %s136
      %p138 = scmp.eq.s32.totalorder %s23, 0
      %p139 = por %p137, %p138
      %p140 = scmp.le.s32.totalorder 1, %s17
      %p141 = scmp.lt.s32.totalorder %s17, 3
      %p142 = pnand %p140, %p141
      %p143 = pneg %p142
      // Predicated region
      $region9: #{tpu_custom_call.1} parent=5 // pred_check
        _
      $region10: #{tpu_custom_call.1} parent=5 // pred_check_branch
        %145 = sbr.rel (%p142) target = $region12
      $region11: #{tpu_custom_call.1} parent=5 // pred_region
        %s146 = ssub.s32 %s17, 1
        // Predicated region
        $region13: #{tpu_custom_call.1} parent=11 // pred_check
          %p147 = pneg %p64
        $region14: #{tpu_custom_call.1} parent=11 // pred_check_branch
          %149 = sbr.rel (%p147) target = $region16
        $region15: #{tpu_custom_call.1} parent=11 // pred_region
          %s151 = ssub.s32 12288, 12288
          %152 = vsyncadd [#allocation6], %s151
          %s153 = sshll.u32 [#allocation5], 4
          %s154 = int_to_ptr.vmem [resolvable:$true] %s153
          %159 = dma.hbm_to_vmem [thread:$0]  %s1, 12288, %s154, [#allocation6], 384, 384, 24
        $region16: #{tpu_custom_call.1} parent=11 // pred_fallthru
          _
        // Predicated region
        $region17: #{tpu_custom_call.1} parent=11 // pred_check
          %p160 = pneg %p85
        $region18: #{tpu_custom_call.1} parent=11 // pred_check_branch
          %162 = sbr.rel (%p160) target = $region20
        $region19: #{tpu_custom_call.1} parent=11 // pred_region
          %s164 = ssub.s32 4096, 4096
          %165 = vsyncadd [#allocation6], %s164
          %s166 = sshll.u32 [#allocation7], 4
          %s167 = int_to_ptr.vmem [resolvable:$true] %s166
          %172 = dma.hbm_to_vmem [thread:$0]  %s2, 4096, %s167, [#allocation6], 128, 128, 8
        $region20: #{tpu_custom_call.1} parent=11 // pred_fallthru
          _
        // Predicated region
        $region21: #{tpu_custom_call.1} parent=11 // pred_check
          %p173 = pneg %p106
        $region22: #{tpu_custom_call.1} parent=11 // pred_check_branch
          %175 = sbr.rel (%p173) target = $region24
        $region23: #{tpu_custom_call.1} parent=11 // pred_region
          _
        $region24: #{tpu_custom_call.1} parent=11 // pred_fallthru
          _
      $region12: #{tpu_custom_call.1} parent=5 // pred_fallthru
        _
      %p176 = scmp.lt.s32.totalorder %s17, 2
      // Predicated region
      $region25: #{tpu_custom_call.1} parent=5 // pred_check
        %p177 = pneg %p176
      $region26: #{tpu_custom_call.1} parent=5 // pred_check_branch
        %179 = sbr.rel (%p177) target = $region28
      $region27: #{tpu_custom_call.1} parent=5 // pred_region
        // Predicated region
        $region29: #{tpu_custom_call.1} parent=27 // pred_check
          %p180 = pneg %p37
        $region30: #{tpu_custom_call.1} parent=27 // pred_check_branch
          %182 = sbr.rel (%p180) target = $region32
        $region31: #{tpu_custom_call.1} parent=27 // pred_region
          %s183 = sand.u32 %s27, 1
          %s184 = scalar_lea.sflag [#allocation3], %s183
          %s185 = sand.u32 %s27, 1
          %s186 = smul.addr %s185, 64
          %s187 = scalar_lea.vmem [#allocation2], %s186
          %s188 = smul.u32 2, %s17
          %s190 = ssub.s32 1024, 1024
          %191 = vsyncadd %s184, %s190
          %s192 = smul.addr %s188, 4
          %s193 = smul.addr %s192, 128
          %s194 = scalar_lea.hbm %s0, %s193
          %s195 = sshll.u32 %s187, 4
          %s196 = int_to_ptr.vmem [resolvable:$true] %s195
          %201 = dma.hbm_to_vmem [thread:$0]  %s194, 1024, %s196, %s184, 256, 256, 16
        $region32: #{tpu_custom_call.1} parent=27 // pred_fallthru
          _
      $region28: #{tpu_custom_call.1} parent=5 // pred_fallthru
        _
      %p202 = scmp.le.s32.totalorder 1, %s17
      %p203 = scmp.lt.s32.totalorder %s17, 3
      %p204 = pnand %p202, %p203
      %p205 = pneg %p204
      // Predicated region
      $region33: #{tpu_custom_call.1} parent=5 // pred_check
        _
      $region34: #{tpu_custom_call.1} parent=5 // pred_check_branch
        %207 = sbr.rel (%p204) target = $region36
      $region35: #{tpu_custom_call.1} parent=5 // pred_region
        %s208 = ssub.s32 %s17, 1
        %s209 = sand.u32 %s30, 1
        %s210 = scalar_lea.sflag [#allocation3], %s209
        %s211 = sand.u32 %s30, 1
        %s212 = smul.addr %s211, 64
        %s213 = scalar_lea.vmem [#allocation2], %s212
        // Predicated region
        $region37: #{tpu_custom_call.1} parent=35 // pred_check
          %p214 = pneg %p43
        $region38: #{tpu_custom_call.1} parent=35 // pred_check_branch
          %216 = sbr.rel (%p214) target = $region40
        $region39: #{tpu_custom_call.1} parent=35 // pred_region
          %217 = dma.done %s210, 1024
        $region40: #{tpu_custom_call.1} parent=35 // pred_fallthru
          _
        // Predicated region
        $region41: #{tpu_custom_call.1} parent=35 // pred_check
          %p218 = pneg %p64
        $region42: #{tpu_custom_call.1} parent=35 // pred_check_branch
          %220 = sbr.rel (%p218) target = $region44
        $region43: #{tpu_custom_call.1} parent=35 // pred_region
          %221 = dma.done [#allocation6], 12288
        $region44: #{tpu_custom_call.1} parent=35 // pred_fallthru
          _
        // Predicated region
        $region45: #{tpu_custom_call.1} parent=35 // pred_check
          %p222 = pneg %p85
        $region46: #{tpu_custom_call.1} parent=35 // pred_check_branch
          %224 = sbr.rel (%p222) target = $region48
        $region47: #{tpu_custom_call.1} parent=35 // pred_region
          %225 = dma.done [#allocation6], 4096
        $region48: #{tpu_custom_call.1} parent=35 // pred_fallthru
          _
        %s226 = sand.u32 %s30, 1
        %s227 = scalar_lea.sflag [#allocation3], %s226
        %s228 = sand.u32 %s30, 1
        %s229 = smul.addr %s228, 64
        %s230 = scalar_lea.vmem [#allocation2], %s229
        %p231 = pneg %p43
        %p232 = pneg %p40
        %p233 = pneg %p64
        %p234 = pneg %p61
        %p235 = pneg %p85
        %p236 = pneg %p82
        %p237 = pneg %p106
        %p238 = pneg %p103
        %p239 = pneg %p132
        %p240 = pneg %p129
        %s241 = sand.u32 %s119, 1
        %s242 = scalar_lea.sflag [#allocation4], %s241
        %s243 = sand.u32 %s119, 1
        %s244 = smul.addr %s243, 64
        %s245 = scalar_lea.vmem [#allocation8], %s244
        %s246 = smul.u32 2, %s22
        %s247 = smul.u32 2, %s22
        %v249 = vld [vmem:[%s213] sm:$0xff]
        %v250 = vld [vmem:[%s213 + $0x8] sm:$0xff]
        %v251 = vld [vmem:[%s213 + $0x10] sm:$0xff]
        %v252 = vld [vmem:[%s213 + $0x18] sm:$0xff]
        %v253 = vld [vmem:[%s213 + $0x20] sm:$0xff]
        %v254 = vld [vmem:[%s213 + $0x28] sm:$0xff]
        %v255 = vld [vmem:[%s213 + $0x30] sm:$0xff]
        %v256 = vld [vmem:[%s213 + $0x38] sm:$0xff]
        %v257 = vpack.c.bf16 %v251, %v249
        %v258 = vpack.c.bf16 %v252, %v250
        %v259 = vpack.c.bf16 %v255, %v253
        %v260 = vpack.c.bf16 %v256, %v254
        %v261 = vld [vmem:[#allocation5] sm:$0xff]
        %v262 = vld [vmem:[#allocation5 + $0x8] sm:$0xff]
        %v263 = vld [vmem:[#allocation5 + $0x10] sm:$0xff]
        %v264 = vld [vmem:[#allocation5 + $0x18] sm:$0xff]
        %v265 = vld [vmem:[#allocation5 + $0x20] sm:$0xff]
        %v266 = vld [vmem:[#allocation5 + $0x28] sm:$0xff]
        %v267 = vld [vmem:[#allocation5 + $0x30] sm:$0xff]
        %v268 = vld [vmem:[#allocation5 + $0x38] sm:$0xff]
        %v269 = vld [vmem:[#allocation5 + $0x40] sm:$0xff]
        %v270 = vld [vmem:[#allocation5 + $0x48] sm:$0xff]
        %v271 = vld [vmem:[#allocation5 + $0x50] sm:$0xff]
        %v272 = vld [vmem:[#allocation5 + $0x58] sm:$0xff]
        %v273 = vld [vmem:[#allocation5 + $0x60] sm:$0xff]
        %v274 = vld [vmem:[#allocation5 + $0x68] sm:$0xff]
        %v275 = vld [vmem:[#allocation5 + $0x70] sm:$0xff]
        %v276 = vld [vmem:[#allocation5 + $0x78] sm:$0xff]
        %v277 = vld [vmem:[#allocation5 + $0x80] sm:$0xff]
        %v278 = vld [vmem:[#allocation5 + $0x88] sm:$0xff]
        %v279 = vld [vmem:[#allocation5 + $0x90] sm:$0xff]
        %v280 = vld [vmem:[#allocation5 + $0x98] sm:$0xff]
        %v281 = vld [vmem:[#allocation5 + $0xa0] sm:$0xff]
        %v282 = vld [vmem:[#allocation5 + $0xa8] sm:$0xff]
        %v283 = vld [vmem:[#allocation5 + $0xb0] sm:$0xff]
        %v284 = vld [vmem:[#allocation5 + $0xb8] sm:$0xff]
        %v285 = vld [vmem:[#allocation5 + $0xc0] sm:$0xff]
        %v286 = vld [vmem:[#allocation5 + $0xc8] sm:$0xff]
        %v287 = vld [vmem:[#allocation5 + $0xd0] sm:$0xff]
        %v288 = vld [vmem:[#allocation5 + $0xd8] sm:$0xff]
        %v289 = vld [vmem:[#allocation5 + $0xe0] sm:$0xff]
        %v290 = vld [vmem:[#allocation5 + $0xe8] sm:$0xff]
        %v291 = vld [vmem:[#allocation5 + $0xf0] sm:$0xff]
        %v292 = vld [vmem:[#allocation5 + $0xf8] sm:$0xff]
        %v293 = vld [vmem:[#allocation5 + $0x100] sm:$0xff]
        %v294 = vld [vmem:[#allocation5 + $0x108] sm:$0xff]
        %v295 = vld [vmem:[#allocation5 + $0x110] sm:$0xff]
        %v296 = vld [vmem:[#allocation5 + $0x118] sm:$0xff]
        %v297 = vld [vmem:[#allocation5 + $0x120] sm:$0xff]
        %v298 = vld [vmem:[#allocation5 + $0x128] sm:$0xff]
        %v299 = vld [vmem:[#allocation5 + $0x130] sm:$0xff]
        %v300 = vld [vmem:[#allocation5 + $0x138] sm:$0xff]
        %v301 = vld [vmem:[#allocation5 + $0x140] sm:$0xff]
        %v302 = vld [vmem:[#allocation5 + $0x148] sm:$0xff]
        %v303 = vld [vmem:[#allocation5 + $0x150] sm:$0xff]
        %v304 = vld [vmem:[#allocation5 + $0x158] sm:$0xff]
        %v305 = vld [vmem:[#allocation5 + $0x160] sm:$0xff]
        %v306 = vld [vmem:[#allocation5 + $0x168] sm:$0xff]
        %v307 = vld [vmem:[#allocation5 + $0x170] sm:$0xff]
        %v308 = vld [vmem:[#allocation5 + $0x178] sm:$0xff]
        %v309 = vld [vmem:[#allocation5 + $0x180] sm:$0xff]
        %v310 = vld [vmem:[#allocation5 + $0x188] sm:$0xff]
        %v311 = vld [vmem:[#allocation5 + $0x190] sm:$0xff]
        %v312 = vld [vmem:[#allocation5 + $0x198] sm:$0xff]
        %v313 = vld [vmem:[#allocation5 + $0x1a0] sm:$0xff]
        %v314 = vld [vmem:[#allocation5 + $0x1a8] sm:$0xff]
        %v315 = vld [vmem:[#allocation5 + $0x1b0] sm:$0xff]
        %v316 = vld [vmem:[#allocation5 + $0x1b8] sm:$0xff]
        %v317 = vld [vmem:[#allocation5 + $0x1c0] sm:$0xff]
        %v318 = vld [vmem:[#allocation5 + $0x1c8] sm:$0xff]
        %v319 = vld [vmem:[#allocation5 + $0x1d0] sm:$0xff]
        %v320 = vld [vmem:[#allocation5 + $0x1d8] sm:$0xff]
        %v321 = vld [vmem:[#allocation5 + $0x1e0] sm:$0xff]
        %v322 = vld [vmem:[#allocation5 + $0x1e8] sm:$0xff]
        %v323 = vld [vmem:[#allocation5 + $0x1f0] sm:$0xff]
        %v324 = vld [vmem:[#allocation5 + $0x1f8] sm:$0xff]
        %v325 = vld [vmem:[#allocation5 + $0x200] sm:$0xff]
        %v326 = vld [vmem:[#allocation5 + $0x208] sm:$0xff]
        %v327 = vld [vmem:[#allocation5 + $0x210] sm:$0xff]
        %v328 = vld [vmem:[#allocation5 + $0x218] sm:$0xff]
        %v329 = vld [vmem:[#allocation5 + $0x220] sm:$0xff]
        %v330 = vld [vmem:[#allocation5 + $0x228] sm:$0xff]
        %v331 = vld [vmem:[#allocation5 + $0x230] sm:$0xff]
        %v332 = vld [vmem:[#allocation5 + $0x238] sm:$0xff]
        %v333 = vld [vmem:[#allocation5 + $0x240] sm:$0xff]
        %v334 = vld [vmem:[#allocation5 + $0x248] sm:$0xff]
        %v335 = vld [vmem:[#allocation5 + $0x250] sm:$0xff]
        %v336 = vld [vmem:[#allocation5 + $0x258] sm:$0xff]
        %v337 = vld [vmem:[#allocation5 + $0x260] sm:$0xff]
        %v338 = vld [vmem:[#allocation5 + $0x268] sm:$0xff]
        %v339 = vld [vmem:[#allocation5 + $0x270] sm:$0xff]
        %v340 = vld [vmem:[#allocation5 + $0x278] sm:$0xff]
        %v341 = vld [vmem:[#allocation5 + $0x280] sm:$0xff]
        %v342 = vld [vmem:[#allocation5 + $0x288] sm:$0xff]
        %v343 = vld [vmem:[#allocation5 + $0x290] sm:$0xff]
        %v344 = vld [vmem:[#allocation5 + $0x298] sm:$0xff]
        %v345 = vld [vmem:[#allocation5 + $0x2a0] sm:$0xff]
        %v346 = vld [vmem:[#allocation5 + $0x2a8] sm:$0xff]
        %v347 = vld [vmem:[#allocation5 + $0x2b0] sm:$0xff]
        %v348 = vld [vmem:[#allocation5 + $0x2b8] sm:$0xff]
        %v349 = vld [vmem:[#allocation5 + $0x2c0] sm:$0xff]
        %v350 = vld [vmem:[#allocation5 + $0x2c8] sm:$0xff]
        %v351 = vld [vmem:[#allocation5 + $0x2d0] sm:$0xff]
        %v352 = vld [vmem:[#allocation5 + $0x2d8] sm:$0xff]
        %v353 = vld [vmem:[#allocation5 + $0x2e0] sm:$0xff]
        %v354 = vld [vmem:[#allocation5 + $0x2e8] sm:$0xff]
        %v355 = vld [vmem:[#allocation5 + $0x2f0] sm:$0xff]
        %v356 = vld [vmem:[#allocation5 + $0x2f8] sm:$0xff]
        %v453 = vunpack.c.l.b16 %v261
        %v454 = vunpack.c.h.b16 %v261
        %v455 = vunpack.c.l.b16 %v262
        %v456 = vunpack.c.h.b16 %v262
        %v457 = vunpack.c.l.b16 %v263
        %v458 = vunpack.c.h.b16 %v263
        %v459 = vunpack.c.l.b16 %v264
        %v460 = vunpack.c.h.b16 %v264
        %v461 = vunpack.c.l.b16 %v265
        %v462 = vunpack.c.h.b16 %v265
        %v463 = vunpack.c.l.b16 %v266
        %v464 = vunpack.c.h.b16 %v266
        %v465 = vunpack.c.l.b16 %v267
        %v466 = vunpack.c.h.b16 %v267
        %v467 = vunpack.c.l.b16 %v268
        %v468 = vunpack.c.h.b16 %v268
        %v469 = vunpack.c.l.b16 %v269
        %v470 = vunpack.c.h.b16 %v269
        %v471 = vunpack.c.l.b16 %v270
        %v472 = vunpack.c.h.b16 %v270
        %v473 = vunpack.c.l.b16 %v271
        %v474 = vunpack.c.h.b16 %v271
        %v475 = vunpack.c.l.b16 %v272
        %v476 = vunpack.c.h.b16 %v272
        %v477 = vunpack.c.l.b16 %v273
        %v478 = vunpack.c.h.b16 %v273
        %v479 = vunpack.c.l.b16 %v274
        %v480 = vunpack.c.h.b16 %v274
        %v481 = vunpack.c.l.b16 %v275
        %v482 = vunpack.c.h.b16 %v275
        %v483 = vunpack.c.l.b16 %v276
        %v484 = vunpack.c.h.b16 %v276
        %v485 = vunpack.c.l.b16 %v277
        %v486 = vunpack.c.h.b16 %v277
        %v487 = vunpack.c.l.b16 %v278
        %v488 = vunpack.c.h.b16 %v278
        %v489 = vunpack.c.l.b16 %v279
        %v490 = vunpack.c.h.b16 %v279
        %v491 = vunpack.c.l.b16 %v280
        %v492 = vunpack.c.h.b16 %v280
        %v493 = vunpack.c.l.b16 %v281
        %v494 = vunpack.c.h.b16 %v281
        %v495 = vunpack.c.l.b16 %v282
        %v496 = vunpack.c.h.b16 %v282
        %v497 = vunpack.c.l.b16 %v283
        %v498 = vunpack.c.h.b16 %v283
        %v499 = vunpack.c.l.b16 %v284
        %v500 = vunpack.c.h.b16 %v284
        %v501 = vunpack.c.l.b16 %v285
        %v502 = vunpack.c.h.b16 %v285
        %v503 = vunpack.c.l.b16 %v286
        %v504 = vunpack.c.h.b16 %v286
        %v505 = vunpack.c.l.b16 %v287
        %v506 = vunpack.c.h.b16 %v287
        %v507 = vunpack.c.l.b16 %v288
        %v508 = vunpack.c.h.b16 %v288
        %v509 = vunpack.c.l.b16 %v289
        %v510 = vunpack.c.h.b16 %v289
        %v511 = vunpack.c.l.b16 %v290
        %v512 = vunpack.c.h.b16 %v290
        %v513 = vunpack.c.l.b16 %v291
        %v514 = vunpack.c.h.b16 %v291
        %v515 = vunpack.c.l.b16 %v292
        %v516 = vunpack.c.h.b16 %v292
        %v517 = vunpack.c.l.b16 %v293
        %v518 = vunpack.c.h.b16 %v293
        %v519 = vunpack.c.l.b16 %v294
        %v520 = vunpack.c.h.b16 %v294
        %v521 = vunpack.c.l.b16 %v295
        %v522 = vunpack.c.h.b16 %v295
        %v523 = vunpack.c.l.b16 %v296
        %v524 = vunpack.c.h.b16 %v296
        %v525 = vunpack.c.l.b16 %v297
        %v526 = vunpack.c.h.b16 %v297
        %v527 = vunpack.c.l.b16 %v298
        %v528 = vunpack.c.h.b16 %v298
        %v529 = vunpack.c.l.b16 %v299
        %v530 = vunpack.c.h.b16 %v299
        %v531 = vunpack.c.l.b16 %v300
        %v532 = vunpack.c.h.b16 %v300
        %v533 = vunpack.c.l.b16 %v301
        %v534 = vunpack.c.h.b16 %v301
        %v535 = vunpack.c.l.b16 %v302
        %v536 = vunpack.c.h.b16 %v302
        %v537 = vunpack.c.l.b16 %v303
        %v538 = vunpack.c.h.b16 %v303
        %v539 = vunpack.c.l.b16 %v304
        %v540 = vunpack.c.h.b16 %v304
        %v541 = vunpack.c.l.b16 %v305
        %v542 = vunpack.c.h.b16 %v305
        %v543 = vunpack.c.l.b16 %v306
        %v544 = vunpack.c.h.b16 %v306
        %v545 = vunpack.c.l.b16 %v307
        %v546 = vunpack.c.h.b16 %v307
        %v547 = vunpack.c.l.b16 %v308
        %v548 = vunpack.c.h.b16 %v308
        %v549 = vunpack.c.l.b16 %v309
        %v550 = vunpack.c.h.b16 %v309
        %v551 = vunpack.c.l.b16 %v310
        %v552 = vunpack.c.h.b16 %v310
        %v553 = vunpack.c.l.b16 %v311
        %v554 = vunpack.c.h.b16 %v311
        %v555 = vunpack.c.l.b16 %v312
        %v556 = vunpack.c.h.b16 %v312
        %v557 = vunpack.c.l.b16 %v313
        %v558 = vunpack.c.h.b16 %v313
        %v559 = vunpack.c.l.b16 %v314
        %v560 = vunpack.c.h.b16 %v314
        %v561 = vunpack.c.l.b16 %v315
        %v562 = vunpack.c.h.b16 %v315
        %v563 = vunpack.c.l.b16 %v316
        %v564 = vunpack.c.h.b16 %v316
        %v565 = vunpack.c.l.b16 %v317
        %v566 = vunpack.c.h.b16 %v317
        %v567 = vunpack.c.l.b16 %v318
        %v568 = vunpack.c.h.b16 %v318
        %v569 = vunpack.c.l.b16 %v319
        %v570 = vunpack.c.h.b16 %v319
        %v571 = vunpack.c.l.b16 %v320
        %v572 = vunpack.c.h.b16 %v320
        %v573 = vunpack.c.l.b16 %v321
        %v574 = vunpack.c.h.b16 %v321
        %v575 = vunpack.c.l.b16 %v322
        %v576 = vunpack.c.h.b16 %v322
        %v577 = vunpack.c.l.b16 %v323
        %v578 = vunpack.c.h.b16 %v323
        %v579 = vunpack.c.l.b16 %v324
        %v580 = vunpack.c.h.b16 %v324
        %v581 = vunpack.c.l.b16 %v325
        %v582 = vunpack.c.h.b16 %v325
        %v583 = vunpack.c.l.b16 %v326
        %v584 = vunpack.c.h.b16 %v326
        %v585 = vunpack.c.l.b16 %v327
        %v586 = vunpack.c.h.b16 %v327
        %v587 = vunpack.c.l.b16 %v328
        %v588 = vunpack.c.h.b16 %v328
        %v589 = vunpack.c.l.b16 %v329
        %v590 = vunpack.c.h.b16 %v329
        %v591 = vunpack.c.l.b16 %v330
        %v592 = vunpack.c.h.b16 %v330
        %v593 = vunpack.c.l.b16 %v331
        %v594 = vunpack.c.h.b16 %v331
        %v595 = vunpack.c.l.b16 %v332
        %v596 = vunpack.c.h.b16 %v332
        %v597 = vunpack.c.l.b16 %v333
        %v598 = vunpack.c.h.b16 %v333
        %v599 = vunpack.c.l.b16 %v334
        %v600 = vunpack.c.h.b16 %v334
        %v601 = vunpack.c.l.b16 %v335
        %v602 = vunpack.c.h.b16 %v335
        %v603 = vunpack.c.l.b16 %v336
        %v604 = vunpack.c.h.b16 %v336
        %v605 = vunpack.c.l.b16 %v337
        %v606 = vunpack.c.h.b16 %v337
        %v607 = vunpack.c.l.b16 %v338
        %v608 = vunpack.c.h.b16 %v338
        %v609 = vunpack.c.l.b16 %v339
        %v610 = vunpack.c.h.b16 %v339
        %v611 = vunpack.c.l.b16 %v340
        %v612 = vunpack.c.h.b16 %v340
        %v613 = vunpack.c.l.b16 %v341
        %v614 = vunpack.c.h.b16 %v341
        %v615 = vunpack.c.l.b16 %v342
        %v616 = vunpack.c.h.b16 %v342
        %v617 = vunpack.c.l.b16 %v343
        %v618 = vunpack.c.h.b16 %v343
        %v619 = vunpack.c.l.b16 %v344
        %v620 = vunpack.c.h.b16 %v344
        %v621 = vunpack.c.l.b16 %v345
        %v622 = vunpack.c.h.b16 %v345
        %v623 = vunpack.c.l.b16 %v346
        %v624 = vunpack.c.h.b16 %v346
        %v625 = vunpack.c.l.b16 %v347
        %v626 = vunpack.c.h.b16 %v347
        %v627 = vunpack.c.l.b16 %v348
        %v628 = vunpack.c.h.b16 %v348
        %v629 = vunpack.c.l.b16 %v349
        %v630 = vunpack.c.h.b16 %v349
        %v631 = vunpack.c.l.b16 %v350
        %v632 = vunpack.c.h.b16 %v350
        %v633 = vunpack.c.l.b16 %v351
        %v634 = vunpack.c.h.b16 %v351
        %v635 = vunpack.c.l.b16 %v352
        %v636 = vunpack.c.h.b16 %v352
        %v637 = vunpack.c.l.b16 %v353
        %v638 = vunpack.c.h.b16 %v353
        %v639 = vunpack.c.l.b16 %v354
        %v640 = vunpack.c.h.b16 %v354
        %v641 = vunpack.c.l.b16 %v355
        %v642 = vunpack.c.h.b16 %v355
        %v643 = vunpack.c.l.b16 %v356
        %v644 = vunpack.c.h.b16 %v356
        %v645 = vpack.c.b16 %v459, %v453
        %v646 = vpack.c.b16 %v460, %v454
        %v647 = vpack.c.b16 %v461, %v455
        %v648 = vpack.c.b16 %v462, %v456
        %v649 = vpack.c.b16 %v463, %v457
        %v650 = vpack.c.b16 %v464, %v458
        %v651 = vpack.c.b16 %v471, %v465
        %v652 = vpack.c.b16 %v472, %v466
        %v653 = vpack.c.b16 %v473, %v467
        %v654 = vpack.c.b16 %v474, %v468
        %v655 = vpack.c.b16 %v475, %v469
        %v656 = vpack.c.b16 %v476, %v470
        %v657 = vpack.c.b16 %v483, %v477
        %v658 = vpack.c.b16 %v484, %v478
        %v659 = vpack.c.b16 %v485, %v479
        %v660 = vpack.c.b16 %v486, %v480
        %v661 = vpack.c.b16 %v487, %v481
        %v662 = vpack.c.b16 %v488, %v482
        %v663 = vpack.c.b16 %v495, %v489
        %v664 = vpack.c.b16 %v496, %v490
        %v665 = vpack.c.b16 %v497, %v491
        %v666 = vpack.c.b16 %v498, %v492
        %v667 = vpack.c.b16 %v499, %v493
        %v668 = vpack.c.b16 %v500, %v494
        %v669 = vpack.c.b16 %v507, %v501
        %v670 = vpack.c.b16 %v508, %v502
        %v671 = vpack.c.b16 %v509, %v503
        %v672 = vpack.c.b16 %v510, %v504
        %v673 = vpack.c.b16 %v511, %v505
        %v674 = vpack.c.b16 %v512, %v506
        %v675 = vpack.c.b16 %v519, %v513
        %v676 = vpack.c.b16 %v520, %v514
        %v677 = vpack.c.b16 %v521, %v515
        %v678 = vpack.c.b16 %v522, %v516
        %v679 = vpack.c.b16 %v523, %v517
        %v680 = vpack.c.b16 %v524, %v518
        %v681 = vpack.c.b16 %v531, %v525
        %v682 = vpack.c.b16 %v532, %v526
        %v683 = vpack.c.b16 %v533, %v527
        %v684 = vpack.c.b16 %v534, %v528
        %v685 = vpack.c.b16 %v535, %v529
        %v686 = vpack.c.b16 %v536, %v530
        %v687 = vpack.c.b16 %v543, %v537
        %v688 = vpack.c.b16 %v544, %v538
        %v689 = vpack.c.b16 %v545, %v539
        %v690 = vpack.c.b16 %v546, %v540
        %v691 = vpack.c.b16 %v547, %v541
        %v692 = vpack.c.b16 %v548, %v542
        %v693 = vpack.c.b16 %v555, %v549
        %v694 = vpack.c.b16 %v556, %v550
        %v695 = vpack.c.b16 %v557, %v551
        %v696 = vpack.c.b16 %v558, %v552
        %v697 = vpack.c.b16 %v559, %v553
        %v698 = vpack.c.b16 %v560, %v554
        %v699 = vpack.c.b16 %v567, %v561
        %v700 = vpack.c.b16 %v568, %v562
        %v701 = vpack.c.b16 %v569, %v563
        %v702 = vpack.c.b16 %v570, %v564
        %v703 = vpack.c.b16 %v571, %v565
        %v704 = vpack.c.b16 %v572, %v566
        %v705 = vpack.c.b16 %v579, %v573
        %v706 = vpack.c.b16 %v580, %v574
        %v707 = vpack.c.b16 %v581, %v575
        %v708 = vpack.c.b16 %v582, %v576
        %v709 = vpack.c.b16 %v583, %v577
        %v710 = vpack.c.b16 %v584, %v578
        %v711 = vpack.c.b16 %v591, %v585
        %v712 = vpack.c.b16 %v592, %v586
        %v713 = vpack.c.b16 %v593, %v587
        %v714 = vpack.c.b16 %v594, %v588
        %v715 = vpack.c.b16 %v595, %v589
        %v716 = vpack.c.b16 %v596, %v590
        %v717 = vpack.c.b16 %v603, %v597
        %v718 = vpack.c.b16 %v604, %v598
        %v719 = vpack.c.b16 %v605, %v599
        %v720 = vpack.c.b16 %v606, %v600
        %v721 = vpack.c.b16 %v607, %v601
        %v722 = vpack.c.b16 %v608, %v602
        %v723 = vpack.c.b16 %v615, %v609
        %v724 = vpack.c.b16 %v616, %v610
        %v725 = vpack.c.b16 %v617, %v611
        %v726 = vpack.c.b16 %v618, %v612
        %v727 = vpack.c.b16 %v619, %v613
        %v728 = vpack.c.b16 %v620, %v614
        %v729 = vpack.c.b16 %v627, %v621
        %v730 = vpack.c.b16 %v628, %v622
        %v731 = vpack.c.b16 %v629, %v623
        %v732 = vpack.c.b16 %v630, %v624
        %v733 = vpack.c.b16 %v631, %v625
        %v734 = vpack.c.b16 %v632, %v626
        %v735 = vpack.c.b16 %v639, %v633
        %v736 = vpack.c.b16 %v640, %v634
        %v737 = vpack.c.b16 %v641, %v635
        %v738 = vpack.c.b16 %v642, %v636
        %v739 = vpack.c.b16 %v643, %v637
        %v740 = vpack.c.b16 %v644, %v638
        %837 = vmatprep.subr.bf16.mxu0 %v646
        %838 = vmatpush1.bf16.msra.mxu0 %v645
        %839 = vmatprep.subr.bf16.mxu0 %v652
        %840 = vmatpush1.bf16.msra.mxu0 %v651
        %841 = vmatprep.subr.bf16.mxu0 %v658
        %842 = vmatpush1.bf16.msra.mxu0 %v657
        %843 = vmatprep.subr.bf16.mxu0 %v664
        %844 = vmatpush1.bf16.msra.mxu0 %v663
        %845 = vmatprep.subr.bf16.mxu0 %v670
        %846 = vmatpush1.bf16.msra.mxu0 %v669
        %847 = vmatprep.subr.bf16.mxu0 %v676
        %848 = vmatpush1.bf16.msra.mxu0 %v675
        %849 = vmatprep.subr.bf16.mxu0 %v682
        %850 = vmatpush1.bf16.msra.mxu0 %v681
        %851 = vmatprep.subr.bf16.mxu0 %v688
        %852 = vmatpush1.bf16.msra.mxu0 %v687
        %853 = vmatprep.subr.bf16.mxu0 %v694
        %854 = vmatpush1.bf16.msra.mxu0 %v693
        %855 = vmatprep.subr.bf16.mxu0 %v700
        %856 = vmatpush1.bf16.msra.mxu0 %v699
        %857 = vmatprep.subr.bf16.mxu0 %v706
        %858 = vmatpush1.bf16.msra.mxu0 %v705
        %859 = vmatprep.subr.bf16.mxu0 %v712
        %860 = vmatpush1.bf16.msra.mxu0 %v711
        %861 = vmatprep.subr.bf16.mxu0 %v718
        %862 = vmatpush1.bf16.msra.mxu0 %v717
        %863 = vmatprep.subr.bf16.mxu0 %v724
        %864 = vmatpush1.bf16.msra.mxu0 %v723
        %865 = vmatprep.subr.bf16.mxu0 %v730
        %866 = vmatpush1.bf16.msra.mxu0 %v729
        %867 = vmatprep.subr.bf16.mxu0 %v736
        %868 = vmatpush1.bf16.msra.mxu0 %v735
        %869 = vmatprep.mubr.bf16.mxu0 %v258
        %870 = vmatmul.mubr.bf16.gmra.mrb[0].mxu0 %v257
        %v871 = vpop.f32.mrb[0].mxu0
        %v872 = vadd.f32 0.0, %v871
        %v873 = vpop.f32.mrb[0].mxu0
        %v874 = vadd.f32 0.0, %v873
        %v875 = vpop.f32.mrb[0].mxu0
        %v876 = vadd.f32 0.0, %v875
        %v877 = vpop.f32.mrb[0].mxu0
        %v878 = vadd.f32 0.0, %v877
        %879 = vmatprep.mubr.bf16.mxu0 %v260
        %880 = vmatmul.mubr.bf16.gmra.mrb[0].mxu0 %v259
        %v881 = vpop.f32.mrb[0].mxu0
        %v882 = vadd.f32 0.0, %v881
        %v883 = vpop.f32.mrb[0].mxu0
        %v884 = vadd.f32 0.0, %v883
        %v885 = vpop.f32.mrb[0].mxu0
        %v886 = vadd.f32 0.0, %v885
        %v887 = vpop.f32.mrb[0].mxu0
        %v888 = vadd.f32 0.0, %v887
        %889 = vdwg.mxu0
        %890 = vmatprep.subr.bf16.mxu0 %v648
        %891 = vmatpush1.bf16.msra.mxu0 %v647
        %892 = vmatprep.subr.bf16.mxu0 %v654
        %893 = vmatpush1.bf16.msra.mxu0 %v653
        %894 = vmatprep.subr.bf16.mxu0 %v660
        %895 = vmatpush1.bf16.msra.mxu0 %v659
        %896 = vmatprep.subr.bf16.mxu0 %v666
        %897 = vmatpush1.bf16.msra.mxu0 %v665
        %898 = vmatprep.subr.bf16.mxu0 %v672
        %899 = vmatpush1.bf16.msra.mxu0 %v671
        %900 = vmatprep.subr.bf16.mxu0 %v678
        %901 = vmatpush1.bf16.msra.mxu0 %v677
        %902 = vmatprep.subr.bf16.mxu0 %v684
        %903 = vmatpush1.bf16.msra.mxu0 %v683
        %904 = vmatprep.subr.bf16.mxu0 %v690
        %905 = vmatpush1.bf16.msra.mxu0 %v689
        %906 = vmatprep.subr.bf16.mxu0 %v696
        %907 = vmatpush1.bf16.msra.mxu0 %v695
        %908 = vmatprep.subr.bf16.mxu0 %v702
        %909 = vmatpush1.bf16.msra.mxu0 %v701
        %910 = vmatprep.subr.bf16.mxu0 %v708
        %911 = vmatpush1.bf16.msra.mxu0 %v707
        %912 = vmatprep.subr.bf16.mxu0 %v714
        %913 = vmatpush1.bf16.msra.mxu0 %v713
        %914 = vmatprep.subr.bf16.mxu0 %v720
        %915 = vmatpush1.bf16.msra.mxu0 %v719
        %916 = vmatprep.subr.bf16.mxu0 %v726
        %917 = vmatpush1.bf16.msra.mxu0 %v725
        %918 = vmatprep.subr.bf16.mxu0 %v732
        %919 = vmatpush1.bf16.msra.mxu0 %v731
        %920 = vmatprep.subr.bf16.mxu0 %v738
        %921 = vmatpush1.bf16.msra.mxu0 %v737
        %922 = vmatprep.mubr.bf16.mxu0 %v258
        %923 = vmatmul.mubr.bf16.gmra.mrb[0].mxu0 %v257
        %v924 = vpop.f32.mrb[0].mxu0
        %v925 = vadd.f32 0.0, %v924
        %v926 = vpop.f32.mrb[0].mxu0
        %v927 = vadd.f32 0.0, %v926
        %v928 = vpop.f32.mrb[0].mxu0
        %v929 = vadd.f32 0.0, %v928
        %v930 = vpop.f32.mrb[0].mxu0
        %v931 = vadd.f32 0.0, %v930
        %932 = vmatprep.mubr.bf16.mxu0 %v260
        %933 = vmatmul.mubr.bf16.gmra.mrb[0].mxu0 %v259
        %v934 = vpop.f32.mrb[0].mxu0
        %v935 = vadd.f32 0.0, %v934
        %v936 = vpop.f32.mrb[0].mxu0
        %v937 = vadd.f32 0.0, %v936
        %v938 = vpop.f32.mrb[0].mxu0
        %v939 = vadd.f32 0.0, %v938
        %v940 = vpop.f32.mrb[0].mxu0
        %v941 = vadd.f32 0.0, %v940
        %942 = vdwg.mxu0
        %943 = vmatprep.subr.bf16.mxu0 %v650
        %944 = vmatpush1.bf16.msra.mxu0 %v649
        %945 = vmatprep.subr.bf16.mxu0 %v656
        %946 = vmatpush1.bf16.msra.mxu0 %v655
        %947 = vmatprep.subr.bf16.mxu0 %v662
        %948 = vmatpush1.bf16.msra.mxu0 %v661
        %949 = vmatprep.subr.bf16.mxu0 %v668
        %950 = vmatpush1.bf16.msra.mxu0 %v667
        %951 = vmatprep.subr.bf16.mxu0 %v674
        %952 = vmatpush1.bf16.msra.mxu0 %v673
        %953 = vmatprep.subr.bf16.mxu0 %v680
        %954 = vmatpush1.bf16.msra.mxu0 %v679
        %955 = vmatprep.subr.bf16.mxu0 %v686
        %956 = vmatpush1.bf16.msra.mxu0 %v685
        %957 = vmatprep.subr.bf16.mxu0 %v692
        %958 = vmatpush1.bf16.msra.mxu0 %v691
        %959 = vmatprep.subr.bf16.mxu0 %v698
        %960 = vmatpush1.bf16.msra.mxu0 %v697
        %961 = vmatprep.subr.bf16.mxu0 %v704
        %962 = vmatpush1.bf16.msra.mxu0 %v703
        %963 = vmatprep.subr.bf16.mxu0 %v710
        %964 = vmatpush1.bf16.msra.mxu0 %v709
        %965 = vmatprep.subr.bf16.mxu0 %v716
        %966 = vmatpush1.bf16.msra.mxu0 %v715
        %967 = vmatprep.subr.bf16.mxu0 %v722
        %968 = vmatpush1.bf16.msra.mxu0 %v721
        %969 = vmatprep.subr.bf16.mxu0 %v728
        %970 = vmatpush1.bf16.msra.mxu0 %v727
        %971 = vmatprep.subr.bf16.mxu0 %v734
        %972 = vmatpush1.bf16.msra.mxu0 %v733
        %973 = vmatprep.subr.bf16.mxu0 %v740
        %974 = vmatpush1.bf16.msra.mxu0 %v739
        %975 = vmatprep.mubr.bf16.mxu0 %v258
        %976 = vmatmul.mubr.bf16.gmra.mrb[0].mxu0 %v257
        %v977 = vpop.f32.mrb[0].mxu0
        %v978 = vadd.f32 0.0, %v977
        %v979 = vpop.f32.mrb[0].mxu0
        %v980 = vadd.f32 0.0, %v979
        %v981 = vpop.f32.mrb[0].mxu0
        %v982 = vadd.f32 0.0, %v981
        %v983 = vpop.f32.mrb[0].mxu0
        %v984 = vadd.f32 0.0, %v983
        %985 = vmatprep.mubr.bf16.mxu0 %v260
        %986 = vmatmul.mubr.bf16.gmra.mrb[0].mxu0 %v259
        %v987 = vpop.f32.mrb[0].mxu0
        %v988 = vadd.f32 0.0, %v987
        %v989 = vpop.f32.mrb[0].mxu0
        %v990 = vadd.f32 0.0, %v989
        %v991 = vpop.f32.mrb[0].mxu0
        %v992 = vadd.f32 0.0, %v991
        %v993 = vpop.f32.mrb[0].mxu0
        %v994 = vadd.f32 0.0, %v993
        %995 = vdwg.mxu0
        %v996 = vpack.c.bf16 %v876, %v872
        %v997 = vpack.c.bf16 %v878, %v874
        %v998 = vpack.c.bf16 %v929, %v925
        %v999 = vpack.c.bf16 %v931, %v927
        %v1000 = vpack.c.bf16 %v982, %v978
        %v1001 = vpack.c.bf16 %v984, %v980
        %v1002 = vpack.c.bf16 %v886, %v882
        %v1003 = vpack.c.bf16 %v888, %v884
        %v1004 = vpack.c.bf16 %v939, %v935
        %v1005 = vpack.c.bf16 %v941, %v937
        %v1006 = vpack.c.bf16 %v992, %v988
        %v1007 = vpack.c.bf16 %v994, %v990
        %1010 = vrot.lane.b32.xlu0 %v996, 96
        %v1011 = vpop.permute.xlu0 %1010
        %1012 = vrot.lane.b32.xlu0 %v1002, 96
        %v1013 = vpop.permute.xlu0 %1012
        %1014 = vrot.lane.b32.xlu0 %v996, 64
        %v1015 = vpop.permute.xlu0 %1014
        %1016 = vrot.lane.b32.xlu0 %v1002, 64
        %v1017 = vpop.permute.xlu0 %1016
        %1018 = vrot.lane.b32.xlu0 %v996, 32
        %v1019 = vpop.permute.xlu0 %1018
        %1020 = vrot.lane.b32.xlu0 %v1002, 32
        %v1021 = vpop.permute.xlu0 %1020
        %1024 = vrot.lane.b32.xlu0 %v997, 96
        %v1025 = vpop.permute.xlu0 %1024
        %1026 = vrot.lane.b32.xlu0 %v1003, 96
        %v1027 = vpop.permute.xlu0 %1026
        %1028 = vrot.lane.b32.xlu0 %v997, 64
        %v1029 = vpop.permute.xlu0 %1028
        %1030 = vrot.lane.b32.xlu0 %v1003, 64
        %v1031 = vpop.permute.xlu0 %1030
        %1032 = vrot.lane.b32.xlu0 %v997, 32
        %v1033 = vpop.permute.xlu0 %1032
        %1034 = vrot.lane.b32.xlu0 %v1003, 32
        %v1035 = vpop.permute.xlu0 %1034
        %v1038 = vpack.i.b16 %v1011, %v996
        %v1040 = vshrl.u32 %v996, 16
        %v1041 = vshrl.u32 %v1011, 16
        %v1042 = vpack.i.b16 %v1041, %v1040
        %v1046 = vpack.i.b16 %v1019, %v1015
        %v1048 = vshrl.u32 %v1015, 16
        %v1049 = vshrl.u32 %v1019, 16
        %v1050 = vpack.i.b16 %v1049, %v1048
        %v1054 = vpack.i.b16 %v1025, %v997
        %v1056 = vshrl.u32 %v997, 16
        %v1057 = vshrl.u32 %v1025, 16
        %v1058 = vpack.i.b16 %v1057, %v1056
        %v1062 = vpack.i.b16 %v1033, %v1029
        %v1064 = vshrl.u32 %v1029, 16
        %v1065 = vshrl.u32 %v1033, 16
        %v1066 = vpack.i.b16 %v1065, %v1064
        %v1070 = vpack.i.b16 %v1013, %v1002
        %v1072 = vshrl.u32 %v1002, 16
        %v1073 = vshrl.u32 %v1013, 16
        %v1074 = vpack.i.b16 %v1073, %v1072
        %v1078 = vpack.i.b16 %v1021, %v1017
        %v1080 = vshrl.u32 %v1017, 16
        %v1081 = vshrl.u32 %v1021, 16
        %v1082 = vpack.i.b16 %v1081, %v1080
        %v1086 = vpack.i.b16 %v1027, %v1003
        %v1088 = vshrl.u32 %v1003, 16
        %v1089 = vshrl.u32 %v1027, 16
        %v1090 = vpack.i.b16 %v1089, %v1088
        %v1094 = vpack.i.b16 %v1035, %v1031
        %v1096 = vshrl.u32 %v1031, 16
        %v1097 = vshrl.u32 %v1035, 16
        %v1098 = vpack.i.b16 %v1097, %v1096
        %v1100 = vcombine.low %v1038, %v1054
        %v1101 = vcombine.high %v1038, %v1054
        %v1103 = vunpack.c.l.s4 1983009808
        %v1104 = vunpack.c.0.s8 %v1103
        %v1105 = vlaneseq
        %v1106 = vshrl.u32 %v1105, 7
        %v1107 = vsub.s32 %v1104, %v1106
        %v1108 = vrot.slane %v1100, %v1107
        %v1110 = vunpack.c.l.s4 1983009808
        %v1111 = vunpack.c.0.s8 %v1110
        %v1112 = vlaneseq
        %v1113 = vshrl.u32 %v1112, 7
        %v1114 = vsub.s32 %v1111, %v1113
        %v1115 = vrot.slane %v1101, %v1114
        %v1116 = vcombine.low %v1046, %v1062
        %v1117 = vcombine.high %v1046, %v1062
        %v1119 = vunpack.c.l.s4 1983009808
        %v1120 = vunpack.c.0.s8 %v1119
        %v1121 = vlaneseq
        %v1122 = vshrl.u32 %v1121, 7
        %v1123 = vsub.s32 %v1120, %v1122
        %v1124 = vrot.slane %v1116, %v1123
        %v1126 = vunpack.c.l.s4 1983009808
        %v1127 = vunpack.c.0.s8 %v1126
        %v1128 = vlaneseq
        %v1129 = vshrl.u32 %v1128, 7
        %v1130 = vsub.s32 %v1127, %v1129
        %v1131 = vrot.slane %v1117, %v1130
        %v1132 = vcombine.low %v1108, %v1124
        %v1133 = vcombine.high %v1108, %v1124
        %v1135 = vunpack.c.l.s4 1934713408
        %v1136 = vunpack.c.0.s8 %v1135
        %v1137 = vlaneseq
        %v1138 = vshrl.u32 %v1137, 7
        %v1139 = vsub.s32 %v1136, %v1138
        %v1140 = vrot.slane %v1132, %v1139
        %v1142 = vunpack.c.l.s4 1934713408
        %v1143 = vunpack.c.0.s8 %v1142
        %v1144 = vlaneseq
        %v1145 = vshrl.u32 %v1144, 7
        %v1146 = vsub.s32 %v1143, %v1145
        %v1147 = vrot.slane %v1133, %v1146
        %v1148 = vcombine.low %v1115, %v1131
        %v1149 = vcombine.high %v1115, %v1131
        %v1151 = vunpack.c.l.s4 1934713408
        %v1152 = vunpack.c.0.s8 %v1151
        %v1153 = vlaneseq
        %v1154 = vshrl.u32 %v1153, 7
        %v1155 = vsub.s32 %v1152, %v1154
        %v1156 = vrot.slane %v1148, %v1155
        %v1158 = vunpack.c.l.s4 1934713408
        %v1159 = vunpack.c.0.s8 %v1158
        %v1160 = vlaneseq
        %v1161 = vshrl.u32 %v1160, 7
        %v1162 = vsub.s32 %v1159, %v1161
        %v1163 = vrot.slane %v1149, %v1162
        %v1164 = vcombine.high %v1140, 0
        %v1165 = vcombine.high %v1147, 0
        %v1166 = vcombine.high %v1156, 0
        %v1167 = vcombine.high %v1163, 0
        %v1168 = vcombine.low %v1042, %v1058
        %v1169 = vcombine.high %v1042, %v1058
        %v1171 = vunpack.c.l.s4 1983009808
        %v1172 = vunpack.c.0.s8 %v1171
        %v1173 = vlaneseq
        %v1174 = vshrl.u32 %v1173, 7
        %v1175 = vsub.s32 %v1172, %v1174
        %v1176 = vrot.slane %v1168, %v1175
        %v1178 = vunpack.c.l.s4 1983009808
        %v1179 = vunpack.c.0.s8 %v1178
        %v1180 = vlaneseq
        %v1181 = vshrl.u32 %v1180, 7
        %v1182 = vsub.s32 %v1179, %v1181
        %v1183 = vrot.slane %v1169, %v1182
        %v1184 = vcombine.low %v1050, %v1066
        %v1185 = vcombine.high %v1050, %v1066
        %v1187 = vunpack.c.l.s4 1983009808
        %v1188 = vunpack.c.0.s8 %v1187
        %v1189 = vlaneseq
        %v1190 = vshrl.u32 %v1189, 7
        %v1191 = vsub.s32 %v1188, %v1190
        %v1192 = vrot.slane %v1184, %v1191
        %v1194 = vunpack.c.l.s4 1983009808
        %v1195 = vunpack.c.0.s8 %v1194
        %v1196 = vlaneseq
        %v1197 = vshrl.u32 %v1196, 7
        %v1198 = vsub.s32 %v1195, %v1197
        %v1199 = vrot.slane %v1185, %v1198
        %v1200 = vcombine.low %v1176, %v1192
        %v1201 = vcombine.high %v1176, %v1192
        %v1203 = vunpack.c.l.s4 1934713408
        %v1204 = vunpack.c.0.s8 %v1203
        %v1205 = vlaneseq
        %v1206 = vshrl.u32 %v1205, 7
        %v1207 = vsub.s32 %v1204, %v1206
        %v1208 = vrot.slane %v1200, %v1207
        %v1210 = vunpack.c.l.s4 1934713408
        %v1211 = vunpack.c.0.s8 %v1210
        %v1212 = vlaneseq
        %v1213 = vshrl.u32 %v1212, 7
        %v1214 = vsub.s32 %v1211, %v1213
        %v1215 = vrot.slane %v1201, %v1214
        %v1216 = vcombine.low %v1183, %v1199
        %v1217 = vcombine.high %v1183, %v1199
        %v1219 = vunpack.c.l.s4 1934713408
        %v1220 = vunpack.c.0.s8 %v1219
        %v1221 = vlaneseq
        %v1222 = vshrl.u32 %v1221, 7
        %v1223 = vsub.s32 %v1220, %v1222
        %v1224 = vrot.slane %v1216, %v1223
        %v1226 = vunpack.c.l.s4 1934713408
        %v1227 = vunpack.c.0.s8 %v1226
        %v1228 = vlaneseq
        %v1229 = vshrl.u32 %v1228, 7
        %v1230 = vsub.s32 %v1227, %v1229
        %v1231 = vrot.slane %v1217, %v1230
        %v1232 = vcombine.high %v1208, 0
        %v1233 = vcombine.high %v1215, 0
        %v1234 = vcombine.high %v1224, 0
        %v1235 = vcombine.high %v1231, 0
        %v1236 = vcombine.low %v1070, %v1086
        %v1237 = vcombine.high %v1070, %v1086
        %v1239 = vunpack.c.l.s4 1983009808
        %v1240 = vunpack.c.0.s8 %v1239
        %v1241 = vlaneseq
        %v1242 = vshrl.u32 %v1241, 7
        %v1243 = vsub.s32 %v1240, %v1242
        %v1244 = vrot.slane %v1236, %v1243
        %v1246 = vunpack.c.l.s4 1983009808
        %v1247 = vunpack.c.0.s8 %v1246
        %v1248 = vlaneseq
        %v1249 = vshrl.u32 %v1248, 7
        %v1250 = vsub.s32 %v1247, %v1249
        %v1251 = vrot.slane %v1237, %v1250
        %v1252 = vcombine.low %v1078, %v1094
        %v1253 = vcombine.high %v1078, %v1094
        %v1255 = vunpack.c.l.s4 1983009808
        %v1256 = vunpack.c.0.s8 %v1255
        %v1257 = vlaneseq
        %v1258 = vshrl.u32 %v1257, 7
        %v1259 = vsub.s32 %v1256, %v1258
        %v1260 = vrot.slane %v1252, %v1259
        %v1262 = vunpack.c.l.s4 1983009808
        %v1263 = vunpack.c.0.s8 %v1262
        %v1264 = vlaneseq
        %v1265 = vshrl.u32 %v1264, 7
        %v1266 = vsub.s32 %v1263, %v1265
        %v1267 = vrot.slane %v1253, %v1266
        %v1268 = vcombine.low %v1244, %v1260
        %v1269 = vcombine.high %v1244, %v1260
        %v1271 = vunpack.c.l.s4 1934713408
        %v1272 = vunpack.c.0.s8 %v1271
        %v1273 = vlaneseq
        %v1274 = vshrl.u32 %v1273, 7
        %v1275 = vsub.s32 %v1272, %v1274
        %v1276 = vrot.slane %v1268, %v1275
        %v1278 = vunpack.c.l.s4 1934713408
        %v1279 = vunpack.c.0.s8 %v1278
        %v1280 = vlaneseq
        %v1281 = vshrl.u32 %v1280, 7
        %v1282 = vsub.s32 %v1279, %v1281
        %v1283 = vrot.slane %v1269, %v1282
        %v1284 = vcombine.low %v1251, %v1267
        %v1285 = vcombine.high %v1251, %v1267
        %v1287 = vunpack.c.l.s4 1934713408
        %v1288 = vunpack.c.0.s8 %v1287
        %v1289 = vlaneseq
        %v1290 = vshrl.u32 %v1289, 7
        %v1291 = vsub.s32 %v1288, %v1290
        %v1292 = vrot.slane %v1284, %v1291
        %v1294 = vunpack.c.l.s4 1934713408
        %v1295 = vunpack.c.0.s8 %v1294
        %v1296 = vlaneseq
        %v1297 = vshrl.u32 %v1296, 7
        %v1298 = vsub.s32 %v1295, %v1297
        %v1299 = vrot.slane %v1285, %v1298
        %v1300 = vcombine.high %v1276, 0
        %v1301 = vcombine.high %v1283, 0
        %v1302 = vcombine.high %v1292, 0
        %v1303 = vcombine.high %v1299, 0
        %v1304 = vcombine.low %v1074, %v1090
        %v1305 = vcombine.high %v1074, %v1090
        %v1307 = vunpack.c.l.s4 1983009808
        %v1308 = vunpack.c.0.s8 %v1307
        %v1309 = vlaneseq
        %v1310 = vshrl.u32 %v1309, 7
        %v1311 = vsub.s32 %v1308, %v1310
        %v1312 = vrot.slane %v1304, %v1311
        %v1314 = vunpack.c.l.s4 1983009808
        %v1315 = vunpack.c.0.s8 %v1314
        %v1316 = vlaneseq
        %v1317 = vshrl.u32 %v1316, 7
        %v1318 = vsub.s32 %v1315, %v1317
        %v1319 = vrot.slane %v1305, %v1318
        %v1320 = vcombine.low %v1082, %v1098
        %v1321 = vcombine.high %v1082, %v1098
        %v1323 = vunpack.c.l.s4 1983009808
        %v1324 = vunpack.c.0.s8 %v1323
        %v1325 = vlaneseq
        %v1326 = vshrl.u32 %v1325, 7
        %v1327 = vsub.s32 %v1324, %v1326
        %v1328 = vrot.slane %v1320, %v1327
        %v1330 = vunpack.c.l.s4 1983009808
        %v1331 = vunpack.c.0.s8 %v1330
        %v1332 = vlaneseq
        %v1333 = vshrl.u32 %v1332, 7
        %v1334 = vsub.s32 %v1331, %v1333
        %v1335 = vrot.slane %v1321, %v1334
        %v1336 = vcombine.low %v1312, %v1328
        %v1337 = vcombine.high %v1312, %v1328
        %v1339 = vunpack.c.l.s4 1934713408
        %v1340 = vunpack.c.0.s8 %v1339
        %v1341 = vlaneseq
        %v1342 = vshrl.u32 %v1341, 7
        %v1343 = vsub.s32 %v1340, %v1342
        %v1344 = vrot.slane %v1336, %v1343
        %v1346 = vunpack.c.l.s4 1934713408
        %v1347 = vunpack.c.0.s8 %v1346
        %v1348 = vlaneseq
        %v1349 = vshrl.u32 %v1348, 7
        %v1350 = vsub.s32 %v1347, %v1349
        %v1351 = vrot.slane %v1337, %v1350
        %v1352 = vcombine.low %v1319, %v1335
        %v1353 = vcombine.high %v1319, %v1335
        %v1355 = vunpack.c.l.s4 1934713408
        %v1356 = vunpack.c.0.s8 %v1355
        %v1357 = vlaneseq
        %v1358 = vshrl.u32 %v1357, 7
        %v1359 = vsub.s32 %v1356, %v1358
        %v1360 = vrot.slane %v1352, %v1359
        %v1362 = vunpack.c.l.s4 1934713408
        %v1363 = vunpack.c.0.s8 %v1362
        %v1364 = vlaneseq
        %v1365 = vshrl.u32 %v1364, 7
        %v1366 = vsub.s32 %v1363, %v1365
        %v1367 = vrot.slane %v1353, %v1366
        %v1368 = vcombine.high %v1344, 0
        %v1369 = vcombine.high %v1351, 0
        %v1370 = vcombine.high %v1360, 0
        %v1371 = vcombine.high %v1367, 0
        %v1372 = vcombine.low %v1140, %v1147
        %v1374 = vunpack.c.l.s4 1983009808
        %v1375 = vunpack.c.0.s8 %v1374
        %v1376 = vlaneseq
        %v1377 = vshrl.u32 %v1376, 7
        %v1378 = vsub.s32 %v1375, %v1377
        %v1379 = vrot.slane %v1372, %v1378
        %v1380 = vcombine.low %v1164, %v1165
        %v1382 = vunpack.c.l.s4 1983009808
        %v1383 = vunpack.c.0.s8 %v1382
        %v1384 = vlaneseq
        %v1385 = vshrl.u32 %v1384, 7
        %v1386 = vsub.s32 %v1383, %v1385
        %v1387 = vrot.slane %v1380, %v1386
        %v1388 = vcombine.low %v1156, %v1163
        %v1390 = vunpack.c.l.s4 1983009808
        %v1391 = vunpack.c.0.s8 %v1390
        %v1392 = vlaneseq
        %v1393 = vshrl.u32 %v1392, 7
        %v1394 = vsub.s32 %v1391, %v1393
        %v1395 = vrot.slane %v1388, %v1394
        %v1396 = vcombine.low %v1166, %v1167
        %v1398 = vunpack.c.l.s4 1983009808
        %v1399 = vunpack.c.0.s8 %v1398
        %v1400 = vlaneseq
        %v1401 = vshrl.u32 %v1400, 7
        %v1402 = vsub.s32 %v1399, %v1401
        %v1403 = vrot.slane %v1396, %v1402
        %v1404 = vcombine.low %v1379, %v1387
        %v1405 = vcombine.high %v1379, %v1387
        %v1407 = vunpack.c.l.s4 1934713408
        %v1408 = vunpack.c.0.s8 %v1407
        %v1409 = vlaneseq
        %v1410 = vshrl.u32 %v1409, 7
        %v1411 = vsub.s32 %v1408, %v1410
        %v1412 = vrot.slane %v1404, %v1411
        %v1414 = vunpack.c.l.s4 1934713408
        %v1415 = vunpack.c.0.s8 %v1414
        %v1416 = vlaneseq
        %v1417 = vshrl.u32 %v1416, 7
        %v1418 = vsub.s32 %v1415, %v1417
        %v1419 = vrot.slane %v1405, %v1418
        %v1420 = vcombine.low %v1395, %v1403
        %v1421 = vcombine.high %v1395, %v1403
        %v1423 = vunpack.c.l.s4 1934713408
        %v1424 = vunpack.c.0.s8 %v1423
        %v1425 = vlaneseq
        %v1426 = vshrl.u32 %v1425, 7
        %v1427 = vsub.s32 %v1424, %v1426
        %v1428 = vrot.slane %v1420, %v1427
        %v1430 = vunpack.c.l.s4 1934713408
        %v1431 = vunpack.c.0.s8 %v1430
        %v1432 = vlaneseq
        %v1433 = vshrl.u32 %v1432, 7
        %v1434 = vsub.s32 %v1431, %v1433
        %v1435 = vrot.slane %v1421, %v1434
        %v1436 = vcombine.low %v1412, %v1428
        %v1437 = vcombine.high %v1412, %v1428
        %v1438 = vcombine.low %v1419, %v1435
        %v1439 = vcombine.high %v1419, %v1435
        %v1440 = vcombine.low %v1208, %v1215
        %v1442 = vunpack.c.l.s4 1983009808
        %v1443 = vunpack.c.0.s8 %v1442
        %v1444 = vlaneseq
        %v1445 = vshrl.u32 %v1444, 7
        %v1446 = vsub.s32 %v1443, %v1445
        %v1447 = vrot.slane %v1440, %v1446
        %v1448 = vcombine.low %v1232, %v1233
        %v1450 = vunpack.c.l.s4 1983009808
        %v1451 = vunpack.c.0.s8 %v1450
        %v1452 = vlaneseq
        %v1453 = vshrl.u32 %v1452, 7
        %v1454 = vsub.s32 %v1451, %v1453
        %v1455 = vrot.slane %v1448, %v1454
        %v1456 = vcombine.low %v1224, %v1231
        %v1458 = vunpack.c.l.s4 1983009808
        %v1459 = vunpack.c.0.s8 %v1458
        %v1460 = vlaneseq
        %v1461 = vshrl.u32 %v1460, 7
        %v1462 = vsub.s32 %v1459, %v1461
        %v1463 = vrot.slane %v1456, %v1462
        %v1464 = vcombine.low %v1234, %v1235
        %v1466 = vunpack.c.l.s4 1983009808
        %v1467 = vunpack.c.0.s8 %v1466
        %v1468 = vlaneseq
        %v1469 = vshrl.u32 %v1468, 7
        %v1470 = vsub.s32 %v1467, %v1469
        %v1471 = vrot.slane %v1464, %v1470
        %v1472 = vcombine.low %v1447, %v1455
        %v1473 = vcombine.high %v1447, %v1455
        %v1475 = vunpack.c.l.s4 1934713408
        %v1476 = vunpack.c.0.s8 %v1475
        %v1477 = vlaneseq
        %v1478 = vshrl.u32 %v1477, 7
        %v1479 = vsub.s32 %v1476, %v1478
        %v1480 = vrot.slane %v1472, %v1479
        %v1482 = vunpack.c.l.s4 1934713408
        %v1483 = vunpack.c.0.s8 %v1482
        %v1484 = vlaneseq
        %v1485 = vshrl.u32 %v1484, 7
        %v1486 = vsub.s32 %v1483, %v1485
        %v1487 = vrot.slane %v1473, %v1486
        %v1488 = vcombine.low %v1463, %v1471
        %v1489 = vcombine.high %v1463, %v1471
        %v1491 = vunpack.c.l.s4 1934713408
        %v1492 = vunpack.c.0.s8 %v1491
        %v1493 = vlaneseq
        %v1494 = vshrl.u32 %v1493, 7
        %v1495 = vsub.s32 %v1492, %v1494
        %v1496 = vrot.slane %v1488, %v1495
        %v1498 = vunpack.c.l.s4 1934713408
        %v1499 = vunpack.c.0.s8 %v1498
        %v1500 = vlaneseq
        %v1501 = vshrl.u32 %v1500, 7
        %v1502 = vsub.s32 %v1499, %v1501
        %v1503 = vrot.slane %v1489, %v1502
        %v1504 = vcombine.low %v1480, %v1496
        %v1505 = vcombine.high %v1480, %v1496
        %v1506 = vcombine.low %v1487, %v1503
        %v1507 = vcombine.high %v1487, %v1503
        %v1508 = vcombine.low %v1276, %v1283
        %v1510 = vunpack.c.l.s4 1983009808
        %v1511 = vunpack.c.0.s8 %v1510
        %v1512 = vlaneseq
        %v1513 = vshrl.u32 %v1512, 7
        %v1514 = vsub.s32 %v1511, %v1513
        %v1515 = vrot.slane %v1508, %v1514
        %v1516 = vcombine.low %v1300, %v1301
        %v1518 = vunpack.c.l.s4 1983009808
        %v1519 = vunpack.c.0.s8 %v1518
        %v1520 = vlaneseq
        %v1521 = vshrl.u32 %v1520, 7
        %v1522 = vsub.s32 %v1519, %v1521
        %v1523 = vrot.slane %v1516, %v1522
        %v1524 = vcombine.low %v1292, %v1299
        %v1526 = vunpack.c.l.s4 1983009808
        %v1527 = vunpack.c.0.s8 %v1526
        %v1528 = vlaneseq
        %v1529 = vshrl.u32 %v1528, 7
        %v1530 = vsub.s32 %v1527, %v1529
        %v1531 = vrot.slane %v1524, %v1530
        %v1532 = vcombine.low %v1302, %v1303
        %v1534 = vunpack.c.l.s4 1983009808
        %v1535 = vunpack.c.0.s8 %v1534
        %v1536 = vlaneseq
        %v1537 = vshrl.u32 %v1536, 7
        %v1538 = vsub.s32 %v1535, %v1537
        %v1539 = vrot.slane %v1532, %v1538
        %v1540 = vcombine.low %v1515, %v1523
        %v1541 = vcombine.high %v1515, %v1523
        %v1543 = vunpack.c.l.s4 1934713408
        %v1544 = vunpack.c.0.s8 %v1543
        %v1545 = vlaneseq
        %v1546 = vshrl.u32 %v1545, 7
        %v1547 = vsub.s32 %v1544, %v1546
        %v1548 = vrot.slane %v1540, %v1547
        %v1550 = vunpack.c.l.s4 1934713408
        %v1551 = vunpack.c.0.s8 %v1550
        %v1552 = vlaneseq
        %v1553 = vshrl.u32 %v1552, 7
        %v1554 = vsub.s32 %v1551, %v1553
        %v1555 = vrot.slane %v1541, %v1554
        %v1556 = vcombine.low %v1531, %v1539
        %v1557 = vcombine.high %v1531, %v1539
        %v1559 = vunpack.c.l.s4 1934713408
        %v1560 = vunpack.c.0.s8 %v1559
        %v1561 = vlaneseq
        %v1562 = vshrl.u32 %v1561, 7
        %v1563 = vsub.s32 %v1560, %v1562
        %v1564 = vrot.slane %v1556, %v1563
        %v1566 = vunpack.c.l.s4 1934713408
        %v1567 = vunpack.c.0.s8 %v1566
        %v1568 = vlaneseq
        %v1569 = vshrl.u32 %v1568, 7
        %v1570 = vsub.s32 %v1567, %v1569
        %v1571 = vrot.slane %v1557, %v1570
        %v1572 = vcombine.low %v1548, %v1564
        %v1573 = vcombine.high %v1548, %v1564
        %v1574 = vcombine.low %v1555, %v1571
        %v1575 = vcombine.high %v1555, %v1571
        %v1576 = vcombine.low %v1344, %v1351
        %v1578 = vunpack.c.l.s4 1983009808
        %v1579 = vunpack.c.0.s8 %v1578
        %v1580 = vlaneseq
        %v1581 = vshrl.u32 %v1580, 7
        %v1582 = vsub.s32 %v1579, %v1581
        %v1583 = vrot.slane %v1576, %v1582
        %v1584 = vcombine.low %v1368, %v1369
        %v1586 = vunpack.c.l.s4 1983009808
        %v1587 = vunpack.c.0.s8 %v1586
        %v1588 = vlaneseq
        %v1589 = vshrl.u32 %v1588, 7
        %v1590 = vsub.s32 %v1587, %v1589
        %v1591 = vrot.slane %v1584, %v1590
        %v1592 = vcombine.low %v1360, %v1367
        %v1594 = vunpack.c.l.s4 1983009808
        %v1595 = vunpack.c.0.s8 %v1594
        %v1596 = vlaneseq
        %v1597 = vshrl.u32 %v1596, 7
        %v1598 = vsub.s32 %v1595, %v1597
        %v1599 = vrot.slane %v1592, %v1598
        %v1600 = vcombine.low %v1370, %v1371
        %v1602 = vunpack.c.l.s4 1983009808
        %v1603 = vunpack.c.0.s8 %v1602
        %v1604 = vlaneseq
        %v1605 = vshrl.u32 %v1604, 7
        %v1606 = vsub.s32 %v1603, %v1605
        %v1607 = vrot.slane %v1600, %v1606
        %v1608 = vcombine.low %v1583, %v1591
        %v1609 = vcombine.high %v1583, %v1591
        %v1611 = vunpack.c.l.s4 1934713408
        %v1612 = vunpack.c.0.s8 %v1611
        %v1613 = vlaneseq
        %v1614 = vshrl.u32 %v1613, 7
        %v1615 = vsub.s32 %v1612, %v1614
        %v1616 = vrot.slane %v1608, %v1615
        %v1618 = vunpack.c.l.s4 1934713408
        %v1619 = vunpack.c.0.s8 %v1618
        %v1620 = vlaneseq
        %v1621 = vshrl.u32 %v1620, 7
        %v1622 = vsub.s32 %v1619, %v1621
        %v1623 = vrot.slane %v1609, %v1622
        %v1624 = vcombine.low %v1599, %v1607
        %v1625 = vcombine.high %v1599, %v1607
        %v1627 = vunpack.c.l.s4 1934713408
        %v1628 = vunpack.c.0.s8 %v1627
        %v1629 = vlaneseq
        %v1630 = vshrl.u32 %v1629, 7
        %v1631 = vsub.s32 %v1628, %v1630
        %v1632 = vrot.slane %v1624, %v1631
        %v1634 = vunpack.c.l.s4 1934713408
        %v1635 = vunpack.c.0.s8 %v1634
        %v1636 = vlaneseq
        %v1637 = vshrl.u32 %v1636, 7
        %v1638 = vsub.s32 %v1635, %v1637
        %v1639 = vrot.slane %v1625, %v1638
        %v1640 = vcombine.low %v1616, %v1632
        %v1641 = vcombine.high %v1616, %v1632
        %v1642 = vcombine.low %v1623, %v1639
        %v1643 = vcombine.high %v1623, %v1639
        %v1646 = vpack.i.b16 %v1504, %v1436
        %v1647 = vshrl.u32 %v1436, 16
        %v1648 = vshrl.u32 %v1504, 16
        %v1649 = vpack.i.b16 %v1648, %v1647
        %v1652 = vpack.i.b16 %v1505, %v1437
        %v1653 = vshrl.u32 %v1437, 16
        %v1654 = vshrl.u32 %v1505, 16
        %v1655 = vpack.i.b16 %v1654, %v1653
        %v1658 = vpack.i.b16 %v1506, %v1438
        %v1659 = vshrl.u32 %v1438, 16
        %v1660 = vshrl.u32 %v1506, 16
        %v1661 = vpack.i.b16 %v1660, %v1659
        %v1664 = vpack.i.b16 %v1507, %v1439
        %v1665 = vshrl.u32 %v1439, 16
        %v1666 = vshrl.u32 %v1507, 16
        %v1667 = vpack.i.b16 %v1666, %v1665
        %v1670 = vpack.i.b16 %v1640, %v1572
        %v1671 = vshrl.u32 %v1572, 16
        %v1672 = vshrl.u32 %v1640, 16
        %v1673 = vpack.i.b16 %v1672, %v1671
        %v1676 = vpack.i.b16 %v1641, %v1573
        %v1677 = vshrl.u32 %v1573, 16
        %v1678 = vshrl.u32 %v1641, 16
        %v1679 = vpack.i.b16 %v1678, %v1677
        %v1682 = vpack.i.b16 %v1642, %v1574
        %v1683 = vshrl.u32 %v1574, 16
        %v1684 = vshrl.u32 %v1642, 16
        %v1685 = vpack.i.b16 %v1684, %v1683
        %v1688 = vpack.i.b16 %v1643, %v1575
        %v1689 = vshrl.u32 %v1575, 16
        %v1690 = vshrl.u32 %v1643, 16
        %v1691 = vpack.i.b16 %v1690, %v1689
        %1694 = vrot.lane.b32.xlu0 %v998, 96
        %v1695 = vpop.permute.xlu0 %1694
        %1696 = vrot.lane.b32.xlu0 %v1004, 96
        %v1697 = vpop.permute.xlu0 %1696
        %1698 = vrot.lane.b32.xlu0 %v998, 64
        %v1699 = vpop.permute.xlu0 %1698
        %1700 = vrot.lane.b32.xlu0 %v1004, 64
        %v1701 = vpop.permute.xlu0 %1700
        %1702 = vrot.lane.b32.xlu0 %v998, 32
        %v1703 = vpop.permute.xlu0 %1702
        %1704 = vrot.lane.b32.xlu0 %v1004, 32
        %v1705 = vpop.permute.xlu0 %1704
        %1708 = vrot.lane.b32.xlu0 %v999, 96
        %v1709 = vpop.permute.xlu0 %1708
        %1710 = vrot.lane.b32.xlu0 %v1005, 96
        %v1711 = vpop.permute.xlu0 %1710
        %1712 = vrot.lane.b32.xlu0 %v999, 64
        %v1713 = vpop.permute.xlu0 %1712
        %1714 = vrot.lane.b32.xlu0 %v1005, 64
        %v1715 = vpop.permute.xlu0 %1714
        %1716 = vrot.lane.b32.xlu0 %v999, 32
        %v1717 = vpop.permute.xlu0 %1716
        %1718 = vrot.lane.b32.xlu0 %v1005, 32
        %v1719 = vpop.permute.xlu0 %1718
        %v1722 = vpack.i.b16 %v1695, %v998
        %v1724 = vshrl.u32 %v998, 16
        %v1725 = vshrl.u32 %v1695, 16
        %v1726 = vpack.i.b16 %v1725, %v1724
        %v1730 = vpack.i.b16 %v1703, %v1699
        %v1732 = vshrl.u32 %v1699, 16
        %v1733 = vshrl.u32 %v1703, 16
        %v1734 = vpack.i.b16 %v1733, %v1732
        %v1738 = vpack.i.b16 %v1709, %v999
        %v1740 = vshrl.u32 %v999, 16
        %v1741 = vshrl.u32 %v1709, 16
        %v1742 = vpack.i.b16 %v1741, %v1740
        %v1746 = vpack.i.b16 %v1717, %v1713
        %v1748 = vshrl.u32 %v1713, 16
        %v1749 = vshrl.u32 %v1717, 16
        %v1750 = vpack.i.b16 %v1749, %v1748
        %v1754 = vpack.i.b16 %v1697, %v1004
        %v1756 = vshrl.u32 %v1004, 16
        %v1757 = vshrl.u32 %v1697, 16
        %v1758 = vpack.i.b16 %v1757, %v1756
        %v1762 = vpack.i.b16 %v1705, %v1701
        %v1764 = vshrl.u32 %v1701, 16
        %v1765 = vshrl.u32 %v1705, 16
        %v1766 = vpack.i.b16 %v1765, %v1764
        %v1770 = vpack.i.b16 %v1711, %v1005
        %v1772 = vshrl.u32 %v1005, 16
        %v1773 = vshrl.u32 %v1711, 16
        %v1774 = vpack.i.b16 %v1773, %v1772
        %v1778 = vpack.i.b16 %v1719, %v1715
        %v1780 = vshrl.u32 %v1715, 16
        %v1781 = vshrl.u32 %v1719, 16
        %v1782 = vpack.i.b16 %v1781, %v1780
        %v1784 = vcombine.low %v1722, %v1738
        %v1785 = vcombine.high %v1722, %v1738
        %v1787 = vunpack.c.l.s4 1983009808
        %v1788 = vunpack.c.0.s8 %v1787
        %v1789 = vlaneseq
        %v1790 = vshrl.u32 %v1789, 7
        %v1791 = vsub.s32 %v1788, %v1790
        %v1792 = vrot.slane %v1784, %v1791
        %v1794 = vunpack.c.l.s4 1983009808
        %v1795 = vunpack.c.0.s8 %v1794
        %v1796 = vlaneseq
        %v1797 = vshrl.u32 %v1796, 7
        %v1798 = vsub.s32 %v1795, %v1797
        %v1799 = vrot.slane %v1785, %v1798
        %v1800 = vcombine.low %v1730, %v1746
        %v1801 = vcombine.high %v1730, %v1746
        %v1803 = vunpack.c.l.s4 1983009808
        %v1804 = vunpack.c.0.s8 %v1803
        %v1805 = vlaneseq
        %v1806 = vshrl.u32 %v1805, 7
        %v1807 = vsub.s32 %v1804, %v1806
        %v1808 = vrot.slane %v1800, %v1807
        %v1810 = vunpack.c.l.s4 1983009808
        %v1811 = vunpack.c.0.s8 %v1810
        %v1812 = vlaneseq
        %v1813 = vshrl.u32 %v1812, 7
        %v1814 = vsub.s32 %v1811, %v1813
        %v1815 = vrot.slane %v1801, %v1814
        %v1816 = vcombine.low %v1792, %v1808
        %v1817 = vcombine.high %v1792, %v1808
        %v1819 = vunpack.c.l.s4 1934713408
        %v1820 = vunpack.c.0.s8 %v1819
        %v1821 = vlaneseq
        %v1822 = vshrl.u32 %v1821, 7
        %v1823 = vsub.s32 %v1820, %v1822
        %v1824 = vrot.slane %v1816, %v1823
        %v1826 = vunpack.c.l.s4 1934713408
        %v1827 = vunpack.c.0.s8 %v1826
        %v1828 = vlaneseq
        %v1829 = vshrl.u32 %v1828, 7
        %v1830 = vsub.s32 %v1827, %v1829
        %v1831 = vrot.slane %v1817, %v1830
        %v1832 = vcombine.low %v1799, %v1815
        %v1833 = vcombine.high %v1799, %v1815
        %v1835 = vunpack.c.l.s4 1934713408
        %v1836 = vunpack.c.0.s8 %v1835
        %v1837 = vlaneseq
        %v1838 = vshrl.u32 %v1837, 7
        %v1839 = vsub.s32 %v1836, %v1838
        %v1840 = vrot.slane %v1832, %v1839
        %v1842 = vunpack.c.l.s4 1934713408
        %v1843 = vunpack.c.0.s8 %v1842
        %v1844 = vlaneseq
        %v1845 = vshrl.u32 %v1844, 7
        %v1846 = vsub.s32 %v1843, %v1845
        %v1847 = vrot.slane %v1833, %v1846
        %v1848 = vcombine.high %v1824, 0
        %v1849 = vcombine.high %v1831, 0
        %v1850 = vcombine.high %v1840, 0
        %v1851 = vcombine.high %v1847, 0
        %v1852 = vcombine.low %v1726, %v1742
        %v1853 = vcombine.high %v1726, %v1742
        %v1855 = vunpack.c.l.s4 1983009808
        %v1856 = vunpack.c.0.s8 %v1855
        %v1857 = vlaneseq
        %v1858 = vshrl.u32 %v1857, 7
        %v1859 = vsub.s32 %v1856, %v1858
        %v1860 = vrot.slane %v1852, %v1859
        %v1862 = vunpack.c.l.s4 1983009808
        %v1863 = vunpack.c.0.s8 %v1862
        %v1864 = vlaneseq
        %v1865 = vshrl.u32 %v1864, 7
        %v1866 = vsub.s32 %v1863, %v1865
        %v1867 = vrot.slane %v1853, %v1866
        %v1868 = vcombine.low %v1734, %v1750
        %v1869 = vcombine.high %v1734, %v1750
        %v1871 = vunpack.c.l.s4 1983009808
        %v1872 = vunpack.c.0.s8 %v1871
        %v1873 = vlaneseq
        %v1874 = vshrl.u32 %v1873, 7
        %v1875 = vsub.s32 %v1872, %v1874
        %v1876 = vrot.slane %v1868, %v1875
        %v1878 = vunpack.c.l.s4 1983009808
        %v1879 = vunpack.c.0.s8 %v1878
        %v1880 = vlaneseq
        %v1881 = vshrl.u32 %v1880, 7
        %v1882 = vsub.s32 %v1879, %v1881
        %v1883 = vrot.slane %v1869, %v1882
        %v1884 = vcombine.low %v1860, %v1876
        %v1885 = vcombine.high %v1860, %v1876
        %v1887 = vunpack.c.l.s4 1934713408
        %v1888 = vunpack.c.0.s8 %v1887
        %v1889 = vlaneseq
        %v1890 = vshrl.u32 %v1889, 7
        %v1891 = vsub.s32 %v1888, %v1890
        %v1892 = vrot.slane %v1884, %v1891
        %v1894 = vunpack.c.l.s4 1934713408
        %v1895 = vunpack.c.0.s8 %v1894
        %v1896 = vlaneseq
        %v1897 = vshrl.u32 %v1896, 7
        %v1898 = vsub.s32 %v1895, %v1897
        %v1899 = vrot.slane %v1885, %v1898
        %v1900 = vcombine.low %v1867, %v1883
        %v1901 = vcombine.high %v1867, %v1883
        %v1903 = vunpack.c.l.s4 1934713408
        %v1904 = vunpack.c.0.s8 %v1903
        %v1905 = vlaneseq
        %v1906 = vshrl.u32 %v1905, 7
        %v1907 = vsub.s32 %v1904, %v1906
        %v1908 = vrot.slane %v1900, %v1907
        %v1910 = vunpack.c.l.s4 1934713408
        %v1911 = vunpack.c.0.s8 %v1910
        %v1912 = vlaneseq
        %v1913 = vshrl.u32 %v1912, 7
        %v1914 = vsub.s32 %v1911, %v1913
        %v1915 = vrot.slane %v1901, %v1914
        %v1916 = vcombine.high %v1892, 0
        %v1917 = vcombine.high %v1899, 0
        %v1918 = vcombine.high %v1908, 0
        %v1919 = vcombine.high %v1915, 0
        %v1920 = vcombine.low %v1754, %v1770
        %v1921 = vcombine.high %v1754, %v1770
        %v1923 = vunpack.c.l.s4 1983009808
        %v1924 = vunpack.c.0.s8 %v1923
        %v1925 = vlaneseq
        %v1926 = vshrl.u32 %v1925, 7
        %v1927 = vsub.s32 %v1924, %v1926
        %v1928 = vrot.slane %v1920, %v1927
        %v1930 = vunpack.c.l.s4 1983009808
        %v1931 = vunpack.c.0.s8 %v1930
        %v1932 = vlaneseq
        %v1933 = vshrl.u32 %v1932, 7
        %v1934 = vsub.s32 %v1931, %v1933
        %v1935 = vrot.slane %v1921, %v1934
        %v1936 = vcombine.low %v1762, %v1778
        %v1937 = vcombine.high %v1762, %v1778
        %v1939 = vunpack.c.l.s4 1983009808
        %v1940 = vunpack.c.0.s8 %v1939
        %v1941 = vlaneseq
        %v1942 = vshrl.u32 %v1941, 7
        %v1943 = vsub.s32 %v1940, %v1942
        %v1944 = vrot.slane %v1936, %v1943
        %v1946 = vunpack.c.l.s4 1983009808
        %v1947 = vunpack.c.0.s8 %v1946
        %v1948 = vlaneseq
        %v1949 = vshrl.u32 %v1948, 7
        %v1950 = vsub.s32 %v1947, %v1949
        %v1951 = vrot.slane %v1937, %v1950
        %v1952 = vcombine.low %v1928, %v1944
        %v1953 = vcombine.high %v1928, %v1944
        %v1955 = vunpack.c.l.s4 1934713408
        %v1956 = vunpack.c.0.s8 %v1955
        %v1957 = vlaneseq
        %v1958 = vshrl.u32 %v1957, 7
        %v1959 = vsub.s32 %v1956, %v1958
        %v1960 = vrot.slane %v1952, %v1959
        %v1962 = vunpack.c.l.s4 1934713408
        %v1963 = vunpack.c.0.s8 %v1962
        %v1964 = vlaneseq
        %v1965 = vshrl.u32 %v1964, 7
        %v1966 = vsub.s32 %v1963, %v1965
        %v1967 = vrot.slane %v1953, %v1966
        %v1968 = vcombine.low %v1935, %v1951
        %v1969 = vcombine.high %v1935, %v1951
        %v1971 = vunpack.c.l.s4 1934713408
        %v1972 = vunpack.c.0.s8 %v1971
        %v1973 = vlaneseq
        %v1974 = vshrl.u32 %v1973, 7
        %v1975 = vsub.s32 %v1972, %v1974
        %v1976 = vrot.slane %v1968, %v1975
        %v1978 = vunpack.c.l.s4 1934713408
        %v1979 = vunpack.c.0.s8 %v1978
        %v1980 = vlaneseq
        %v1981 = vshrl.u32 %v1980, 7
        %v1982 = vsub.s32 %v1979, %v1981
        %v1983 = vrot.slane %v1969, %v1982
        %v1984 = vcombine.high %v1960, 0
        %v1985 = vcombine.high %v1967, 0
        %v1986 = vcombine.high %v1976, 0
        %v1987 = vcombine.high %v1983, 0
        %v1988 = vcombine.low %v1758, %v1774
        %v1989 = vcombine.high %v1758, %v1774
        %v1991 = vunpack.c.l.s4 1983009808
        %v1992 = vunpack.c.0.s8 %v1991
        %v1993 = vlaneseq
        %v1994 = vshrl.u32 %v1993, 7
        %v1995 = vsub.s32 %v1992, %v1994
        %v1996 = vrot.slane %v1988, %v1995
        %v1998 = vunpack.c.l.s4 1983009808
        %v1999 = vunpack.c.0.s8 %v1998
        %v2000 = vlaneseq
        %v2001 = vshrl.u32 %v2000, 7
        %v2002 = vsub.s32 %v1999, %v2001
        %v2003 = vrot.slane %v1989, %v2002
        %v2004 = vcombine.low %v1766, %v1782
        %v2005 = vcombine.high %v1766, %v1782
        %v2007 = vunpack.c.l.s4 1983009808
        %v2008 = vunpack.c.0.s8 %v2007
        %v2009 = vlaneseq
        %v2010 = vshrl.u32 %v2009, 7
        %v2011 = vsub.s32 %v2008, %v2010
        %v2012 = vrot.slane %v2004, %v2011
        %v2014 = vunpack.c.l.s4 1983009808
        %v2015 = vunpack.c.0.s8 %v2014
        %v2016 = vlaneseq
        %v2017 = vshrl.u32 %v2016, 7
        %v2018 = vsub.s32 %v2015, %v2017
        %v2019 = vrot.slane %v2005, %v2018
        %v2020 = vcombine.low %v1996, %v2012
        %v2021 = vcombine.high %v1996, %v2012
        %v2023 = vunpack.c.l.s4 1934713408
        %v2024 = vunpack.c.0.s8 %v2023
        %v2025 = vlaneseq
        %v2026 = vshrl.u32 %v2025, 7
        %v2027 = vsub.s32 %v2024, %v2026
        %v2028 = vrot.slane %v2020, %v2027
        %v2030 = vunpack.c.l.s4 1934713408
        %v2031 = vunpack.c.0.s8 %v2030
        %v2032 = vlaneseq
        %v2033 = vshrl.u32 %v2032, 7
        %v2034 = vsub.s32 %v2031, %v2033
        %v2035 = vrot.slane %v2021, %v2034
        %v2036 = vcombine.low %v2003, %v2019
        %v2037 = vcombine.high %v2003, %v2019
        %v2039 = vunpack.c.l.s4 1934713408
        %v2040 = vunpack.c.0.s8 %v2039
        %v2041 = vlaneseq
        %v2042 = vshrl.u32 %v2041, 7
        %v2043 = vsub.s32 %v2040, %v2042
        %v2044 = vrot.slane %v2036, %v2043
        %v2046 = vunpack.c.l.s4 1934713408
        %v2047 = vunpack.c.0.s8 %v2046
        %v2048 = vlaneseq
        %v2049 = vshrl.u32 %v2048, 7
        %v2050 = vsub.s32 %v2047, %v2049
        %v2051 = vrot.slane %v2037, %v2050
        %v2052 = vcombine.high %v2028, 0
        %v2053 = vcombine.high %v2035, 0
        %v2054 = vcombine.high %v2044, 0
        %v2055 = vcombine.high %v2051, 0
        %v2056 = vcombine.low %v1824, %v1831
        %v2058 = vunpack.c.l.s4 1983009808
        %v2059 = vunpack.c.0.s8 %v2058
        %v2060 = vlaneseq
        %v2061 = vshrl.u32 %v2060, 7
        %v2062 = vsub.s32 %v2059, %v2061
        %v2063 = vrot.slane %v2056, %v2062
        %v2064 = vcombine.low %v1848, %v1849
        %v2066 = vunpack.c.l.s4 1983009808
        %v2067 = vunpack.c.0.s8 %v2066
        %v2068 = vlaneseq
        %v2069 = vshrl.u32 %v2068, 7
        %v2070 = vsub.s32 %v2067, %v2069
        %v2071 = vrot.slane %v2064, %v2070
        %v2072 = vcombine.low %v1840, %v1847
        %v2074 = vunpack.c.l.s4 1983009808
        %v2075 = vunpack.c.0.s8 %v2074
        %v2076 = vlaneseq
        %v2077 = vshrl.u32 %v2076, 7
        %v2078 = vsub.s32 %v2075, %v2077
        %v2079 = vrot.slane %v2072, %v2078
        %v2080 = vcombine.low %v1850, %v1851
        %v2082 = vunpack.c.l.s4 1983009808
        %v2083 = vunpack.c.0.s8 %v2082
        %v2084 = vlaneseq
        %v2085 = vshrl.u32 %v2084, 7
        %v2086 = vsub.s32 %v2083, %v2085
        %v2087 = vrot.slane %v2080, %v2086
        %v2088 = vcombine.low %v2063, %v2071
        %v2089 = vcombine.high %v2063, %v2071
        %v2091 = vunpack.c.l.s4 1934713408
        %v2092 = vunpack.c.0.s8 %v2091
        %v2093 = vlaneseq
        %v2094 = vshrl.u32 %v2093, 7
        %v2095 = vsub.s32 %v2092, %v2094
        %v2096 = vrot.slane %v2088, %v2095
        %v2098 = vunpack.c.l.s4 1934713408
        %v2099 = vunpack.c.0.s8 %v2098
        %v2100 = vlaneseq
        %v2101 = vshrl.u32 %v2100, 7
        %v2102 = vsub.s32 %v2099, %v2101
        %v2103 = vrot.slane %v2089, %v2102
        %v2104 = vcombine.low %v2079, %v2087
        %v2105 = vcombine.high %v2079, %v2087
        %v2107 = vunpack.c.l.s4 1934713408
        %v2108 = vunpack.c.0.s8 %v2107
        %v2109 = vlaneseq
        %v2110 = vshrl.u32 %v2109, 7
        %v2111 = vsub.s32 %v2108, %v2110
        %v2112 = vrot.slane %v2104, %v2111
        %v2114 = vunpack.c.l.s4 1934713408
        %v2115 = vunpack.c.0.s8 %v2114
        %v2116 = vlaneseq
        %v2117 = vshrl.u32 %v2116, 7
        %v2118 = vsub.s32 %v2115, %v2117
        %v2119 = vrot.slane %v2105, %v2118
        %v2120 = vcombine.low %v2096, %v2112
        %v2121 = vcombine.high %v2096, %v2112
        %v2122 = vcombine.low %v2103, %v2119
        %v2123 = vcombine.high %v2103, %v2119
        %v2124 = vcombine.low %v1892, %v1899
        %v2126 = vunpack.c.l.s4 1983009808
        %v2127 = vunpack.c.0.s8 %v2126
        %v2128 = vlaneseq
        %v2129 = vshrl.u32 %v2128, 7
        %v2130 = vsub.s32 %v2127, %v2129
        %v2131 = vrot.slane %v2124, %v2130
        %v2132 = vcombine.low %v1916, %v1917
        %v2134 = vunpack.c.l.s4 1983009808
        %v2135 = vunpack.c.0.s8 %v2134
        %v2136 = vlaneseq
        %v2137 = vshrl.u32 %v2136, 7
        %v2138 = vsub.s32 %v2135, %v2137
        %v2139 = vrot.slane %v2132, %v2138
        %v2140 = vcombine.low %v1908, %v1915
        %v2142 = vunpack.c.l.s4 1983009808
        %v2143 = vunpack.c.0.s8 %v2142
        %v2144 = vlaneseq
        %v2145 = vshrl.u32 %v2144, 7
        %v2146 = vsub.s32 %v2143, %v2145
        %v2147 = vrot.slane %v2140, %v2146
        %v2148 = vcombine.low %v1918, %v1919
        %v2150 = vunpack.c.l.s4 1983009808
        %v2151 = vunpack.c.0.s8 %v2150
        %v2152 = vlaneseq
        %v2153 = vshrl.u32 %v2152, 7
        %v2154 = vsub.s32 %v2151, %v2153
        %v2155 = vrot.slane %v2148, %v2154
        %v2156 = vcombine.low %v2131, %v2139
        %v2157 = vcombine.high %v2131, %v2139
        %v2159 = vunpack.c.l.s4 1934713408
        %v2160 = vunpack.c.0.s8 %v2159
        %v2161 = vlaneseq
        %v2162 = vshrl.u32 %v2161, 7
        %v2163 = vsub.s32 %v2160, %v2162
        %v2164 = vrot.slane %v2156, %v2163
        %v2166 = vunpack.c.l.s4 1934713408
        %v2167 = vunpack.c.0.s8 %v2166
        %v2168 = vlaneseq
        %v2169 = vshrl.u32 %v2168, 7
        %v2170 = vsub.s32 %v2167, %v2169
        %v2171 = vrot.slane %v2157, %v2170
        %v2172 = vcombine.low %v2147, %v2155
        %v2173 = vcombine.high %v2147, %v2155
        %v2175 = vunpack.c.l.s4 1934713408
        %v2176 = vunpack.c.0.s8 %v2175
        %v2177 = vlaneseq
        %v2178 = vshrl.u32 %v2177, 7
        %v2179 = vsub.s32 %v2176, %v2178
        %v2180 = vrot.slane %v2172, %v2179
        %v2182 = vunpack.c.l.s4 1934713408
        %v2183 = vunpack.c.0.s8 %v2182
        %v2184 = vlaneseq
        %v2185 = vshrl.u32 %v2184, 7
        %v2186 = vsub.s32 %v2183, %v2185
        %v2187 = vrot.slane %v2173, %v2186
        %v2188 = vcombine.low %v2164, %v2180
        %v2189 = vcombine.high %v2164, %v2180
        %v2190 = vcombine.low %v2171, %v2187
        %v2191 = vcombine.high %v2171, %v2187
        %v2192 = vcombine.low %v1960, %v1967
        %v2194 = vunpack.c.l.s4 1983009808
        %v2195 = vunpack.c.0.s8 %v2194
        %v2196 = vlaneseq
        %v2197 = vshrl.u32 %v2196, 7
        %v2198 = vsub.s32 %v2195, %v2197
        %v2199 = vrot.slane %v2192, %v2198
        %v2200 = vcombine.low %v1984, %v1985
        %v2202 = vunpack.c.l.s4 1983009808
        %v2203 = vunpack.c.0.s8 %v2202
        %v2204 = vlaneseq
        %v2205 = vshrl.u32 %v2204, 7
        %v2206 = vsub.s32 %v2203, %v2205
        %v2207 = vrot.slane %v2200, %v2206
        %v2208 = vcombine.low %v1976, %v1983
        %v2210 = vunpack.c.l.s4 1983009808
        %v2211 = vunpack.c.0.s8 %v2210
        %v2212 = vlaneseq
        %v2213 = vshrl.u32 %v2212, 7
        %v2214 = vsub.s32 %v2211, %v2213
        %v2215 = vrot.slane %v2208, %v2214
        %v2216 = vcombine.low %v1986, %v1987
        %v2218 = vunpack.c.l.s4 1983009808
        %v2219 = vunpack.c.0.s8 %v2218
        %v2220 = vlaneseq
        %v2221 = vshrl.u32 %v2220, 7
        %v2222 = vsub.s32 %v2219, %v2221
        %v2223 = vrot.slane %v2216, %v2222
        %v2224 = vcombine.low %v2199, %v2207
        %v2225 = vcombine.high %v2199, %v2207
        %v2227 = vunpack.c.l.s4 1934713408
        %v2228 = vunpack.c.0.s8 %v2227
        %v2229 = vlaneseq
        %v2230 = vshrl.u32 %v2229, 7
        %v2231 = vsub.s32 %v2228, %v2230
        %v2232 = vrot.slane %v2224, %v2231
        %v2234 = vunpack.c.l.s4 1934713408
        %v2235 = vunpack.c.0.s8 %v2234
        %v2236 = vlaneseq
        %v2237 = vshrl.u32 %v2236, 7
        %v2238 = vsub.s32 %v2235, %v2237
        %v2239 = vrot.slane %v2225, %v2238
        %v2240 = vcombine.low %v2215, %v2223
        %v2241 = vcombine.high %v2215, %v2223
        %v2243 = vunpack.c.l.s4 1934713408
        %v2244 = vunpack.c.0.s8 %v2243
        %v2245 = vlaneseq
        %v2246 = vshrl.u32 %v2245, 7
        %v2247 = vsub.s32 %v2244, %v2246
        %v2248 = vrot.slane %v2240, %v2247
        %v2250 = vunpack.c.l.s4 1934713408
        %v2251 = vunpack.c.0.s8 %v2250
        %v2252 = vlaneseq
        %v2253 = vshrl.u32 %v2252, 7
        %v2254 = vsub.s32 %v2251, %v2253
        %v2255 = vrot.slane %v2241, %v2254
        %v2256 = vcombine.low %v2232, %v2248
        %v2257 = vcombine.high %v2232, %v2248
        %v2258 = vcombine.low %v2239, %v2255
        %v2259 = vcombine.high %v2239, %v2255
        %v2260 = vcombine.low %v2028, %v2035
        %v2262 = vunpack.c.l.s4 1983009808
        %v2263 = vunpack.c.0.s8 %v2262
        %v2264 = vlaneseq
        %v2265 = vshrl.u32 %v2264, 7
        %v2266 = vsub.s32 %v2263, %v2265
        %v2267 = vrot.slane %v2260, %v2266
        %v2268 = vcombine.low %v2052, %v2053
        %v2270 = vunpack.c.l.s4 1983009808
        %v2271 = vunpack.c.0.s8 %v2270
        %v2272 = vlaneseq
        %v2273 = vshrl.u32 %v2272, 7
        %v2274 = vsub.s32 %v2271, %v2273
        %v2275 = vrot.slane %v2268, %v2274
        %v2276 = vcombine.low %v2044, %v2051
        %v2278 = vunpack.c.l.s4 1983009808
        %v2279 = vunpack.c.0.s8 %v2278
        %v2280 = vlaneseq
        %v2281 = vshrl.u32 %v2280, 7
        %v2282 = vsub.s32 %v2279, %v2281
        %v2283 = vrot.slane %v2276, %v2282
        %v2284 = vcombine.low %v2054, %v2055
        %v2286 = vunpack.c.l.s4 1983009808
        %v2287 = vunpack.c.0.s8 %v2286
        %v2288 = vlaneseq
        %v2289 = vshrl.u32 %v2288, 7
        %v2290 = vsub.s32 %v2287, %v2289
        %v2291 = vrot.slane %v2284, %v2290
        %v2292 = vcombine.low %v2267, %v2275
        %v2293 = vcombine.high %v2267, %v2275
        %v2295 = vunpack.c.l.s4 1934713408
        %v2296 = vunpack.c.0.s8 %v2295
        %v2297 = vlaneseq
        %v2298 = vshrl.u32 %v2297, 7
        %v2299 = vsub.s32 %v2296, %v2298
        %v2300 = vrot.slane %v2292, %v2299
        %v2302 = vunpack.c.l.s4 1934713408
        %v2303 = vunpack.c.0.s8 %v2302
        %v2304 = vlaneseq
        %v2305 = vshrl.u32 %v2304, 7
        %v2306 = vsub.s32 %v2303, %v2305
        %v2307 = vrot.slane %v2293, %v2306
        %v2308 = vcombine.low %v2283, %v2291
        %v2309 = vcombine.high %v2283, %v2291
        %v2311 = vunpack.c.l.s4 1934713408
        %v2312 = vunpack.c.0.s8 %v2311
        %v2313 = vlaneseq
        %v2314 = vshrl.u32 %v2313, 7
        %v2315 = vsub.s32 %v2312, %v2314
        %v2316 = vrot.slane %v2308, %v2315
        %v2318 = vunpack.c.l.s4 1934713408
        %v2319 = vunpack.c.0.s8 %v2318
        %v2320 = vlaneseq
        %v2321 = vshrl.u32 %v2320, 7
        %v2322 = vsub.s32 %v2319, %v2321
        %v2323 = vrot.slane %v2309, %v2322
        %v2324 = vcombine.low %v2300, %v2316
        %v2325 = vcombine.high %v2300, %v2316
        %v2326 = vcombine.low %v2307, %v2323
        %v2327 = vcombine.high %v2307, %v2323
        %v2330 = vpack.i.b16 %v2188, %v2120
        %v2331 = vshrl.u32 %v2120, 16
        %v2332 = vshrl.u32 %v2188, 16
        %v2333 = vpack.i.b16 %v2332, %v2331
        %v2336 = vpack.i.b16 %v2189, %v2121
        %v2337 = vshrl.u32 %v2121, 16
        %v2338 = vshrl.u32 %v2189, 16
        %v2339 = vpack.i.b16 %v2338, %v2337
        %v2342 = vpack.i.b16 %v2190, %v2122
        %v2343 = vshrl.u32 %v2122, 16
        %v2344 = vshrl.u32 %v2190, 16
        %v2345 = vpack.i.b16 %v2344, %v2343
        %v2348 = vpack.i.b16 %v2191, %v2123
        %v2349 = vshrl.u32 %v2123, 16
        %v2350 = vshrl.u32 %v2191, 16
        %v2351 = vpack.i.b16 %v2350, %v2349
        %v2354 = vpack.i.b16 %v2324, %v2256
        %v2355 = vshrl.u32 %v2256, 16
        %v2356 = vshrl.u32 %v2324, 16
        %v2357 = vpack.i.b16 %v2356, %v2355
        %v2360 = vpack.i.b16 %v2325, %v2257
        %v2361 = vshrl.u32 %v2257, 16
        %v2362 = vshrl.u32 %v2325, 16
        %v2363 = vpack.i.b16 %v2362, %v2361
        %v2366 = vpack.i.b16 %v2326, %v2258
        %v2367 = vshrl.u32 %v2258, 16
        %v2368 = vshrl.u32 %v2326, 16
        %v2369 = vpack.i.b16 %v2368, %v2367
        %v2372 = vpack.i.b16 %v2327, %v2259
        %v2373 = vshrl.u32 %v2259, 16
        %v2374 = vshrl.u32 %v2327, 16
        %v2375 = vpack.i.b16 %v2374, %v2373
        %2378 = vrot.lane.b32.xlu0 %v1000, 96
        %v2379 = vpop.permute.xlu0 %2378
        %2380 = vrot.lane.b32.xlu0 %v1006, 96
        %v2381 = vpop.permute.xlu0 %2380
        %2382 = vrot.lane.b32.xlu0 %v1000, 64
        %v2383 = vpop.permute.xlu0 %2382
        %2384 = vrot.lane.b32.xlu0 %v1006, 64
        %v2385 = vpop.permute.xlu0 %2384
        %2386 = vrot.lane.b32.xlu0 %v1000, 32
        %v2387 = vpop.permute.xlu0 %2386
        %2388 = vrot.lane.b32.xlu0 %v1006, 32
        %v2389 = vpop.permute.xlu0 %2388
        %2392 = vrot.lane.b32.xlu0 %v1001, 96
        %v2393 = vpop.permute.xlu0 %2392
        %2394 = vrot.lane.b32.xlu0 %v1007, 96
        %v2395 = vpop.permute.xlu0 %2394
        %2396 = vrot.lane.b32.xlu0 %v1001, 64
        %v2397 = vpop.permute.xlu0 %2396
        %2398 = vrot.lane.b32.xlu0 %v1007, 64
        %v2399 = vpop.permute.xlu0 %2398
        %2400 = vrot.lane.b32.xlu0 %v1001, 32
        %v2401 = vpop.permute.xlu0 %2400
        %2402 = vrot.lane.b32.xlu0 %v1007, 32
        %v2403 = vpop.permute.xlu0 %2402
        %v2406 = vpack.i.b16 %v2379, %v1000
        %v2408 = vshrl.u32 %v1000, 16
        %v2409 = vshrl.u32 %v2379, 16
        %v2410 = vpack.i.b16 %v2409, %v2408
        %v2414 = vpack.i.b16 %v2387, %v2383
        %v2416 = vshrl.u32 %v2383, 16
        %v2417 = vshrl.u32 %v2387, 16
        %v2418 = vpack.i.b16 %v2417, %v2416
        %v2422 = vpack.i.b16 %v2393, %v1001
        %v2424 = vshrl.u32 %v1001, 16
        %v2425 = vshrl.u32 %v2393, 16
        %v2426 = vpack.i.b16 %v2425, %v2424
        %v2430 = vpack.i.b16 %v2401, %v2397
        %v2432 = vshrl.u32 %v2397, 16
        %v2433 = vshrl.u32 %v2401, 16
        %v2434 = vpack.i.b16 %v2433, %v2432
        %v2438 = vpack.i.b16 %v2381, %v1006
        %v2440 = vshrl.u32 %v1006, 16
        %v2441 = vshrl.u32 %v2381, 16
        %v2442 = vpack.i.b16 %v2441, %v2440
        %v2446 = vpack.i.b16 %v2389, %v2385
        %v2448 = vshrl.u32 %v2385, 16
        %v2449 = vshrl.u32 %v2389, 16
        %v2450 = vpack.i.b16 %v2449, %v2448
        %v2454 = vpack.i.b16 %v2395, %v1007
        %v2456 = vshrl.u32 %v1007, 16
        %v2457 = vshrl.u32 %v2395, 16
        %v2458 = vpack.i.b16 %v2457, %v2456
        %v2462 = vpack.i.b16 %v2403, %v2399
        %v2464 = vshrl.u32 %v2399, 16
        %v2465 = vshrl.u32 %v2403, 16
        %v2466 = vpack.i.b16 %v2465, %v2464
        %v2468 = vcombine.low %v2406, %v2422
        %v2469 = vcombine.high %v2406, %v2422
        %v2471 = vunpack.c.l.s4 1983009808
        %v2472 = vunpack.c.0.s8 %v2471
        %v2473 = vlaneseq
        %v2474 = vshrl.u32 %v2473, 7
        %v2475 = vsub.s32 %v2472, %v2474
        %v2476 = vrot.slane %v2468, %v2475
        %v2478 = vunpack.c.l.s4 1983009808
        %v2479 = vunpack.c.0.s8 %v2478
        %v2480 = vlaneseq
        %v2481 = vshrl.u32 %v2480, 7
        %v2482 = vsub.s32 %v2479, %v2481
        %v2483 = vrot.slane %v2469, %v2482
        %v2484 = vcombine.low %v2414, %v2430
        %v2485 = vcombine.high %v2414, %v2430
        %v2487 = vunpack.c.l.s4 1983009808
        %v2488 = vunpack.c.0.s8 %v2487
        %v2489 = vlaneseq
        %v2490 = vshrl.u32 %v2489, 7
        %v2491 = vsub.s32 %v2488, %v2490
        %v2492 = vrot.slane %v2484, %v2491
        %v2494 = vunpack.c.l.s4 1983009808
        %v2495 = vunpack.c.0.s8 %v2494
        %v2496 = vlaneseq
        %v2497 = vshrl.u32 %v2496, 7
        %v2498 = vsub.s32 %v2495, %v2497
        %v2499 = vrot.slane %v2485, %v2498
        %v2500 = vcombine.low %v2476, %v2492
        %v2501 = vcombine.high %v2476, %v2492
        %v2503 = vunpack.c.l.s4 1934713408
        %v2504 = vunpack.c.0.s8 %v2503
        %v2505 = vlaneseq
        %v2506 = vshrl.u32 %v2505, 7
        %v2507 = vsub.s32 %v2504, %v2506
        %v2508 = vrot.slane %v2500, %v2507
        %v2510 = vunpack.c.l.s4 1934713408
        %v2511 = vunpack.c.0.s8 %v2510
        %v2512 = vlaneseq
        %v2513 = vshrl.u32 %v2512, 7
        %v2514 = vsub.s32 %v2511, %v2513
        %v2515 = vrot.slane %v2501, %v2514
        %v2516 = vcombine.low %v2483, %v2499
        %v2517 = vcombine.high %v2483, %v2499
        %v2519 = vunpack.c.l.s4 1934713408
        %v2520 = vunpack.c.0.s8 %v2519
        %v2521 = vlaneseq
        %v2522 = vshrl.u32 %v2521, 7
        %v2523 = vsub.s32 %v2520, %v2522
        %v2524 = vrot.slane %v2516, %v2523
        %v2526 = vunpack.c.l.s4 1934713408
        %v2527 = vunpack.c.0.s8 %v2526
        %v2528 = vlaneseq
        %v2529 = vshrl.u32 %v2528, 7
        %v2530 = vsub.s32 %v2527, %v2529
        %v2531 = vrot.slane %v2517, %v2530
        %v2532 = vcombine.high %v2508, 0
        %v2533 = vcombine.high %v2515, 0
        %v2534 = vcombine.high %v2524, 0
        %v2535 = vcombine.high %v2531, 0
        %v2536 = vcombine.low %v2410, %v2426
        %v2537 = vcombine.high %v2410, %v2426
        %v2539 = vunpack.c.l.s4 1983009808
        %v2540 = vunpack.c.0.s8 %v2539
        %v2541 = vlaneseq
        %v2542 = vshrl.u32 %v2541, 7
        %v2543 = vsub.s32 %v2540, %v2542
        %v2544 = vrot.slane %v2536, %v2543
        %v2546 = vunpack.c.l.s4 1983009808
        %v2547 = vunpack.c.0.s8 %v2546
        %v2548 = vlaneseq
        %v2549 = vshrl.u32 %v2548, 7
        %v2550 = vsub.s32 %v2547, %v2549
        %v2551 = vrot.slane %v2537, %v2550
        %v2552 = vcombine.low %v2418, %v2434
        %v2553 = vcombine.high %v2418, %v2434
        %v2555 = vunpack.c.l.s4 1983009808
        %v2556 = vunpack.c.0.s8 %v2555
        %v2557 = vlaneseq
        %v2558 = vshrl.u32 %v2557, 7
        %v2559 = vsub.s32 %v2556, %v2558
        %v2560 = vrot.slane %v2552, %v2559
        %v2562 = vunpack.c.l.s4 1983009808
        %v2563 = vunpack.c.0.s8 %v2562
        %v2564 = vlaneseq
        %v2565 = vshrl.u32 %v2564, 7
        %v2566 = vsub.s32 %v2563, %v2565
        %v2567 = vrot.slane %v2553, %v2566
        %v2568 = vcombine.low %v2544, %v2560
        %v2569 = vcombine.high %v2544, %v2560
        %v2571 = vunpack.c.l.s4 1934713408
        %v2572 = vunpack.c.0.s8 %v2571
        %v2573 = vlaneseq
        %v2574 = vshrl.u32 %v2573, 7
        %v2575 = vsub.s32 %v2572, %v2574
        %v2576 = vrot.slane %v2568, %v2575
        %v2578 = vunpack.c.l.s4 1934713408
        %v2579 = vunpack.c.0.s8 %v2578
        %v2580 = vlaneseq
        %v2581 = vshrl.u32 %v2580, 7
        %v2582 = vsub.s32 %v2579, %v2581
        %v2583 = vrot.slane %v2569, %v2582
        %v2584 = vcombine.low %v2551, %v2567
        %v2585 = vcombine.high %v2551, %v2567
        %v2587 = vunpack.c.l.s4 1934713408
        %v2588 = vunpack.c.0.s8 %v2587
        %v2589 = vlaneseq
        %v2590 = vshrl.u32 %v2589, 7
        %v2591 = vsub.s32 %v2588, %v2590
        %v2592 = vrot.slane %v2584, %v2591
        %v2594 = vunpack.c.l.s4 1934713408
        %v2595 = vunpack.c.0.s8 %v2594
        %v2596 = vlaneseq
        %v2597 = vshrl.u32 %v2596, 7
        %v2598 = vsub.s32 %v2595, %v2597
        %v2599 = vrot.slane %v2585, %v2598
        %v2600 = vcombine.high %v2576, 0
        %v2601 = vcombine.high %v2583, 0
        %v2602 = vcombine.high %v2592, 0
        %v2603 = vcombine.high %v2599, 0
        %v2604 = vcombine.low %v2438, %v2454
        %v2605 = vcombine.high %v2438, %v2454
        %v2607 = vunpack.c.l.s4 1983009808
        %v2608 = vunpack.c.0.s8 %v2607
        %v2609 = vlaneseq
        %v2610 = vshrl.u32 %v2609, 7
        %v2611 = vsub.s32 %v2608, %v2610
        %v2612 = vrot.slane %v2604, %v2611
        %v2614 = vunpack.c.l.s4 1983009808
        %v2615 = vunpack.c.0.s8 %v2614
        %v2616 = vlaneseq
        %v2617 = vshrl.u32 %v2616, 7
        %v2618 = vsub.s32 %v2615, %v2617
        %v2619 = vrot.slane %v2605, %v2618
        %v2620 = vcombine.low %v2446, %v2462
        %v2621 = vcombine.high %v2446, %v2462
        %v2623 = vunpack.c.l.s4 1983009808
        %v2624 = vunpack.c.0.s8 %v2623
        %v2625 = vlaneseq
        %v2626 = vshrl.u32 %v2625, 7
        %v2627 = vsub.s32 %v2624, %v2626
        %v2628 = vrot.slane %v2620, %v2627
        %v2630 = vunpack.c.l.s4 1983009808
        %v2631 = vunpack.c.0.s8 %v2630
        %v2632 = vlaneseq
        %v2633 = vshrl.u32 %v2632, 7
        %v2634 = vsub.s32 %v2631, %v2633
        %v2635 = vrot.slane %v2621, %v2634
        %v2636 = vcombine.low %v2612, %v2628
        %v2637 = vcombine.high %v2612, %v2628
        %v2639 = vunpack.c.l.s4 1934713408
        %v2640 = vunpack.c.0.s8 %v2639
        %v2641 = vlaneseq
        %v2642 = vshrl.u32 %v2641, 7
        %v2643 = vsub.s32 %v2640, %v2642
        %v2644 = vrot.slane %v2636, %v2643
        %v2646 = vunpack.c.l.s4 1934713408
        %v2647 = vunpack.c.0.s8 %v2646
        %v2648 = vlaneseq
        %v2649 = vshrl.u32 %v2648, 7
        %v2650 = vsub.s32 %v2647, %v2649
        %v2651 = vrot.slane %v2637, %v2650
        %v2652 = vcombine.low %v2619, %v2635
        %v2653 = vcombine.high %v2619, %v2635
        %v2655 = vunpack.c.l.s4 1934713408
        %v2656 = vunpack.c.0.s8 %v2655
        %v2657 = vlaneseq
        %v2658 = vshrl.u32 %v2657, 7
        %v2659 = vsub.s32 %v2656, %v2658
        %v2660 = vrot.slane %v2652, %v2659
        %v2662 = vunpack.c.l.s4 1934713408
        %v2663 = vunpack.c.0.s8 %v2662
        %v2664 = vlaneseq
        %v2665 = vshrl.u32 %v2664, 7
        %v2666 = vsub.s32 %v2663, %v2665
        %v2667 = vrot.slane %v2653, %v2666
        %v2668 = vcombine.high %v2644, 0
        %v2669 = vcombine.high %v2651, 0
        %v2670 = vcombine.high %v2660, 0
        %v2671 = vcombine.high %v2667, 0
        %v2672 = vcombine.low %v2442, %v2458
        %v2673 = vcombine.high %v2442, %v2458
        %v2675 = vunpack.c.l.s4 1983009808
        %v2676 = vunpack.c.0.s8 %v2675
        %v2677 = vlaneseq
        %v2678 = vshrl.u32 %v2677, 7
        %v2679 = vsub.s32 %v2676, %v2678
        %v2680 = vrot.slane %v2672, %v2679
        %v2682 = vunpack.c.l.s4 1983009808
        %v2683 = vunpack.c.0.s8 %v2682
        %v2684 = vlaneseq
        %v2685 = vshrl.u32 %v2684, 7
        %v2686 = vsub.s32 %v2683, %v2685
        %v2687 = vrot.slane %v2673, %v2686
        %v2688 = vcombine.low %v2450, %v2466
        %v2689 = vcombine.high %v2450, %v2466
        %v2691 = vunpack.c.l.s4 1983009808
        %v2692 = vunpack.c.0.s8 %v2691
        %v2693 = vlaneseq
        %v2694 = vshrl.u32 %v2693, 7
        %v2695 = vsub.s32 %v2692, %v2694
        %v2696 = vrot.slane %v2688, %v2695
        %v2698 = vunpack.c.l.s4 1983009808
        %v2699 = vunpack.c.0.s8 %v2698
        %v2700 = vlaneseq
        %v2701 = vshrl.u32 %v2700, 7
        %v2702 = vsub.s32 %v2699, %v2701
        %v2703 = vrot.slane %v2689, %v2702
        %v2704 = vcombine.low %v2680, %v2696
        %v2705 = vcombine.high %v2680, %v2696
        %v2707 = vunpack.c.l.s4 1934713408
        %v2708 = vunpack.c.0.s8 %v2707
        %v2709 = vlaneseq
        %v2710 = vshrl.u32 %v2709, 7
        %v2711 = vsub.s32 %v2708, %v2710
        %v2712 = vrot.slane %v2704, %v2711
        %v2714 = vunpack.c.l.s4 1934713408
        %v2715 = vunpack.c.0.s8 %v2714
        %v2716 = vlaneseq
        %v2717 = vshrl.u32 %v2716, 7
        %v2718 = vsub.s32 %v2715, %v2717
        %v2719 = vrot.slane %v2705, %v2718
        %v2720 = vcombine.low %v2687, %v2703
        %v2721 = vcombine.high %v2687, %v2703
        %v2723 = vunpack.c.l.s4 1934713408
        %v2724 = vunpack.c.0.s8 %v2723
        %v2725 = vlaneseq
        %v2726 = vshrl.u32 %v2725, 7
        %v2727 = vsub.s32 %v2724, %v2726
        %v2728 = vrot.slane %v2720, %v2727
        %v2730 = vunpack.c.l.s4 1934713408
        %v2731 = vunpack.c.0.s8 %v2730
        %v2732 = vlaneseq
        %v2733 = vshrl.u32 %v2732, 7
        %v2734 = vsub.s32 %v2731, %v2733
        %v2735 = vrot.slane %v2721, %v2734
        %v2736 = vcombine.high %v2712, 0
        %v2737 = vcombine.high %v2719, 0
        %v2738 = vcombine.high %v2728, 0
        %v2739 = vcombine.high %v2735, 0
        %v2740 = vcombine.low %v2508, %v2515
        %v2742 = vunpack.c.l.s4 1983009808
        %v2743 = vunpack.c.0.s8 %v2742
        %v2744 = vlaneseq
        %v2745 = vshrl.u32 %v2744, 7
        %v2746 = vsub.s32 %v2743, %v2745
        %v2747 = vrot.slane %v2740, %v2746
        %v2748 = vcombine.low %v2532, %v2533
        %v2750 = vunpack.c.l.s4 1983009808
        %v2751 = vunpack.c.0.s8 %v2750
        %v2752 = vlaneseq
        %v2753 = vshrl.u32 %v2752, 7
        %v2754 = vsub.s32 %v2751, %v2753
        %v2755 = vrot.slane %v2748, %v2754
        %v2756 = vcombine.low %v2524, %v2531
        %v2758 = vunpack.c.l.s4 1983009808
        %v2759 = vunpack.c.0.s8 %v2758
        %v2760 = vlaneseq
        %v2761 = vshrl.u32 %v2760, 7
        %v2762 = vsub.s32 %v2759, %v2761
        %v2763 = vrot.slane %v2756, %v2762
        %v2764 = vcombine.low %v2534, %v2535
        %v2766 = vunpack.c.l.s4 1983009808
        %v2767 = vunpack.c.0.s8 %v2766
        %v2768 = vlaneseq
        %v2769 = vshrl.u32 %v2768, 7
        %v2770 = vsub.s32 %v2767, %v2769
        %v2771 = vrot.slane %v2764, %v2770
        %v2772 = vcombine.low %v2747, %v2755
        %v2773 = vcombine.high %v2747, %v2755
        %v2775 = vunpack.c.l.s4 1934713408
        %v2776 = vunpack.c.0.s8 %v2775
        %v2777 = vlaneseq
        %v2778 = vshrl.u32 %v2777, 7
        %v2779 = vsub.s32 %v2776, %v2778
        %v2780 = vrot.slane %v2772, %v2779
        %v2782 = vunpack.c.l.s4 1934713408
        %v2783 = vunpack.c.0.s8 %v2782
        %v2784 = vlaneseq
        %v2785 = vshrl.u32 %v2784, 7
        %v2786 = vsub.s32 %v2783, %v2785
        %v2787 = vrot.slane %v2773, %v2786
        %v2788 = vcombine.low %v2763, %v2771
        %v2789 = vcombine.high %v2763, %v2771
        %v2791 = vunpack.c.l.s4 1934713408
        %v2792 = vunpack.c.0.s8 %v2791
        %v2793 = vlaneseq
        %v2794 = vshrl.u32 %v2793, 7
        %v2795 = vsub.s32 %v2792, %v2794
        %v2796 = vrot.slane %v2788, %v2795
        %v2798 = vunpack.c.l.s4 1934713408
        %v2799 = vunpack.c.0.s8 %v2798
        %v2800 = vlaneseq
        %v2801 = vshrl.u32 %v2800, 7
        %v2802 = vsub.s32 %v2799, %v2801
        %v2803 = vrot.slane %v2789, %v2802
        %v2804 = vcombine.low %v2780, %v2796
        %v2805 = vcombine.high %v2780, %v2796
        %v2806 = vcombine.low %v2787, %v2803
        %v2807 = vcombine.high %v2787, %v2803
        %v2808 = vcombine.low %v2576, %v2583
        %v2810 = vunpack.c.l.s4 1983009808
        %v2811 = vunpack.c.0.s8 %v2810
        %v2812 = vlaneseq
        %v2813 = vshrl.u32 %v2812, 7
        %v2814 = vsub.s32 %v2811, %v2813
        %v2815 = vrot.slane %v2808, %v2814
        %v2816 = vcombine.low %v2600, %v2601
        %v2818 = vunpack.c.l.s4 1983009808
        %v2819 = vunpack.c.0.s8 %v2818
        %v2820 = vlaneseq
        %v2821 = vshrl.u32 %v2820, 7
        %v2822 = vsub.s32 %v2819, %v2821
        %v2823 = vrot.slane %v2816, %v2822
        %v2824 = vcombine.low %v2592, %v2599
        %v2826 = vunpack.c.l.s4 1983009808
        %v2827 = vunpack.c.0.s8 %v2826
        %v2828 = vlaneseq
        %v2829 = vshrl.u32 %v2828, 7
        %v2830 = vsub.s32 %v2827, %v2829
        %v2831 = vrot.slane %v2824, %v2830
        %v2832 = vcombine.low %v2602, %v2603
        %v2834 = vunpack.c.l.s4 1983009808
        %v2835 = vunpack.c.0.s8 %v2834
        %v2836 = vlaneseq
        %v2837 = vshrl.u32 %v2836, 7
        %v2838 = vsub.s32 %v2835, %v2837
        %v2839 = vrot.slane %v2832, %v2838
        %v2840 = vcombine.low %v2815, %v2823
        %v2841 = vcombine.high %v2815, %v2823
        %v2843 = vunpack.c.l.s4 1934713408
        %v2844 = vunpack.c.0.s8 %v2843
        %v2845 = vlaneseq
        %v2846 = vshrl.u32 %v2845, 7
        %v2847 = vsub.s32 %v2844, %v2846
        %v2848 = vrot.slane %v2840, %v2847
        %v2850 = vunpack.c.l.s4 1934713408
        %v2851 = vunpack.c.0.s8 %v2850
        %v2852 = vlaneseq
        %v2853 = vshrl.u32 %v2852, 7
        %v2854 = vsub.s32 %v2851, %v2853
        %v2855 = vrot.slane %v2841, %v2854
        %v2856 = vcombine.low %v2831, %v2839
        %v2857 = vcombine.high %v2831, %v2839
        %v2859 = vunpack.c.l.s4 1934713408
        %v2860 = vunpack.c.0.s8 %v2859
        %v2861 = vlaneseq
        %v2862 = vshrl.u32 %v2861, 7
        %v2863 = vsub.s32 %v2860, %v2862
        %v2864 = vrot.slane %v2856, %v2863
        %v2866 = vunpack.c.l.s4 1934713408
        %v2867 = vunpack.c.0.s8 %v2866
        %v2868 = vlaneseq
        %v2869 = vshrl.u32 %v2868, 7
        %v2870 = vsub.s32 %v2867, %v2869
        %v2871 = vrot.slane %v2857, %v2870
        %v2872 = vcombine.low %v2848, %v2864
        %v2873 = vcombine.high %v2848, %v2864
        %v2874 = vcombine.low %v2855, %v2871
        %v2875 = vcombine.high %v2855, %v2871
        %v2876 = vcombine.low %v2644, %v2651
        %v2878 = vunpack.c.l.s4 1983009808
        %v2879 = vunpack.c.0.s8 %v2878
        %v2880 = vlaneseq
        %v2881 = vshrl.u32 %v2880, 7
        %v2882 = vsub.s32 %v2879, %v2881
        %v2883 = vrot.slane %v2876, %v2882
        %v2884 = vcombine.low %v2668, %v2669
        %v2886 = vunpack.c.l.s4 1983009808
        %v2887 = vunpack.c.0.s8 %v2886
        %v2888 = vlaneseq
        %v2889 = vshrl.u32 %v2888, 7
        %v2890 = vsub.s32 %v2887, %v2889
        %v2891 = vrot.slane %v2884, %v2890
        %v2892 = vcombine.low %v2660, %v2667
        %v2894 = vunpack.c.l.s4 1983009808
        %v2895 = vunpack.c.0.s8 %v2894
        %v2896 = vlaneseq
        %v2897 = vshrl.u32 %v2896, 7
        %v2898 = vsub.s32 %v2895, %v2897
        %v2899 = vrot.slane %v2892, %v2898
        %v2900 = vcombine.low %v2670, %v2671
        %v2902 = vunpack.c.l.s4 1983009808
        %v2903 = vunpack.c.0.s8 %v2902
        %v2904 = vlaneseq
        %v2905 = vshrl.u32 %v2904, 7
        %v2906 = vsub.s32 %v2903, %v2905
        %v2907 = vrot.slane %v2900, %v2906
        %v2908 = vcombine.low %v2883, %v2891
        %v2909 = vcombine.high %v2883, %v2891
        %v2911 = vunpack.c.l.s4 1934713408
        %v2912 = vunpack.c.0.s8 %v2911
        %v2913 = vlaneseq
        %v2914 = vshrl.u32 %v2913, 7
        %v2915 = vsub.s32 %v2912, %v2914
        %v2916 = vrot.slane %v2908, %v2915
        %v2918 = vunpack.c.l.s4 1934713408
        %v2919 = vunpack.c.0.s8 %v2918
        %v2920 = vlaneseq
        %v2921 = vshrl.u32 %v2920, 7
        %v2922 = vsub.s32 %v2919, %v2921
        %v2923 = vrot.slane %v2909, %v2922
        %v2924 = vcombine.low %v2899, %v2907
        %v2925 = vcombine.high %v2899, %v2907
        %v2927 = vunpack.c.l.s4 1934713408
        %v2928 = vunpack.c.0.s8 %v2927
        %v2929 = vlaneseq
        %v2930 = vshrl.u32 %v2929, 7
        %v2931 = vsub.s32 %v2928, %v2930
        %v2932 = vrot.slane %v2924, %v2931
        %v2934 = vunpack.c.l.s4 1934713408
        %v2935 = vunpack.c.0.s8 %v2934
        %v2936 = vlaneseq
        %v2937 = vshrl.u32 %v2936, 7
        %v2938 = vsub.s32 %v2935, %v2937
        %v2939 = vrot.slane %v2925, %v2938
        %v2940 = vcombine.low %v2916, %v2932
        %v2941 = vcombine.high %v2916, %v2932
        %v2942 = vcombine.low %v2923, %v2939
        %v2943 = vcombine.high %v2923, %v2939
        %v2944 = vcombine.low %v2712, %v2719
        %v2946 = vunpack.c.l.s4 1983009808
        %v2947 = vunpack.c.0.s8 %v2946
        %v2948 = vlaneseq
        %v2949 = vshrl.u32 %v2948, 7
        %v2950 = vsub.s32 %v2947, %v2949
        %v2951 = vrot.slane %v2944, %v2950
        %v2952 = vcombine.low %v2736, %v2737
        %v2954 = vunpack.c.l.s4 1983009808
        %v2955 = vunpack.c.0.s8 %v2954
        %v2956 = vlaneseq
        %v2957 = vshrl.u32 %v2956, 7
        %v2958 = vsub.s32 %v2955, %v2957
        %v2959 = vrot.slane %v2952, %v2958
        %v2960 = vcombine.low %v2728, %v2735
        %v2962 = vunpack.c.l.s4 1983009808
        %v2963 = vunpack.c.0.s8 %v2962
        %v2964 = vlaneseq
        %v2965 = vshrl.u32 %v2964, 7
        %v2966 = vsub.s32 %v2963, %v2965
        %v2967 = vrot.slane %v2960, %v2966
        %v2968 = vcombine.low %v2738, %v2739
        %v2970 = vunpack.c.l.s4 1983009808
        %v2971 = vunpack.c.0.s8 %v2970
        %v2972 = vlaneseq
        %v2973 = vshrl.u32 %v2972, 7
        %v2974 = vsub.s32 %v2971, %v2973
        %v2975 = vrot.slane %v2968, %v2974
        %v2976 = vcombine.low %v2951, %v2959
        %v2977 = vcombine.high %v2951, %v2959
        %v2979 = vunpack.c.l.s4 1934713408
        %v2980 = vunpack.c.0.s8 %v2979
        %v2981 = vlaneseq
        %v2982 = vshrl.u32 %v2981, 7
        %v2983 = vsub.s32 %v2980, %v2982
        %v2984 = vrot.slane %v2976, %v2983
        %v2986 = vunpack.c.l.s4 1934713408
        %v2987 = vunpack.c.0.s8 %v2986
        %v2988 = vlaneseq
        %v2989 = vshrl.u32 %v2988, 7
        %v2990 = vsub.s32 %v2987, %v2989
        %v2991 = vrot.slane %v2977, %v2990
        %v2992 = vcombine.low %v2967, %v2975
        %v2993 = vcombine.high %v2967, %v2975
        %v2995 = vunpack.c.l.s4 1934713408
        %v2996 = vunpack.c.0.s8 %v2995
        %v2997 = vlaneseq
        %v2998 = vshrl.u32 %v2997, 7
        %v2999 = vsub.s32 %v2996, %v2998
        %v3000 = vrot.slane %v2992, %v2999
        %v3002 = vunpack.c.l.s4 1934713408
        %v3003 = vunpack.c.0.s8 %v3002
        %v3004 = vlaneseq
        %v3005 = vshrl.u32 %v3004, 7
        %v3006 = vsub.s32 %v3003, %v3005
        %v3007 = vrot.slane %v2993, %v3006
        %v3008 = vcombine.low %v2984, %v3000
        %v3009 = vcombine.high %v2984, %v3000
        %v3010 = vcombine.low %v2991, %v3007
        %v3011 = vcombine.high %v2991, %v3007
        %v3014 = vpack.i.b16 %v2872, %v2804
        %v3016 = vshrl.u32 %v2804, 16
        %v3017 = vshrl.u32 %v2872, 16
        %v3018 = vpack.i.b16 %v3017, %v3016
        %v3022 = vpack.i.b16 %v2873, %v2805
        %v3024 = vshrl.u32 %v2805, 16
        %v3025 = vshrl.u32 %v2873, 16
        %v3026 = vpack.i.b16 %v3025, %v3024
        %v3030 = vpack.i.b16 %v2874, %v2806
        %v3032 = vshrl.u32 %v2806, 16
        %v3033 = vshrl.u32 %v2874, 16
        %v3034 = vpack.i.b16 %v3033, %v3032
        %v3038 = vpack.i.b16 %v2875, %v2807
        %v3040 = vshrl.u32 %v2807, 16
        %v3041 = vshrl.u32 %v2875, 16
        %v3042 = vpack.i.b16 %v3041, %v3040
        %v3046 = vpack.i.b16 %v3008, %v2940
        %v3048 = vshrl.u32 %v2940, 16
        %v3049 = vshrl.u32 %v3008, 16
        %v3050 = vpack.i.b16 %v3049, %v3048
        %v3054 = vpack.i.b16 %v3009, %v2941
        %v3056 = vshrl.u32 %v2941, 16
        %v3057 = vshrl.u32 %v3009, 16
        %v3058 = vpack.i.b16 %v3057, %v3056
        %v3062 = vpack.i.b16 %v3010, %v2942
        %v3064 = vshrl.u32 %v2942, 16
        %v3065 = vshrl.u32 %v3010, 16
        %v3066 = vpack.i.b16 %v3065, %v3064
        %v3070 = vpack.i.b16 %v3011, %v2943
        %v3072 = vshrl.u32 %v2943, 16
        %v3073 = vshrl.u32 %v3011, 16
        %v3074 = vpack.i.b16 %v3073, %v3072
        %vm3076 = vcmask 261120
        %v3078 = vsel %vm3076, %v1646, 0
        %v3081 = vsel %vm3076, %v2330, 0
        %3083 = vmatprep.subr.bf16.mxu0 0
        %3084 = vmatpush1.bf16.xpose.msra.mxu0 %v3081
        %3085 = vmatprep.subr.bf16.mxu0 0
        %3086 = vmatpush1.bf16.xpose.msra.mxu0 0
        %3087 = vmatprep.subr.bf16.mxu0 0
        %3088 = vmatpush1.bf16.xpose.msra.mxu0 0
        %3089 = vmatprep.subr.bf16.mxu0 0
        %3090 = vmatpush1.bf16.xpose.msra.mxu0 0
        %3091 = vmatprep.subr.bf16.mxu0 0
        %3092 = vmatpush1.bf16.xpose.msra.mxu0 0
        %3093 = vmatprep.subr.bf16.mxu0 0
        %3094 = vmatpush1.bf16.xpose.msra.mxu0 0
        %3095 = vmatprep.subr.bf16.mxu0 0
        %3096 = vmatpush1.bf16.xpose.msra.mxu0 0
        %3097 = vmatprep.subr.bf16.mxu0 0
        %3098 = vmatpush1.bf16.xpose.msra.mxu0 0
        %3099 = vmatprep.subr.bf16.mxu0 0
        %3100 = vmatpush1.bf16.xpose.msra.mxu0 0
        %3101 = vmatprep.subr.bf16.mxu0 0
        %3102 = vmatpush1.bf16.xpose.msra.mxu0 0
        %3103 = vmatprep.subr.bf16.mxu0 0
        %3104 = vmatpush1.bf16.xpose.msra.mxu0 0
        %3105 = vmatprep.subr.bf16.mxu0 0
        %3106 = vmatpush1.bf16.xpose.msra.mxu0 0
        %3107 = vmatprep.subr.bf16.mxu0 0
        %3108 = vmatpush1.bf16.xpose.msra.mxu0 0
        %3109 = vmatprep.subr.bf16.mxu0 0
        %3110 = vmatpush1.bf16.xpose.msra.mxu0 0
        %3111 = vmatprep.subr.bf16.mxu0 0
        %3112 = vmatpush1.bf16.xpose.msra.mxu0 0
        %3113 = vmatprep.subr.bf16.mxu0 0
        %3114 = vmatpush1.bf16.xpose.msra.mxu0 0
        %3115 = vmatprep.mubr.bf16.mxu0 0
        %3116 = vmatmul.mubr.bf16.gmra.mrb[0].mxu0 %v3078
        %v3117 = vpop.f32.mrb[0].mxu0
        %v3118 = vadd.f32 0.0, %v3117
        %v3119 = vpop.f32.mrb[0].mxu0
        %v3120 = vpop.f32.mrb[0].mxu0
        %v3121 = vadd.f32 0.0, %v3120
        %v3122 = vpop.f32.mrb[0].mxu0
        %3123 = vdwg.mxu0
        %v3125 = vsel %vm3076, %v1649, 0
        %v3128 = vsel %vm3076, %v2333, 0
        %3130 = vmatprep.subr.bf16.mxu0 0
        %3131 = vmatpush1.bf16.xpose.msra.mxu0 %v3128
        %3132 = vmatprep.subr.bf16.mxu0 0
        %3133 = vmatpush1.bf16.xpose.msra.mxu0 0
        %3134 = vmatprep.subr.bf16.mxu0 0
        %3135 = vmatpush1.bf16.xpose.msra.mxu0 0
        %3136 = vmatprep.subr.bf16.mxu0 0
        %3137 = vmatpush1.bf16.xpose.msra.mxu0 0
        %3138 = vmatprep.subr.bf16.mxu0 0
        %3139 = vmatpush1.bf16.xpose.msra.mxu0 0
        %3140 = vmatprep.subr.bf16.mxu0 0
        %3141 = vmatpush1.bf16.xpose.msra.mxu0 0
        %3142 = vmatprep.subr.bf16.mxu0 0
        %3143 = vmatpush1.bf16.xpose.msra.mxu0 0
        %3144 = vmatprep.subr.bf16.mxu0 0
        %3145 = vmatpush1.bf16.xpose.msra.mxu0 0
        %3146 = vmatprep.subr.bf16.mxu0 0
        %3147 = vmatpush1.bf16.xpose.msra.mxu0 0
        %3148 = vmatprep.subr.bf16.mxu0 0
        %3149 = vmatpush1.bf16.xpose.msra.mxu0 0
        %3150 = vmatprep.subr.bf16.mxu0 0
        %3151 = vmatpush1.bf16.xpose.msra.mxu0 0
        %3152 = vmatprep.subr.bf16.mxu0 0
        %3153 = vmatpush1.bf16.xpose.msra.mxu0 0
        %3154 = vmatprep.subr.bf16.mxu0 0
        %3155 = vmatpush1.bf16.xpose.msra.mxu0 0
        %3156 = vmatprep.subr.bf16.mxu0 0
        %3157 = vmatpush1.bf16.xpose.msra.mxu0 0
        %3158 = vmatprep.subr.bf16.mxu0 0
        %3159 = vmatpush1.bf16.xpose.msra.mxu0 0
        %3160 = vmatprep.subr.bf16.mxu0 0
        %3161 = vmatpush1.bf16.xpose.msra.mxu0 0
        %3162 = vmatprep.mubr.bf16.mxu0 0
        %3163 = vmatmul.mubr.bf16.gmra.mrb[0].mxu0 %v3125
        %v3164 = vpop.f32.mrb[0].mxu0
        %v3165 = vadd.f32 0.0, %v3164
        %v3166 = vpop.f32.mrb[0].mxu0
        %v3167 = vpop.f32.mrb[0].mxu0
        %v3168 = vadd.f32 0.0, %v3167
        %v3169 = vpop.f32.mrb[0].mxu0
        %3170 = vdwg.mxu0
        %v3172 = vsel %vm3076, %v1652, 0
        %v3175 = vsel %vm3076, %v2336, 0
        %3177 = vmatprep.subr.bf16.mxu0 0
        %3178 = vmatpush1.bf16.xpose.msra.mxu0 %v3175
        %3179 = vmatprep.subr.bf16.mxu0 0
        %3180 = vmatpush1.bf16.xpose.msra.mxu0 0
        %3181 = vmatprep.subr.bf16.mxu0 0
        %3182 = vmatpush1.bf16.xpose.msra.mxu0 0
        %3183 = vmatprep.subr.bf16.mxu0 0
        %3184 = vmatpush1.bf16.xpose.msra.mxu0 0
        %3185 = vmatprep.subr.bf16.mxu0 0
        %3186 = vmatpush1.bf16.xpose.msra.mxu0 0
        %3187 = vmatprep.subr.bf16.mxu0 0
        %3188 = vmatpush1.bf16.xpose.msra.mxu0 0
        %3189 = vmatprep.subr.bf16.mxu0 0
        %3190 = vmatpush1.bf16.xpose.msra.mxu0 0
        %3191 = vmatprep.subr.bf16.mxu0 0
        %3192 = vmatpush1.bf16.xpose.msra.mxu0 0
        %3193 = vmatprep.subr.bf16.mxu0 0
        %3194 = vmatpush1.bf16.xpose.msra.mxu0 0
        %3195 = vmatprep.subr.bf16.mxu0 0
        %3196 = vmatpush1.bf16.xpose.msra.mxu0 0
        %3197 = vmatprep.subr.bf16.mxu0 0
        %3198 = vmatpush1.bf16.xpose.msra.mxu0 0
        %3199 = vmatprep.subr.bf16.mxu0 0
        %3200 = vmatpush1.bf16.xpose.msra.mxu0 0
        %3201 = vmatprep.subr.bf16.mxu0 0
        %3202 = vmatpush1.bf16.xpose.msra.mxu0 0
        %3203 = vmatprep.subr.bf16.mxu0 0
        %3204 = vmatpush1.bf16.xpose.msra.mxu0 0
        %3205 = vmatprep.subr.bf16.mxu0 0
        %3206 = vmatpush1.bf16.xpose.msra.mxu0 0
        %3207 = vmatprep.subr.bf16.mxu0 0
        %3208 = vmatpush1.bf16.xpose.msra.mxu0 0
        %3209 = vmatprep.mubr.bf16.mxu0 0
        %3210 = vmatmul.mubr.bf16.gmra.mrb[0].mxu0 %v3172
        %v3211 = vpop.f32.mrb[0].mxu0
        %v3212 = vadd.f32 0.0, %v3211
        %v3213 = vpop.f32.mrb[0].mxu0
        %v3214 = vpop.f32.mrb[0].mxu0
        %v3215 = vadd.f32 0.0, %v3214
        %v3216 = vpop.f32.mrb[0].mxu0
        %3217 = vdwg.mxu0
        %v3219 = vsel %vm3076, %v1655, 0
        %v3222 = vsel %vm3076, %v2339, 0
        %3224 = vmatprep.subr.bf16.mxu0 0
        %3225 = vmatpush1.bf16.xpose.msra.mxu0 %v3222
        %3226 = vmatprep.subr.bf16.mxu0 0
        %3227 = vmatpush1.bf16.xpose.msra.mxu0 0
        %3228 = vmatprep.subr.bf16.mxu0 0
        %3229 = vmatpush1.bf16.xpose.msra.mxu0 0
        %3230 = vmatprep.subr.bf16.mxu0 0
        %3231 = vmatpush1.bf16.xpose.msra.mxu0 0
        %3232 = vmatprep.subr.bf16.mxu0 0
        %3233 = vmatpush1.bf16.xpose.msra.mxu0 0
        %3234 = vmatprep.subr.bf16.mxu0 0
        %3235 = vmatpush1.bf16.xpose.msra.mxu0 0
        %3236 = vmatprep.subr.bf16.mxu0 0
        %3237 = vmatpush1.bf16.xpose.msra.mxu0 0
        %3238 = vmatprep.subr.bf16.mxu0 0
        %3239 = vmatpush1.bf16.xpose.msra.mxu0 0
        %3240 = vmatprep.subr.bf16.mxu0 0
        %3241 = vmatpush1.bf16.xpose.msra.mxu0 0
        %3242 = vmatprep.subr.bf16.mxu0 0
        %3243 = vmatpush1.bf16.xpose.msra.mxu0 0
        %3244 = vmatprep.subr.bf16.mxu0 0
        %3245 = vmatpush1.bf16.xpose.msra.mxu0 0
        %3246 = vmatprep.subr.bf16.mxu0 0
        %3247 = vmatpush1.bf16.xpose.msra.mxu0 0
        %3248 = vmatprep.subr.bf16.mxu0 0
        %3249 = vmatpush1.bf16.xpose.msra.mxu0 0
        %3250 = vmatprep.subr.bf16.mxu0 0
        %3251 = vmatpush1.bf16.xpose.msra.mxu0 0
        %3252 = vmatprep.subr.bf16.mxu0 0
        %3253 = vmatpush1.bf16.xpose.msra.mxu0 0
        %3254 = vmatprep.subr.bf16.mxu0 0
        %3255 = vmatpush1.bf16.xpose.msra.mxu0 0
        %3256 = vmatprep.mubr.bf16.mxu0 0
        %3257 = vmatmul.mubr.bf16.gmra.mrb[0].mxu0 %v3219
        %v3258 = vpop.f32.mrb[0].mxu0
        %v3259 = vadd.f32 0.0, %v3258
        %v3260 = vpop.f32.mrb[0].mxu0
        %v3261 = vpop.f32.mrb[0].mxu0
        %v3262 = vadd.f32 0.0, %v3261
        %v3263 = vpop.f32.mrb[0].mxu0
        %3264 = vdwg.mxu0
        %v3266 = vsel %vm3076, %v1658, 0
        %v3269 = vsel %vm3076, %v2342, 0
        %3271 = vmatprep.subr.bf16.mxu0 0
        %3272 = vmatpush1.bf16.xpose.msra.mxu0 %v3269
        %3273 = vmatprep.subr.bf16.mxu0 0
        %3274 = vmatpush1.bf16.xpose.msra.mxu0 0
        %3275 = vmatprep.subr.bf16.mxu0 0
        %3276 = vmatpush1.bf16.xpose.msra.mxu0 0
        %3277 = vmatprep.subr.bf16.mxu0 0
        %3278 = vmatpush1.bf16.xpose.msra.mxu0 0
        %3279 = vmatprep.subr.bf16.mxu0 0
        %3280 = vmatpush1.bf16.xpose.msra.mxu0 0
        %3281 = vmatprep.subr.bf16.mxu0 0
        %3282 = vmatpush1.bf16.xpose.msra.mxu0 0
        %3283 = vmatprep.subr.bf16.mxu0 0
        %3284 = vmatpush1.bf16.xpose.msra.mxu0 0
        %3285 = vmatprep.subr.bf16.mxu0 0
        %3286 = vmatpush1.bf16.xpose.msra.mxu0 0
        %3287 = vmatprep.subr.bf16.mxu0 0
        %3288 = vmatpush1.bf16.xpose.msra.mxu0 0
        %3289 = vmatprep.subr.bf16.mxu0 0
        %3290 = vmatpush1.bf16.xpose.msra.mxu0 0
        %3291 = vmatprep.subr.bf16.mxu0 0
        %3292 = vmatpush1.bf16.xpose.msra.mxu0 0
        %3293 = vmatprep.subr.bf16.mxu0 0
        %3294 = vmatpush1.bf16.xpose.msra.mxu0 0
        %3295 = vmatprep.subr.bf16.mxu0 0
        %3296 = vmatpush1.bf16.xpose.msra.mxu0 0
        %3297 = vmatprep.subr.bf16.mxu0 0
        %3298 = vmatpush1.bf16.xpose.msra.mxu0 0
        %3299 = vmatprep.subr.bf16.mxu0 0
        %3300 = vmatpush1.bf16.xpose.msra.mxu0 0
        %3301 = vmatprep.subr.bf16.mxu0 0
        %3302 = vmatpush1.bf16.xpose.msra.mxu0 0
        %3303 = vmatprep.mubr.bf16.mxu0 0
        %3304 = vmatmul.mubr.bf16.gmra.mrb[0].mxu0 %v3266
        %v3305 = vpop.f32.mrb[0].mxu0
        %v3306 = vadd.f32 0.0, %v3305
        %v3307 = vpop.f32.mrb[0].mxu0
        %v3308 = vpop.f32.mrb[0].mxu0
        %v3309 = vadd.f32 0.0, %v3308
        %v3310 = vpop.f32.mrb[0].mxu0
        %3311 = vdwg.mxu0
        %v3313 = vsel %vm3076, %v1661, 0
        %v3316 = vsel %vm3076, %v2345, 0
        %3318 = vmatprep.subr.bf16.mxu0 0
        %3319 = vmatpush1.bf16.xpose.msra.mxu0 %v3316
        %3320 = vmatprep.subr.bf16.mxu0 0
        %3321 = vmatpush1.bf16.xpose.msra.mxu0 0
        %3322 = vmatprep.subr.bf16.mxu0 0
        %3323 = vmatpush1.bf16.xpose.msra.mxu0 0
        %3324 = vmatprep.subr.bf16.mxu0 0
        %3325 = vmatpush1.bf16.xpose.msra.mxu0 0
        %3326 = vmatprep.subr.bf16.mxu0 0
        %3327 = vmatpush1.bf16.xpose.msra.mxu0 0
        %3328 = vmatprep.subr.bf16.mxu0 0
        %3329 = vmatpush1.bf16.xpose.msra.mxu0 0
        %3330 = vmatprep.subr.bf16.mxu0 0
        %3331 = vmatpush1.bf16.xpose.msra.mxu0 0
        %3332 = vmatprep.subr.bf16.mxu0 0
        %3333 = vmatpush1.bf16.xpose.msra.mxu0 0
        %3334 = vmatprep.subr.bf16.mxu0 0
        %3335 = vmatpush1.bf16.xpose.msra.mxu0 0
        %3336 = vmatprep.subr.bf16.mxu0 0
        %3337 = vmatpush1.bf16.xpose.msra.mxu0 0
        %3338 = vmatprep.subr.bf16.mxu0 0
        %3339 = vmatpush1.bf16.xpose.msra.mxu0 0
        %3340 = vmatprep.subr.bf16.mxu0 0
        %3341 = vmatpush1.bf16.xpose.msra.mxu0 0
        %3342 = vmatprep.subr.bf16.mxu0 0
        %3343 = vmatpush1.bf16.xpose.msra.mxu0 0
        %3344 = vmatprep.subr.bf16.mxu0 0
        %3345 = vmatpush1.bf16.xpose.msra.mxu0 0
        %3346 = vmatprep.subr.bf16.mxu0 0
        %3347 = vmatpush1.bf16.xpose.msra.mxu0 0
        %3348 = vmatprep.subr.bf16.mxu0 0
        %3349 = vmatpush1.bf16.xpose.msra.mxu0 0
        %3350 = vmatprep.mubr.bf16.mxu0 0
        %3351 = vmatmul.mubr.bf16.gmra.mrb[0].mxu0 %v3313
        %v3352 = vpop.f32.mrb[0].mxu0
        %v3353 = vadd.f32 0.0, %v3352
        %v3354 = vpop.f32.mrb[0].mxu0
        %v3355 = vpop.f32.mrb[0].mxu0
        %v3356 = vadd.f32 0.0, %v3355
        %v3357 = vpop.f32.mrb[0].mxu0
        %3358 = vdwg.mxu0
        %v3360 = vsel %vm3076, %v1664, 0
        %v3363 = vsel %vm3076, %v2348, 0
        %3365 = vmatprep.subr.bf16.mxu0 0
        %3366 = vmatpush1.bf16.xpose.msra.mxu0 %v3363
        %3367 = vmatprep.subr.bf16.mxu0 0
        %3368 = vmatpush1.bf16.xpose.msra.mxu0 0
        %3369 = vmatprep.subr.bf16.mxu0 0
        %3370 = vmatpush1.bf16.xpose.msra.mxu0 0
        %3371 = vmatprep.subr.bf16.mxu0 0
        %3372 = vmatpush1.bf16.xpose.msra.mxu0 0
        %3373 = vmatprep.subr.bf16.mxu0 0
        %3374 = vmatpush1.bf16.xpose.msra.mxu0 0
        %3375 = vmatprep.subr.bf16.mxu0 0
        %3376 = vmatpush1.bf16.xpose.msra.mxu0 0
        %3377 = vmatprep.subr.bf16.mxu0 0
        %3378 = vmatpush1.bf16.xpose.msra.mxu0 0
        %3379 = vmatprep.subr.bf16.mxu0 0
        %3380 = vmatpush1.bf16.xpose.msra.mxu0 0
        %3381 = vmatprep.subr.bf16.mxu0 0
        %3382 = vmatpush1.bf16.xpose.msra.mxu0 0
        %3383 = vmatprep.subr.bf16.mxu0 0
        %3384 = vmatpush1.bf16.xpose.msra.mxu0 0
        %3385 = vmatprep.subr.bf16.mxu0 0
        %3386 = vmatpush1.bf16.xpose.msra.mxu0 0
        %3387 = vmatprep.subr.bf16.mxu0 0
        %3388 = vmatpush1.bf16.xpose.msra.mxu0 0
        %3389 = vmatprep.subr.bf16.mxu0 0
        %3390 = vmatpush1.bf16.xpose.msra.mxu0 0
        %3391 = vmatprep.subr.bf16.mxu0 0
        %3392 = vmatpush1.bf16.xpose.msra.mxu0 0
        %3393 = vmatprep.subr.bf16.mxu0 0
        %3394 = vmatpush1.bf16.xpose.msra.mxu0 0
        %3395 = vmatprep.subr.bf16.mxu0 0
        %3396 = vmatpush1.bf16.xpose.msra.mxu0 0
        %3397 = vmatprep.mubr.bf16.mxu0 0
        %3398 = vmatmul.mubr.bf16.gmra.mrb[0].mxu0 %v3360
        %v3399 = vpop.f32.mrb[0].mxu0
        %v3400 = vadd.f32 0.0, %v3399
        %v3401 = vpop.f32.mrb[0].mxu0
        %v3402 = vpop.f32.mrb[0].mxu0
        %v3403 = vadd.f32 0.0, %v3402
        %v3404 = vpop.f32.mrb[0].mxu0
        %3405 = vdwg.mxu0
        %v3407 = vsel %vm3076, %v1667, 0
        %v3410 = vsel %vm3076, %v2351, 0
        %3412 = vmatprep.subr.bf16.mxu0 0
        %3413 = vmatpush1.bf16.xpose.msra.mxu0 %v3410
        %3414 = vmatprep.subr.bf16.mxu0 0
        %3415 = vmatpush1.bf16.xpose.msra.mxu0 0
        %3416 = vmatprep.subr.bf16.mxu0 0
        %3417 = vmatpush1.bf16.xpose.msra.mxu0 0
        %3418 = vmatprep.subr.bf16.mxu0 0
        %3419 = vmatpush1.bf16.xpose.msra.mxu0 0
        %3420 = vmatprep.subr.bf16.mxu0 0
        %3421 = vmatpush1.bf16.xpose.msra.mxu0 0
        %3422 = vmatprep.subr.bf16.mxu0 0
        %3423 = vmatpush1.bf16.xpose.msra.mxu0 0
        %3424 = vmatprep.subr.bf16.mxu0 0
        %3425 = vmatpush1.bf16.xpose.msra.mxu0 0
        %3426 = vmatprep.subr.bf16.mxu0 0
        %3427 = vmatpush1.bf16.xpose.msra.mxu0 0
        %3428 = vmatprep.subr.bf16.mxu0 0
        %3429 = vmatpush1.bf16.xpose.msra.mxu0 0
        %3430 = vmatprep.subr.bf16.mxu0 0
        %3431 = vmatpush1.bf16.xpose.msra.mxu0 0
        %3432 = vmatprep.subr.bf16.mxu0 0
        %3433 = vmatpush1.bf16.xpose.msra.mxu0 0
        %3434 = vmatprep.subr.bf16.mxu0 0
        %3435 = vmatpush1.bf16.xpose.msra.mxu0 0
        %3436 = vmatprep.subr.bf16.mxu0 0
        %3437 = vmatpush1.bf16.xpose.msra.mxu0 0
        %3438 = vmatprep.subr.bf16.mxu0 0
        %3439 = vmatpush1.bf16.xpose.msra.mxu0 0
        %3440 = vmatprep.subr.bf16.mxu0 0
        %3441 = vmatpush1.bf16.xpose.msra.mxu0 0
        %3442 = vmatprep.subr.bf16.mxu0 0
        %3443 = vmatpush1.bf16.xpose.msra.mxu0 0
        %3444 = vmatprep.mubr.bf16.mxu0 0
        %3445 = vmatmul.mubr.bf16.gmra.mrb[0].mxu0 %v3407
        %v3446 = vpop.f32.mrb[0].mxu0
        %v3447 = vadd.f32 0.0, %v3446
        %v3448 = vpop.f32.mrb[0].mxu0
        %v3449 = vpop.f32.mrb[0].mxu0
        %v3450 = vadd.f32 0.0, %v3449
        %v3451 = vpop.f32.mrb[0].mxu0
        %3452 = vdwg.mxu0
        %v3454 = vsel %vm3076, %v1670, 0
        %v3457 = vsel %vm3076, %v2354, 0
        %3459 = vmatprep.subr.bf16.mxu0 0
        %3460 = vmatpush1.bf16.xpose.msra.mxu0 %v3457
        %3461 = vmatprep.subr.bf16.mxu0 0
        %3462 = vmatpush1.bf16.xpose.msra.mxu0 0
        %3463 = vmatprep.subr.bf16.mxu0 0
        %3464 = vmatpush1.bf16.xpose.msra.mxu0 0
        %3465 = vmatprep.subr.bf16.mxu0 0
        %3466 = vmatpush1.bf16.xpose.msra.mxu0 0
        %3467 = vmatprep.subr.bf16.mxu0 0
        %3468 = vmatpush1.bf16.xpose.msra.mxu0 0
        %3469 = vmatprep.subr.bf16.mxu0 0
        %3470 = vmatpush1.bf16.xpose.msra.mxu0 0
        %3471 = vmatprep.subr.bf16.mxu0 0
        %3472 = vmatpush1.bf16.xpose.msra.mxu0 0
        %3473 = vmatprep.subr.bf16.mxu0 0
        %3474 = vmatpush1.bf16.xpose.msra.mxu0 0
        %3475 = vmatprep.subr.bf16.mxu0 0
        %3476 = vmatpush1.bf16.xpose.msra.mxu0 0
        %3477 = vmatprep.subr.bf16.mxu0 0
        %3478 = vmatpush1.bf16.xpose.msra.mxu0 0
        %3479 = vmatprep.subr.bf16.mxu0 0
        %3480 = vmatpush1.bf16.xpose.msra.mxu0 0
        %3481 = vmatprep.subr.bf16.mxu0 0
        %3482 = vmatpush1.bf16.xpose.msra.mxu0 0
        %3483 = vmatprep.subr.bf16.mxu0 0
        %3484 = vmatpush1.bf16.xpose.msra.mxu0 0
        %3485 = vmatprep.subr.bf16.mxu0 0
        %3486 = vmatpush1.bf16.xpose.msra.mxu0 0
        %3487 = vmatprep.subr.bf16.mxu0 0
        %3488 = vmatpush1.bf16.xpose.msra.mxu0 0
        %3489 = vmatprep.subr.bf16.mxu0 0
        %3490 = vmatpush1.bf16.xpose.msra.mxu0 0
        %3491 = vmatprep.mubr.bf16.mxu0 0
        %3492 = vmatmul.mubr.bf16.gmra.mrb[0].mxu0 %v3454
        %v3493 = vpop.f32.mrb[0].mxu0
        %v3494 = vadd.f32 0.0, %v3493
        %v3495 = vpop.f32.mrb[0].mxu0
        %v3496 = vpop.f32.mrb[0].mxu0
        %v3497 = vadd.f32 0.0, %v3496
        %v3498 = vpop.f32.mrb[0].mxu0
        %3499 = vdwg.mxu0
        %v3501 = vsel %vm3076, %v1673, 0
        %v3504 = vsel %vm3076, %v2357, 0
        %3506 = vmatprep.subr.bf16.mxu0 0
        %3507 = vmatpush1.bf16.xpose.msra.mxu0 %v3504
        %3508 = vmatprep.subr.bf16.mxu0 0
        %3509 = vmatpush1.bf16.xpose.msra.mxu0 0
        %3510 = vmatprep.subr.bf16.mxu0 0
        %3511 = vmatpush1.bf16.xpose.msra.mxu0 0
        %3512 = vmatprep.subr.bf16.mxu0 0
        %3513 = vmatpush1.bf16.xpose.msra.mxu0 0
        %3514 = vmatprep.subr.bf16.mxu0 0
        %3515 = vmatpush1.bf16.xpose.msra.mxu0 0
        %3516 = vmatprep.subr.bf16.mxu0 0
        %3517 = vmatpush1.bf16.xpose.msra.mxu0 0
        %3518 = vmatprep.subr.bf16.mxu0 0
        %3519 = vmatpush1.bf16.xpose.msra.mxu0 0
        %3520 = vmatprep.subr.bf16.mxu0 0
        %3521 = vmatpush1.bf16.xpose.msra.mxu0 0
        %3522 = vmatprep.subr.bf16.mxu0 0
        %3523 = vmatpush1.bf16.xpose.msra.mxu0 0
        %3524 = vmatprep.subr.bf16.mxu0 0
        %3525 = vmatpush1.bf16.xpose.msra.mxu0 0
        %3526 = vmatprep.subr.bf16.mxu0 0
        %3527 = vmatpush1.bf16.xpose.msra.mxu0 0
        %3528 = vmatprep.subr.bf16.mxu0 0
        %3529 = vmatpush1.bf16.xpose.msra.mxu0 0
        %3530 = vmatprep.subr.bf16.mxu0 0
        %3531 = vmatpush1.bf16.xpose.msra.mxu0 0
        %3532 = vmatprep.subr.bf16.mxu0 0
        %3533 = vmatpush1.bf16.xpose.msra.mxu0 0
        %3534 = vmatprep.subr.bf16.mxu0 0
        %3535 = vmatpush1.bf16.xpose.msra.mxu0 0
        %3536 = vmatprep.subr.bf16.mxu0 0
        %3537 = vmatpush1.bf16.xpose.msra.mxu0 0
        %3538 = vmatprep.mubr.bf16.mxu0 0
        %3539 = vmatmul.mubr.bf16.gmra.mrb[0].mxu0 %v3501
        %v3540 = vpop.f32.mrb[0].mxu0
        %v3541 = vadd.f32 0.0, %v3540
        %v3542 = vpop.f32.mrb[0].mxu0
        %v3543 = vpop.f32.mrb[0].mxu0
        %v3544 = vadd.f32 0.0, %v3543
        %v3545 = vpop.f32.mrb[0].mxu0
        %3546 = vdwg.mxu0
        %v3548 = vsel %vm3076, %v1676, 0
        %v3551 = vsel %vm3076, %v2360, 0
        %3553 = vmatprep.subr.bf16.mxu0 0
        %3554 = vmatpush1.bf16.xpose.msra.mxu0 %v3551
        %3555 = vmatprep.subr.bf16.mxu0 0
        %3556 = vmatpush1.bf16.xpose.msra.mxu0 0
        %3557 = vmatprep.subr.bf16.mxu0 0
        %3558 = vmatpush1.bf16.xpose.msra.mxu0 0
        %3559 = vmatprep.subr.bf16.mxu0 0
        %3560 = vmatpush1.bf16.xpose.msra.mxu0 0
        %3561 = vmatprep.subr.bf16.mxu0 0
        %3562 = vmatpush1.bf16.xpose.msra.mxu0 0
        %3563 = vmatprep.subr.bf16.mxu0 0
        %3564 = vmatpush1.bf16.xpose.msra.mxu0 0
        %3565 = vmatprep.subr.bf16.mxu0 0
        %3566 = vmatpush1.bf16.xpose.msra.mxu0 0
        %3567 = vmatprep.subr.bf16.mxu0 0
        %3568 = vmatpush1.bf16.xpose.msra.mxu0 0
        %3569 = vmatprep.subr.bf16.mxu0 0
        %3570 = vmatpush1.bf16.xpose.msra.mxu0 0
        %3571 = vmatprep.subr.bf16.mxu0 0
        %3572 = vmatpush1.bf16.xpose.msra.mxu0 0
        %3573 = vmatprep.subr.bf16.mxu0 0
        %3574 = vmatpush1.bf16.xpose.msra.mxu0 0
        %3575 = vmatprep.subr.bf16.mxu0 0
        %3576 = vmatpush1.bf16.xpose.msra.mxu0 0
        %3577 = vmatprep.subr.bf16.mxu0 0
        %3578 = vmatpush1.bf16.xpose.msra.mxu0 0
        %3579 = vmatprep.subr.bf16.mxu0 0
        %3580 = vmatpush1.bf16.xpose.msra.mxu0 0
        %3581 = vmatprep.subr.bf16.mxu0 0
        %3582 = vmatpush1.bf16.xpose.msra.mxu0 0
        %3583 = vmatprep.subr.bf16.mxu0 0
        %3584 = vmatpush1.bf16.xpose.msra.mxu0 0
        %3585 = vmatprep.mubr.bf16.mxu0 0
        %3586 = vmatmul.mubr.bf16.gmra.mrb[0].mxu0 %v3548
        %v3587 = vpop.f32.mrb[0].mxu0
        %v3588 = vadd.f32 0.0, %v3587
        %v3589 = vpop.f32.mrb[0].mxu0
        %v3590 = vpop.f32.mrb[0].mxu0
        %v3591 = vadd.f32 0.0, %v3590
        %v3592 = vpop.f32.mrb[0].mxu0
        %3593 = vdwg.mxu0
        %v3595 = vsel %vm3076, %v1679, 0
        %v3598 = vsel %vm3076, %v2363, 0
        %3600 = vmatprep.subr.bf16.mxu0 0
        %3601 = vmatpush1.bf16.xpose.msra.mxu0 %v3598
        %3602 = vmatprep.subr.bf16.mxu0 0
        %3603 = vmatpush1.bf16.xpose.msra.mxu0 0
        %3604 = vmatprep.subr.bf16.mxu0 0
        %3605 = vmatpush1.bf16.xpose.msra.mxu0 0
        %3606 = vmatprep.subr.bf16.mxu0 0
        %3607 = vmatpush1.bf16.xpose.msra.mxu0 0
        %3608 = vmatprep.subr.bf16.mxu0 0
        %3609 = vmatpush1.bf16.xpose.msra.mxu0 0
        %3610 = vmatprep.subr.bf16.mxu0 0
        %3611 = vmatpush1.bf16.xpose.msra.mxu0 0
        %3612 = vmatprep.subr.bf16.mxu0 0
        %3613 = vmatpush1.bf16.xpose.msra.mxu0 0
        %3614 = vmatprep.subr.bf16.mxu0 0
        %3615 = vmatpush1.bf16.xpose.msra.mxu0 0
        %3616 = vmatprep.subr.bf16.mxu0 0
        %3617 = vmatpush1.bf16.xpose.msra.mxu0 0
        %3618 = vmatprep.subr.bf16.mxu0 0
        %3619 = vmatpush1.bf16.xpose.msra.mxu0 0
        %3620 = vmatprep.subr.bf16.mxu0 0
        %3621 = vmatpush1.bf16.xpose.msra.mxu0 0
        %3622 = vmatprep.subr.bf16.mxu0 0
        %3623 = vmatpush1.bf16.xpose.msra.mxu0 0
        %3624 = vmatprep.subr.bf16.mxu0 0
        %3625 = vmatpush1.bf16.xpose.msra.mxu0 0
        %3626 = vmatprep.subr.bf16.mxu0 0
        %3627 = vmatpush1.bf16.xpose.msra.mxu0 0
        %3628 = vmatprep.subr.bf16.mxu0 0
        %3629 = vmatpush1.bf16.xpose.msra.mxu0 0
        %3630 = vmatprep.subr.bf16.mxu0 0
        %3631 = vmatpush1.bf16.xpose.msra.mxu0 0
        %3632 = vmatprep.mubr.bf16.mxu0 0
        %3633 = vmatmul.mubr.bf16.gmra.mrb[0].mxu0 %v3595
        %v3634 = vpop.f32.mrb[0].mxu0
        %v3635 = vadd.f32 0.0, %v3634
        %v3636 = vpop.f32.mrb[0].mxu0
        %v3637 = vpop.f32.mrb[0].mxu0
        %v3638 = vadd.f32 0.0, %v3637
        %v3639 = vpop.f32.mrb[0].mxu0
        %3640 = vdwg.mxu0
        %v3642 = vsel %vm3076, %v1682, 0
        %v3645 = vsel %vm3076, %v2366, 0
        %3647 = vmatprep.subr.bf16.mxu0 0
        %3648 = vmatpush1.bf16.xpose.msra.mxu0 %v3645
        %3649 = vmatprep.subr.bf16.mxu0 0
        %3650 = vmatpush1.bf16.xpose.msra.mxu0 0
        %3651 = vmatprep.subr.bf16.mxu0 0
        %3652 = vmatpush1.bf16.xpose.msra.mxu0 0
        %3653 = vmatprep.subr.bf16.mxu0 0
        %3654 = vmatpush1.bf16.xpose.msra.mxu0 0
        %3655 = vmatprep.subr.bf16.mxu0 0
        %3656 = vmatpush1.bf16.xpose.msra.mxu0 0
        %3657 = vmatprep.subr.bf16.mxu0 0
        %3658 = vmatpush1.bf16.xpose.msra.mxu0 0
        %3659 = vmatprep.subr.bf16.mxu0 0
        %3660 = vmatpush1.bf16.xpose.msra.mxu0 0
        %3661 = vmatprep.subr.bf16.mxu0 0
        %3662 = vmatpush1.bf16.xpose.msra.mxu0 0
        %3663 = vmatprep.subr.bf16.mxu0 0
        %3664 = vmatpush1.bf16.xpose.msra.mxu0 0
        %3665 = vmatprep.subr.bf16.mxu0 0
        %3666 = vmatpush1.bf16.xpose.msra.mxu0 0
        %3667 = vmatprep.subr.bf16.mxu0 0
        %3668 = vmatpush1.bf16.xpose.msra.mxu0 0
        %3669 = vmatprep.subr.bf16.mxu0 0
        %3670 = vmatpush1.bf16.xpose.msra.mxu0 0
        %3671 = vmatprep.subr.bf16.mxu0 0
        %3672 = vmatpush1.bf16.xpose.msra.mxu0 0
        %3673 = vmatprep.subr.bf16.mxu0 0
        %3674 = vmatpush1.bf16.xpose.msra.mxu0 0
        %3675 = vmatprep.subr.bf16.mxu0 0
        %3676 = vmatpush1.bf16.xpose.msra.mxu0 0
        %3677 = vmatprep.subr.bf16.mxu0 0
        %3678 = vmatpush1.bf16.xpose.msra.mxu0 0
        %3679 = vmatprep.mubr.bf16.mxu0 0
        %3680 = vmatmul.mubr.bf16.gmra.mrb[0].mxu0 %v3642
        %v3681 = vpop.f32.mrb[0].mxu0
        %v3682 = vadd.f32 0.0, %v3681
        %v3683 = vpop.f32.mrb[0].mxu0
        %v3684 = vpop.f32.mrb[0].mxu0
        %v3685 = vadd.f32 0.0, %v3684
        %v3686 = vpop.f32.mrb[0].mxu0
        %3687 = vdwg.mxu0
        %v3689 = vsel %vm3076, %v1685, 0
        %v3692 = vsel %vm3076, %v2369, 0
        %3694 = vmatprep.subr.bf16.mxu0 0
        %3695 = vmatpush1.bf16.xpose.msra.mxu0 %v3692
        %3696 = vmatprep.subr.bf16.mxu0 0
        %3697 = vmatpush1.bf16.xpose.msra.mxu0 0
        %3698 = vmatprep.subr.bf16.mxu0 0
        %3699 = vmatpush1.bf16.xpose.msra.mxu0 0
        %3700 = vmatprep.subr.bf16.mxu0 0
        %3701 = vmatpush1.bf16.xpose.msra.mxu0 0
        %3702 = vmatprep.subr.bf16.mxu0 0
        %3703 = vmatpush1.bf16.xpose.msra.mxu0 0
        %3704 = vmatprep.subr.bf16.mxu0 0
        %3705 = vmatpush1.bf16.xpose.msra.mxu0 0
        %3706 = vmatprep.subr.bf16.mxu0 0
        %3707 = vmatpush1.bf16.xpose.msra.mxu0 0
        %3708 = vmatprep.subr.bf16.mxu0 0
        %3709 = vmatpush1.bf16.xpose.msra.mxu0 0
        %3710 = vmatprep.subr.bf16.mxu0 0
        %3711 = vmatpush1.bf16.xpose.msra.mxu0 0
        %3712 = vmatprep.subr.bf16.mxu0 0
        %3713 = vmatpush1.bf16.xpose.msra.mxu0 0
        %3714 = vmatprep.subr.bf16.mxu0 0
        %3715 = vmatpush1.bf16.xpose.msra.mxu0 0
        %3716 = vmatprep.subr.bf16.mxu0 0
        %3717 = vmatpush1.bf16.xpose.msra.mxu0 0
        %3718 = vmatprep.subr.bf16.mxu0 0
        %3719 = vmatpush1.bf16.xpose.msra.mxu0 0
        %3720 = vmatprep.subr.bf16.mxu0 0
        %3721 = vmatpush1.bf16.xpose.msra.mxu0 0
        %3722 = vmatprep.subr.bf16.mxu0 0
        %3723 = vmatpush1.bf16.xpose.msra.mxu0 0
        %3724 = vmatprep.subr.bf16.mxu0 0
        %3725 = vmatpush1.bf16.xpose.msra.mxu0 0
        %3726 = vmatprep.mubr.bf16.mxu0 0
        %3727 = vmatmul.mubr.bf16.gmra.mrb[0].mxu0 %v3689
        %v3728 = vpop.f32.mrb[0].mxu0
        %v3729 = vadd.f32 0.0, %v3728
        %v3730 = vpop.f32.mrb[0].mxu0
        %v3731 = vpop.f32.mrb[0].mxu0
        %v3732 = vadd.f32 0.0, %v3731
        %v3733 = vpop.f32.mrb[0].mxu0
        %3734 = vdwg.mxu0
        %v3736 = vsel %vm3076, %v1688, 0
        %v3739 = vsel %vm3076, %v2372, 0
        %3741 = vmatprep.subr.bf16.mxu0 0
        %3742 = vmatpush1.bf16.xpose.msra.mxu0 %v3739
        %3743 = vmatprep.subr.bf16.mxu0 0
        %3744 = vmatpush1.bf16.xpose.msra.mxu0 0
        %3745 = vmatprep.subr.bf16.mxu0 0
        %3746 = vmatpush1.bf16.xpose.msra.mxu0 0
        %3747 = vmatprep.subr.bf16.mxu0 0
        %3748 = vmatpush1.bf16.xpose.msra.mxu0 0
        %3749 = vmatprep.subr.bf16.mxu0 0
        %3750 = vmatpush1.bf16.xpose.msra.mxu0 0
        %3751 = vmatprep.subr.bf16.mxu0 0
        %3752 = vmatpush1.bf16.xpose.msra.mxu0 0
        %3753 = vmatprep.subr.bf16.mxu0 0
        %3754 = vmatpush1.bf16.xpose.msra.mxu0 0
        %3755 = vmatprep.subr.bf16.mxu0 0
        %3756 = vmatpush1.bf16.xpose.msra.mxu0 0
        %3757 = vmatprep.subr.bf16.mxu0 0
        %3758 = vmatpush1.bf16.xpose.msra.mxu0 0
        %3759 = vmatprep.subr.bf16.mxu0 0
        %3760 = vmatpush1.bf16.xpose.msra.mxu0 0
        %3761 = vmatprep.subr.bf16.mxu0 0
        %3762 = vmatpush1.bf16.xpose.msra.mxu0 0
        %3763 = vmatprep.subr.bf16.mxu0 0
        %3764 = vmatpush1.bf16.xpose.msra.mxu0 0
        %3765 = vmatprep.subr.bf16.mxu0 0
        %3766 = vmatpush1.bf16.xpose.msra.mxu0 0
        %3767 = vmatprep.subr.bf16.mxu0 0
        %3768 = vmatpush1.bf16.xpose.msra.mxu0 0
        %3769 = vmatprep.subr.bf16.mxu0 0
        %3770 = vmatpush1.bf16.xpose.msra.mxu0 0
        %3771 = vmatprep.subr.bf16.mxu0 0
        %3772 = vmatpush1.bf16.xpose.msra.mxu0 0
        %3773 = vmatprep.mubr.bf16.mxu0 0
        %3774 = vmatmul.mubr.bf16.gmra.mrb[0].mxu0 %v3736
        %v3775 = vpop.f32.mrb[0].mxu0
        %v3776 = vadd.f32 0.0, %v3775
        %v3777 = vpop.f32.mrb[0].mxu0
        %v3778 = vpop.f32.mrb[0].mxu0
        %v3779 = vadd.f32 0.0, %v3778
        %v3780 = vpop.f32.mrb[0].mxu0
        %3781 = vdwg.mxu0
        %v3783 = vsel %vm3076, %v1691, 0
        %v3786 = vsel %vm3076, %v2375, 0
        %3788 = vmatprep.subr.bf16.mxu0 0
        %3789 = vmatpush1.bf16.xpose.msra.mxu0 %v3786
        %3790 = vmatprep.subr.bf16.mxu0 0
        %3791 = vmatpush1.bf16.xpose.msra.mxu0 0
        %3792 = vmatprep.subr.bf16.mxu0 0
        %3793 = vmatpush1.bf16.xpose.msra.mxu0 0
        %3794 = vmatprep.subr.bf16.mxu0 0
        %3795 = vmatpush1.bf16.xpose.msra.mxu0 0
        %3796 = vmatprep.subr.bf16.mxu0 0
        %3797 = vmatpush1.bf16.xpose.msra.mxu0 0
        %3798 = vmatprep.subr.bf16.mxu0 0
        %3799 = vmatpush1.bf16.xpose.msra.mxu0 0
        %3800 = vmatprep.subr.bf16.mxu0 0
        %3801 = vmatpush1.bf16.xpose.msra.mxu0 0
        %3802 = vmatprep.subr.bf16.mxu0 0
        %3803 = vmatpush1.bf16.xpose.msra.mxu0 0
        %3804 = vmatprep.subr.bf16.mxu0 0
        %3805 = vmatpush1.bf16.xpose.msra.mxu0 0
        %3806 = vmatprep.subr.bf16.mxu0 0
        %3807 = vmatpush1.bf16.xpose.msra.mxu0 0
        %3808 = vmatprep.subr.bf16.mxu0 0
        %3809 = vmatpush1.bf16.xpose.msra.mxu0 0
        %3810 = vmatprep.subr.bf16.mxu0 0
        %3811 = vmatpush1.bf16.xpose.msra.mxu0 0
        %3812 = vmatprep.subr.bf16.mxu0 0
        %3813 = vmatpush1.bf16.xpose.msra.mxu0 0
        %3814 = vmatprep.subr.bf16.mxu0 0
        %3815 = vmatpush1.bf16.xpose.msra.mxu0 0
        %3816 = vmatprep.subr.bf16.mxu0 0
        %3817 = vmatpush1.bf16.xpose.msra.mxu0 0
        %3818 = vmatprep.subr.bf16.mxu0 0
        %3819 = vmatpush1.bf16.xpose.msra.mxu0 0
        %3820 = vmatprep.mubr.bf16.mxu0 0
        %3821 = vmatmul.mubr.bf16.gmra.mrb[0].mxu0 %v3783
        %v3822 = vpop.f32.mrb[0].mxu0
        %v3823 = vadd.f32 0.0, %v3822
        %v3824 = vpop.f32.mrb[0].mxu0
        %v3825 = vpop.f32.mrb[0].mxu0
        %v3826 = vadd.f32 0.0, %v3825
        %v3827 = vpop.f32.mrb[0].mxu0
        %3828 = vdwg.mxu0
        %vm3829 = vcmask 130048
        %v3830 = vsel %vm3829, %v3118, -inf
        %3831 = vmax.xlane.f32.xlu0 %v3830
        %v3832 = vpop.xlane.xlu0 %3831
        %v3833 = vsel %vm3829, %v3121, -inf
        %3834 = vmax.xlane.f32.xlu0 %v3833
        %v3835 = vpop.xlane.xlu0 %3834
        %v3836 = vsel %vm3829, %v3165, -inf
        %3837 = vmax.xlane.f32.xlu0 %v3836
        %v3838 = vpop.xlane.xlu0 %3837
        %v3839 = vsel %vm3829, %v3168, -inf
        %3840 = vmax.xlane.f32.xlu0 %v3839
        %v3841 = vpop.xlane.xlu0 %3840
        %v3842 = vsel %vm3829, %v3212, -inf
        %3843 = vmax.xlane.f32.xlu0 %v3842
        %v3844 = vpop.xlane.xlu0 %3843
        %v3845 = vsel %vm3829, %v3215, -inf
        %3846 = vmax.xlane.f32.xlu0 %v3845
        %v3847 = vpop.xlane.xlu0 %3846
        %v3848 = vsel %vm3829, %v3259, -inf
        %3849 = vmax.xlane.f32.xlu0 %v3848
        %v3850 = vpop.xlane.xlu0 %3849
        %v3851 = vsel %vm3829, %v3262, -inf
        %3852 = vmax.xlane.f32.xlu0 %v3851
        %v3853 = vpop.xlane.xlu0 %3852
        %v3854 = vsel %vm3829, %v3306, -inf
        %3855 = vmax.xlane.f32.xlu0 %v3854
        %v3856 = vpop.xlane.xlu0 %3855
        %v3857 = vsel %vm3829, %v3309, -inf
        %3858 = vmax.xlane.f32.xlu0 %v3857
        %v3859 = vpop.xlane.xlu0 %3858
        %v3860 = vsel %vm3829, %v3353, -inf
        %3861 = vmax.xlane.f32.xlu0 %v3860
        %v3862 = vpop.xlane.xlu0 %3861
        %v3863 = vsel %vm3829, %v3356, -inf
        %3864 = vmax.xlane.f32.xlu0 %v3863
        %v3865 = vpop.xlane.xlu0 %3864
        %v3866 = vsel %vm3829, %v3400, -inf
        %3867 = vmax.xlane.f32.xlu0 %v3866
        %v3868 = vpop.xlane.xlu0 %3867
        %v3869 = vsel %vm3829, %v3403, -inf
        %3870 = vmax.xlane.f32.xlu0 %v3869
        %v3871 = vpop.xlane.xlu0 %3870
        %v3872 = vsel %vm3829, %v3447, -inf
        %3873 = vmax.xlane.f32.xlu0 %v3872
        %v3874 = vpop.xlane.xlu0 %3873
        %v3875 = vsel %vm3829, %v3450, -inf
        %3876 = vmax.xlane.f32.xlu0 %v3875
        %v3877 = vpop.xlane.xlu0 %3876
        %v3878 = vsel %vm3829, %v3494, -inf
        %3879 = vmax.xlane.f32.xlu0 %v3878
        %v3880 = vpop.xlane.xlu0 %3879
        %v3881 = vsel %vm3829, %v3497, -inf
        %3882 = vmax.xlane.f32.xlu0 %v3881
        %v3883 = vpop.xlane.xlu0 %3882
        %v3884 = vsel %vm3829, %v3541, -inf
        %3885 = vmax.xlane.f32.xlu0 %v3884
        %v3886 = vpop.xlane.xlu0 %3885
        %v3887 = vsel %vm3829, %v3544, -inf
        %3888 = vmax.xlane.f32.xlu0 %v3887
        %v3889 = vpop.xlane.xlu0 %3888
        %v3890 = vsel %vm3829, %v3588, -inf
        %3891 = vmax.xlane.f32.xlu0 %v3890
        %v3892 = vpop.xlane.xlu0 %3891
        %v3893 = vsel %vm3829, %v3591, -inf
        %3894 = vmax.xlane.f32.xlu0 %v3893
        %v3895 = vpop.xlane.xlu0 %3894
        %v3896 = vsel %vm3829, %v3635, -inf
        %3897 = vmax.xlane.f32.xlu0 %v3896
        %v3898 = vpop.xlane.xlu0 %3897
        %v3899 = vsel %vm3829, %v3638, -inf
        %3900 = vmax.xlane.f32.xlu0 %v3899
        %v3901 = vpop.xlane.xlu0 %3900
        %v3902 = vsel %vm3829, %v3682, -inf
        %3903 = vmax.xlane.f32.xlu0 %v3902
        %v3904 = vpop.xlane.xlu0 %3903
        %v3905 = vsel %vm3829, %v3685, -inf
        %3906 = vmax.xlane.f32.xlu0 %v3905
        %v3907 = vpop.xlane.xlu0 %3906
        %v3908 = vsel %vm3829, %v3729, -inf
        %3909 = vmax.xlane.f32.xlu0 %v3908
        %v3910 = vpop.xlane.xlu0 %3909
        %v3911 = vsel %vm3829, %v3732, -inf
        %3912 = vmax.xlane.f32.xlu0 %v3911
        %v3913 = vpop.xlane.xlu0 %3912
        %v3914 = vsel %vm3829, %v3776, -inf
        %3915 = vmax.xlane.f32.xlu0 %v3914
        %v3916 = vpop.xlane.xlu0 %3915
        %v3917 = vsel %vm3829, %v3779, -inf
        %3918 = vmax.xlane.f32.xlu0 %v3917
        %v3919 = vpop.xlane.xlu0 %3918
        %v3920 = vsel %vm3829, %v3823, -inf
        %3921 = vmax.xlane.f32.xlu0 %v3920
        %v3922 = vpop.xlane.xlu0 %3921
        %v3923 = vsel %vm3829, %v3826, -inf
        %3924 = vmax.xlane.f32.xlu0 %v3923
        %v3925 = vpop.xlane.xlu0 %3924
        %v3926 = vsub.f32 %v3118, %v3832
        %v3927 = vsub.f32 %v3121, %v3835
        %v3928 = vsub.f32 %v3165, %v3838
        %v3929 = vsub.f32 %v3168, %v3841
        %v3930 = vsub.f32 %v3212, %v3844
        %v3931 = vsub.f32 %v3215, %v3847
        %v3932 = vsub.f32 %v3259, %v3850
        %v3933 = vsub.f32 %v3262, %v3853
        %v3934 = vsub.f32 %v3306, %v3856
        %v3935 = vsub.f32 %v3309, %v3859
        %v3936 = vsub.f32 %v3353, %v3862
        %v3937 = vsub.f32 %v3356, %v3865
        %v3938 = vsub.f32 %v3400, %v3868
        %v3939 = vsub.f32 %v3403, %v3871
        %v3940 = vsub.f32 %v3447, %v3874
        %v3941 = vsub.f32 %v3450, %v3877
        %v3942 = vsub.f32 %v3494, %v3880
        %v3943 = vsub.f32 %v3497, %v3883
        %v3944 = vsub.f32 %v3541, %v3886
        %v3945 = vsub.f32 %v3544, %v3889
        %v3946 = vsub.f32 %v3588, %v3892
        %v3947 = vsub.f32 %v3591, %v3895
        %v3948 = vsub.f32 %v3635, %v3898
        %v3949 = vsub.f32 %v3638, %v3901
        %v3950 = vsub.f32 %v3682, %v3904
        %v3951 = vsub.f32 %v3685, %v3907
        %v3952 = vsub.f32 %v3729, %v3910
        %v3953 = vsub.f32 %v3732, %v3913
        %v3954 = vsub.f32 %v3776, %v3916
        %v3955 = vsub.f32 %v3779, %v3919
        %v3956 = vsub.f32 %v3823, %v3922
        %v3957 = vsub.f32 %v3826, %v3925
        %v3958 = vmul.f32 %v3926, 1.442695
        %v3959 = vpow.pop %v3958
        %v3960 = vmul.f32 %v3927, 1.442695
        %v3961 = vpow.pop %v3960
        %v3962 = vmul.f32 %v3928, 1.442695
        %v3963 = vpow.pop %v3962
        %v3964 = vmul.f32 %v3929, 1.442695
        %v3965 = vpow.pop %v3964
        %v3966 = vmul.f32 %v3930, 1.442695
        %v3967 = vpow.pop %v3966
        %v3968 = vmul.f32 %v3931, 1.442695
        %v3969 = vpow.pop %v3968
        %v3970 = vmul.f32 %v3932, 1.442695
        %v3971 = vpow.pop %v3970
        %v3972 = vmul.f32 %v3933, 1.442695
        %v3973 = vpow.pop %v3972
        %v3974 = vmul.f32 %v3934, 1.442695
        %v3975 = vpow.pop %v3974
        %v3976 = vmul.f32 %v3935, 1.442695
        %v3977 = vpow.pop %v3976
        %v3978 = vmul.f32 %v3936, 1.442695
        %v3979 = vpow.pop %v3978
        %v3980 = vmul.f32 %v3937, 1.442695
        %v3981 = vpow.pop %v3980
        %v3982 = vmul.f32 %v3938, 1.442695
        %v3983 = vpow.pop %v3982
        %v3984 = vmul.f32 %v3939, 1.442695
        %v3985 = vpow.pop %v3984
        %v3986 = vmul.f32 %v3940, 1.442695
        %v3987 = vpow.pop %v3986
        %v3988 = vmul.f32 %v3941, 1.442695
        %v3989 = vpow.pop %v3988
        %v3990 = vmul.f32 %v3942, 1.442695
        %v3991 = vpow.pop %v3990
        %v3992 = vmul.f32 %v3943, 1.442695
        %v3993 = vpow.pop %v3992
        %v3994 = vmul.f32 %v3944, 1.442695
        %v3995 = vpow.pop %v3994
        %v3996 = vmul.f32 %v3945, 1.442695
        %v3997 = vpow.pop %v3996
        %v3998 = vmul.f32 %v3946, 1.442695
        %v3999 = vpow.pop %v3998
        %v4000 = vmul.f32 %v3947, 1.442695
        %v4001 = vpow.pop %v4000
        %v4002 = vmul.f32 %v3948, 1.442695
        %v4003 = vpow.pop %v4002
        %v4004 = vmul.f32 %v3949, 1.442695
        %v4005 = vpow.pop %v4004
        %v4006 = vmul.f32 %v3950, 1.442695
        %v4007 = vpow.pop %v4006
        %v4008 = vmul.f32 %v3951, 1.442695
        %v4009 = vpow.pop %v4008
        %v4010 = vmul.f32 %v3952, 1.442695
        %v4011 = vpow.pop %v4010
        %v4012 = vmul.f32 %v3953, 1.442695
        %v4013 = vpow.pop %v4012
        %v4014 = vmul.f32 %v3954, 1.442695
        %v4015 = vpow.pop %v4014
        %v4016 = vmul.f32 %v3955, 1.442695
        %v4017 = vpow.pop %v4016
        %v4018 = vmul.f32 %v3956, 1.442695
        %v4019 = vpow.pop %v4018
        %v4020 = vmul.f32 %v3957, 1.442695
        %v4021 = vpow.pop %v4020
        %v4022 = vsel %vm3829, %v3959, 0.0
        %4023 = vadd.xlane.f32.xlu0 %v4022
        %v4024 = vpop.xlane.xlu0 %4023
        %v4025 = vsel %vm3829, %v3961, 0.0
        %4026 = vadd.xlane.f32.xlu0 %v4025
        %v4027 = vpop.xlane.xlu0 %4026
        %v4028 = vsel %vm3829, %v3963, 0.0
        %4029 = vadd.xlane.f32.xlu0 %v4028
        %v4030 = vpop.xlane.xlu0 %4029
        %v4031 = vsel %vm3829, %v3965, 0.0
        %4032 = vadd.xlane.f32.xlu0 %v4031
        %v4033 = vpop.xlane.xlu0 %4032
        %v4034 = vsel %vm3829, %v3967, 0.0
        %4035 = vadd.xlane.f32.xlu0 %v4034
        %v4036 = vpop.xlane.xlu0 %4035
        %v4037 = vsel %vm3829, %v3969, 0.0
        %4038 = vadd.xlane.f32.xlu0 %v4037
        %v4039 = vpop.xlane.xlu0 %4038
        %v4040 = vsel %vm3829, %v3971, 0.0
        %4041 = vadd.xlane.f32.xlu0 %v4040
        %v4042 = vpop.xlane.xlu0 %4041
        %v4043 = vsel %vm3829, %v3973, 0.0
        %4044 = vadd.xlane.f32.xlu0 %v4043
        %v4045 = vpop.xlane.xlu0 %4044
        %v4046 = vsel %vm3829, %v3975, 0.0
        %4047 = vadd.xlane.f32.xlu0 %v4046
        %v4048 = vpop.xlane.xlu0 %4047
        %v4049 = vsel %vm3829, %v3977, 0.0
        %4050 = vadd.xlane.f32.xlu0 %v4049
        %v4051 = vpop.xlane.xlu0 %4050
        %v4052 = vsel %vm3829, %v3979, 0.0
        %4053 = vadd.xlane.f32.xlu0 %v4052
        %v4054 = vpop.xlane.xlu0 %4053
        %v4055 = vsel %vm3829, %v3981, 0.0
        %4056 = vadd.xlane.f32.xlu0 %v4055
        %v4057 = vpop.xlane.xlu0 %4056
        %v4058 = vsel %vm3829, %v3983, 0.0
        %4059 = vadd.xlane.f32.xlu0 %v4058
        %v4060 = vpop.xlane.xlu0 %4059
        %v4061 = vsel %vm3829, %v3985, 0.0
        %4062 = vadd.xlane.f32.xlu0 %v4061
        %v4063 = vpop.xlane.xlu0 %4062
        %v4064 = vsel %vm3829, %v3987, 0.0
        %4065 = vadd.xlane.f32.xlu0 %v4064
        %v4066 = vpop.xlane.xlu0 %4065
        %v4067 = vsel %vm3829, %v3989, 0.0
        %4068 = vadd.xlane.f32.xlu0 %v4067
        %v4069 = vpop.xlane.xlu0 %4068
        %v4070 = vsel %vm3829, %v3991, 0.0
        %4071 = vadd.xlane.f32.xlu0 %v4070
        %v4072 = vpop.xlane.xlu0 %4071
        %v4073 = vsel %vm3829, %v3993, 0.0
        %4074 = vadd.xlane.f32.xlu0 %v4073
        %v4075 = vpop.xlane.xlu0 %4074
        %v4076 = vsel %vm3829, %v3995, 0.0
        %4077 = vadd.xlane.f32.xlu0 %v4076
        %v4078 = vpop.xlane.xlu0 %4077
        %v4079 = vsel %vm3829, %v3997, 0.0
        %4080 = vadd.xlane.f32.xlu0 %v4079
        %v4081 = vpop.xlane.xlu0 %4080
        %v4082 = vsel %vm3829, %v3999, 0.0
        %4083 = vadd.xlane.f32.xlu0 %v4082
        %v4084 = vpop.xlane.xlu0 %4083
        %v4085 = vsel %vm3829, %v4001, 0.0
        %4086 = vadd.xlane.f32.xlu0 %v4085
        %v4087 = vpop.xlane.xlu0 %4086
        %v4088 = vsel %vm3829, %v4003, 0.0
        %4089 = vadd.xlane.f32.xlu0 %v4088
        %v4090 = vpop.xlane.xlu0 %4089
        %v4091 = vsel %vm3829, %v4005, 0.0
        %4092 = vadd.xlane.f32.xlu0 %v4091
        %v4093 = vpop.xlane.xlu0 %4092
        %v4094 = vsel %vm3829, %v4007, 0.0
        %4095 = vadd.xlane.f32.xlu0 %v4094
        %v4096 = vpop.xlane.xlu0 %4095
        %v4097 = vsel %vm3829, %v4009, 0.0
        %4098 = vadd.xlane.f32.xlu0 %v4097
        %v4099 = vpop.xlane.xlu0 %4098
        %v4100 = vsel %vm3829, %v4011, 0.0
        %4101 = vadd.xlane.f32.xlu0 %v4100
        %v4102 = vpop.xlane.xlu0 %4101
        %v4103 = vsel %vm3829, %v4013, 0.0
        %4104 = vadd.xlane.f32.xlu0 %v4103
        %v4105 = vpop.xlane.xlu0 %4104
        %v4106 = vsel %vm3829, %v4015, 0.0
        %4107 = vadd.xlane.f32.xlu0 %v4106
        %v4108 = vpop.xlane.xlu0 %4107
        %v4109 = vsel %vm3829, %v4017, 0.0
        %4110 = vadd.xlane.f32.xlu0 %v4109
        %v4111 = vpop.xlane.xlu0 %4110
        %v4112 = vsel %vm3829, %v4019, 0.0
        %4113 = vadd.xlane.f32.xlu0 %v4112
        %v4114 = vpop.xlane.xlu0 %4113
        %v4115 = vsel %vm3829, %v4021, 0.0
        %4116 = vadd.xlane.f32.xlu0 %v4115
        %v4117 = vpop.xlane.xlu0 %4116
        %v4118 = vrcp.pop %v4024
        %v4119 = vrcp.pop %v4027
        %v4120 = vrcp.pop %v4030
        %v4121 = vrcp.pop %v4033
        %v4122 = vrcp.pop %v4036
        %v4123 = vrcp.pop %v4039
        %v4124 = vrcp.pop %v4042
        %v4125 = vrcp.pop %v4045
        %v4126 = vrcp.pop %v4048
        %v4127 = vrcp.pop %v4051
        %v4128 = vrcp.pop %v4054
        %v4129 = vrcp.pop %v4057
        %v4130 = vrcp.pop %v4060
        %v4131 = vrcp.pop %v4063
        %v4132 = vrcp.pop %v4066
        %v4133 = vrcp.pop %v4069
        %v4134 = vrcp.pop %v4072
        %v4135 = vrcp.pop %v4075
        %v4136 = vrcp.pop %v4078
        %v4137 = vrcp.pop %v4081
        %v4138 = vrcp.pop %v4084
        %v4139 = vrcp.pop %v4087
        %v4140 = vrcp.pop %v4090
        %v4141 = vrcp.pop %v4093
        %v4142 = vrcp.pop %v4096
        %v4143 = vrcp.pop %v4099
        %v4144 = vrcp.pop %v4102
        %v4145 = vrcp.pop %v4105
        %v4146 = vrcp.pop %v4108
        %v4147 = vrcp.pop %v4111
        %v4148 = vrcp.pop %v4114
        %v4149 = vrcp.pop %v4117
        %v4150 = vmul.f32 %v3959, %v4118
        %v4151 = vmul.f32 %v3961, %v4119
        %v4152 = vmul.f32 %v3963, %v4120
        %v4153 = vmul.f32 %v3965, %v4121
        %v4154 = vmul.f32 %v3967, %v4122
        %v4155 = vmul.f32 %v3969, %v4123
        %v4156 = vmul.f32 %v3971, %v4124
        %v4157 = vmul.f32 %v3973, %v4125
        %v4158 = vmul.f32 %v3975, %v4126
        %v4159 = vmul.f32 %v3977, %v4127
        %v4160 = vmul.f32 %v3979, %v4128
        %v4161 = vmul.f32 %v3981, %v4129
        %v4162 = vmul.f32 %v3983, %v4130
        %v4163 = vmul.f32 %v3985, %v4131
        %v4164 = vmul.f32 %v3987, %v4132
        %v4165 = vmul.f32 %v3989, %v4133
        %v4166 = vmul.f32 %v3991, %v4134
        %v4167 = vmul.f32 %v3993, %v4135
        %v4168 = vmul.f32 %v3995, %v4136
        %v4169 = vmul.f32 %v3997, %v4137
        %v4170 = vmul.f32 %v3999, %v4138
        %v4171 = vmul.f32 %v4001, %v4139
        %v4172 = vmul.f32 %v4003, %v4140
        %v4173 = vmul.f32 %v4005, %v4141
        %v4174 = vmul.f32 %v4007, %v4142
        %v4175 = vmul.f32 %v4009, %v4143
        %v4176 = vmul.f32 %v4011, %v4144
        %v4177 = vmul.f32 %v4013, %v4145
        %v4178 = vmul.f32 %v4015, %v4146
        %v4179 = vmul.f32 %v4017, %v4147
        %v4180 = vmul.f32 %v4019, %v4148
        %v4181 = vmul.f32 %v4021, %v4149
        %v4182 = vpack.c.bf16 %v4151, %v4150
        %v4183 = vpack.c.bf16 %v4153, %v4152
        %v4184 = vpack.c.bf16 %v4155, %v4154
        %v4185 = vpack.c.bf16 %v4157, %v4156
        %v4186 = vpack.c.bf16 %v4159, %v4158
        %v4187 = vpack.c.bf16 %v4161, %v4160
        %v4188 = vpack.c.bf16 %v4163, %v4162
        %v4189 = vpack.c.bf16 %v4165, %v4164
        %v4190 = vpack.c.bf16 %v4167, %v4166
        %v4191 = vpack.c.bf16 %v4169, %v4168
        %v4192 = vpack.c.bf16 %v4171, %v4170
        %v4193 = vpack.c.bf16 %v4173, %v4172
        %v4194 = vpack.c.bf16 %v4175, %v4174
        %v4195 = vpack.c.bf16 %v4177, %v4176
        %v4196 = vpack.c.bf16 %v4179, %v4178
        %v4197 = vpack.c.bf16 %v4181, %v4180
        %v4199 = vsel %vm3829, %v4182, 0
        %4201 = vmatprep.subr.bf16.mxu0 0
        %4202 = vmatpush1.bf16.msra.mxu0 %v3014
        %4203 = vmatprep.subr.bf16.mxu0 0
        %4204 = vmatpush1.bf16.msra.mxu0 0
        %4205 = vmatprep.subr.bf16.mxu0 0
        %4206 = vmatpush1.bf16.msra.mxu0 0
        %4207 = vmatprep.subr.bf16.mxu0 0
        %4208 = vmatpush1.bf16.msra.mxu0 0
        %4209 = vmatprep.subr.bf16.mxu0 0
        %4210 = vmatpush1.bf16.msra.mxu0 0
        %4211 = vmatprep.subr.bf16.mxu0 0
        %4212 = vmatpush1.bf16.msra.mxu0 0
        %4213 = vmatprep.subr.bf16.mxu0 0
        %4214 = vmatpush1.bf16.msra.mxu0 0
        %4215 = vmatprep.subr.bf16.mxu0 0
        %4216 = vmatpush1.bf16.msra.mxu0 0
        %4217 = vmatprep.subr.bf16.mxu0 0
        %4218 = vmatpush1.bf16.msra.mxu0 0
        %4219 = vmatprep.subr.bf16.mxu0 0
        %4220 = vmatpush1.bf16.msra.mxu0 0
        %4221 = vmatprep.subr.bf16.mxu0 0
        %4222 = vmatpush1.bf16.msra.mxu0 0
        %4223 = vmatprep.subr.bf16.mxu0 0
        %4224 = vmatpush1.bf16.msra.mxu0 0
        %4225 = vmatprep.subr.bf16.mxu0 0
        %4226 = vmatpush1.bf16.msra.mxu0 0
        %4227 = vmatprep.subr.bf16.mxu0 0
        %4228 = vmatpush1.bf16.msra.mxu0 0
        %4229 = vmatprep.subr.bf16.mxu0 0
        %4230 = vmatpush1.bf16.msra.mxu0 0
        %4231 = vmatprep.subr.bf16.mxu0 0
        %4232 = vmatpush1.bf16.msra.mxu0 0
        %4233 = vmatprep.mubr.bf16.mxu0 0
        %4234 = vmatmul.mubr.bf16.gmra.mrb[0].mxu0 %v4199
        %v4235 = vpop.f32.mrb[0].mxu0
        %v4236 = vadd.f32 0.0, %v4235
        %v4237 = vpop.f32.mrb[0].mxu0
        %v4238 = vpop.f32.mrb[0].mxu0
        %v4239 = vadd.f32 0.0, %v4238
        %v4240 = vpop.f32.mrb[0].mxu0
        %4241 = vdwg.mxu0
        %v4243 = vsel %vm3829, %v4183, 0
        %4245 = vmatprep.subr.bf16.mxu0 0
        %4246 = vmatpush1.bf16.msra.mxu0 %v3018
        %4247 = vmatprep.subr.bf16.mxu0 0
        %4248 = vmatpush1.bf16.msra.mxu0 0
        %4249 = vmatprep.subr.bf16.mxu0 0
        %4250 = vmatpush1.bf16.msra.mxu0 0
        %4251 = vmatprep.subr.bf16.mxu0 0
        %4252 = vmatpush1.bf16.msra.mxu0 0
        %4253 = vmatprep.subr.bf16.mxu0 0
        %4254 = vmatpush1.bf16.msra.mxu0 0
        %4255 = vmatprep.subr.bf16.mxu0 0
        %4256 = vmatpush1.bf16.msra.mxu0 0
        %4257 = vmatprep.subr.bf16.mxu0 0
        %4258 = vmatpush1.bf16.msra.mxu0 0
        %4259 = vmatprep.subr.bf16.mxu0 0
        %4260 = vmatpush1.bf16.msra.mxu0 0
        %4261 = vmatprep.subr.bf16.mxu0 0
        %4262 = vmatpush1.bf16.msra.mxu0 0
        %4263 = vmatprep.subr.bf16.mxu0 0
        %4264 = vmatpush1.bf16.msra.mxu0 0
        %4265 = vmatprep.subr.bf16.mxu0 0
        %4266 = vmatpush1.bf16.msra.mxu0 0
        %4267 = vmatprep.subr.bf16.mxu0 0
        %4268 = vmatpush1.bf16.msra.mxu0 0
        %4269 = vmatprep.subr.bf16.mxu0 0
        %4270 = vmatpush1.bf16.msra.mxu0 0
        %4271 = vmatprep.subr.bf16.mxu0 0
        %4272 = vmatpush1.bf16.msra.mxu0 0
        %4273 = vmatprep.subr.bf16.mxu0 0
        %4274 = vmatpush1.bf16.msra.mxu0 0
        %4275 = vmatprep.subr.bf16.mxu0 0
        %4276 = vmatpush1.bf16.msra.mxu0 0
        %4277 = vmatprep.mubr.bf16.mxu0 0
        %4278 = vmatmul.mubr.bf16.gmra.mrb[0].mxu0 %v4243
        %v4279 = vpop.f32.mrb[0].mxu0
        %v4280 = vadd.f32 0.0, %v4279
        %v4281 = vpop.f32.mrb[0].mxu0
        %v4282 = vpop.f32.mrb[0].mxu0
        %v4283 = vadd.f32 0.0, %v4282
        %v4284 = vpop.f32.mrb[0].mxu0
        %4285 = vdwg.mxu0
        %v4287 = vsel %vm3829, %v4184, 0
        %4289 = vmatprep.subr.bf16.mxu0 0
        %4290 = vmatpush1.bf16.msra.mxu0 %v3022
        %4291 = vmatprep.subr.bf16.mxu0 0
        %4292 = vmatpush1.bf16.msra.mxu0 0
        %4293 = vmatprep.subr.bf16.mxu0 0
        %4294 = vmatpush1.bf16.msra.mxu0 0
        %4295 = vmatprep.subr.bf16.mxu0 0
        %4296 = vmatpush1.bf16.msra.mxu0 0
        %4297 = vmatprep.subr.bf16.mxu0 0
        %4298 = vmatpush1.bf16.msra.mxu0 0
        %4299 = vmatprep.subr.bf16.mxu0 0
        %4300 = vmatpush1.bf16.msra.mxu0 0
        %4301 = vmatprep.subr.bf16.mxu0 0
        %4302 = vmatpush1.bf16.msra.mxu0 0
        %4303 = vmatprep.subr.bf16.mxu0 0
        %4304 = vmatpush1.bf16.msra.mxu0 0
        %4305 = vmatprep.subr.bf16.mxu0 0
        %4306 = vmatpush1.bf16.msra.mxu0 0
        %4307 = vmatprep.subr.bf16.mxu0 0
        %4308 = vmatpush1.bf16.msra.mxu0 0
        %4309 = vmatprep.subr.bf16.mxu0 0
        %4310 = vmatpush1.bf16.msra.mxu0 0
        %4311 = vmatprep.subr.bf16.mxu0 0
        %4312 = vmatpush1.bf16.msra.mxu0 0
        %4313 = vmatprep.subr.bf16.mxu0 0
        %4314 = vmatpush1.bf16.msra.mxu0 0
        %4315 = vmatprep.subr.bf16.mxu0 0
        %4316 = vmatpush1.bf16.msra.mxu0 0
        %4317 = vmatprep.subr.bf16.mxu0 0
        %4318 = vmatpush1.bf16.msra.mxu0 0
        %4319 = vmatprep.subr.bf16.mxu0 0
        %4320 = vmatpush1.bf16.msra.mxu0 0
        %4321 = vmatprep.mubr.bf16.mxu0 0
        %4322 = vmatmul.mubr.bf16.gmra.mrb[0].mxu0 %v4287
        %v4323 = vpop.f32.mrb[0].mxu0
        %v4324 = vadd.f32 0.0, %v4323
        %v4325 = vpop.f32.mrb[0].mxu0
        %v4326 = vpop.f32.mrb[0].mxu0
        %v4327 = vadd.f32 0.0, %v4326
        %v4328 = vpop.f32.mrb[0].mxu0
        %4329 = vdwg.mxu0
        %v4331 = vsel %vm3829, %v4185, 0
        %4333 = vmatprep.subr.bf16.mxu0 0
        %4334 = vmatpush1.bf16.msra.mxu0 %v3026
        %4335 = vmatprep.subr.bf16.mxu0 0
        %4336 = vmatpush1.bf16.msra.mxu0 0
        %4337 = vmatprep.subr.bf16.mxu0 0
        %4338 = vmatpush1.bf16.msra.mxu0 0
        %4339 = vmatprep.subr.bf16.mxu0 0
        %4340 = vmatpush1.bf16.msra.mxu0 0
        %4341 = vmatprep.subr.bf16.mxu0 0
        %4342 = vmatpush1.bf16.msra.mxu0 0
        %4343 = vmatprep.subr.bf16.mxu0 0
        %4344 = vmatpush1.bf16.msra.mxu0 0
        %4345 = vmatprep.subr.bf16.mxu0 0
        %4346 = vmatpush1.bf16.msra.mxu0 0
        %4347 = vmatprep.subr.bf16.mxu0 0
        %4348 = vmatpush1.bf16.msra.mxu0 0
        %4349 = vmatprep.subr.bf16.mxu0 0
        %4350 = vmatpush1.bf16.msra.mxu0 0
        %4351 = vmatprep.subr.bf16.mxu0 0
        %4352 = vmatpush1.bf16.msra.mxu0 0
        %4353 = vmatprep.subr.bf16.mxu0 0
        %4354 = vmatpush1.bf16.msra.mxu0 0
        %4355 = vmatprep.subr.bf16.mxu0 0
        %4356 = vmatpush1.bf16.msra.mxu0 0
        %4357 = vmatprep.subr.bf16.mxu0 0
        %4358 = vmatpush1.bf16.msra.mxu0 0
        %4359 = vmatprep.subr.bf16.mxu0 0
        %4360 = vmatpush1.bf16.msra.mxu0 0
        %4361 = vmatprep.subr.bf16.mxu0 0
        %4362 = vmatpush1.bf16.msra.mxu0 0
        %4363 = vmatprep.subr.bf16.mxu0 0
        %4364 = vmatpush1.bf16.msra.mxu0 0
        %4365 = vmatprep.mubr.bf16.mxu0 0
        %4366 = vmatmul.mubr.bf16.gmra.mrb[0].mxu0 %v4331
        %v4367 = vpop.f32.mrb[0].mxu0
        %v4368 = vadd.f32 0.0, %v4367
        %v4369 = vpop.f32.mrb[0].mxu0
        %v4370 = vpop.f32.mrb[0].mxu0
        %v4371 = vadd.f32 0.0, %v4370
        %v4372 = vpop.f32.mrb[0].mxu0
        %4373 = vdwg.mxu0
        %v4375 = vsel %vm3829, %v4186, 0
        %4377 = vmatprep.subr.bf16.mxu0 0
        %4378 = vmatpush1.bf16.msra.mxu0 %v3030
        %4379 = vmatprep.subr.bf16.mxu0 0
        %4380 = vmatpush1.bf16.msra.mxu0 0
        %4381 = vmatprep.subr.bf16.mxu0 0
        %4382 = vmatpush1.bf16.msra.mxu0 0
        %4383 = vmatprep.subr.bf16.mxu0 0
        %4384 = vmatpush1.bf16.msra.mxu0 0
        %4385 = vmatprep.subr.bf16.mxu0 0
        %4386 = vmatpush1.bf16.msra.mxu0 0
        %4387 = vmatprep.subr.bf16.mxu0 0
        %4388 = vmatpush1.bf16.msra.mxu0 0
        %4389 = vmatprep.subr.bf16.mxu0 0
        %4390 = vmatpush1.bf16.msra.mxu0 0
        %4391 = vmatprep.subr.bf16.mxu0 0
        %4392 = vmatpush1.bf16.msra.mxu0 0
        %4393 = vmatprep.subr.bf16.mxu0 0
        %4394 = vmatpush1.bf16.msra.mxu0 0
        %4395 = vmatprep.subr.bf16.mxu0 0
        %4396 = vmatpush1.bf16.msra.mxu0 0
        %4397 = vmatprep.subr.bf16.mxu0 0
        %4398 = vmatpush1.bf16.msra.mxu0 0
        %4399 = vmatprep.subr.bf16.mxu0 0
        %4400 = vmatpush1.bf16.msra.mxu0 0
        %4401 = vmatprep.subr.bf16.mxu0 0
        %4402 = vmatpush1.bf16.msra.mxu0 0
        %4403 = vmatprep.subr.bf16.mxu0 0
        %4404 = vmatpush1.bf16.msra.mxu0 0
        %4405 = vmatprep.subr.bf16.mxu0 0
        %4406 = vmatpush1.bf16.msra.mxu0 0
        %4407 = vmatprep.subr.bf16.mxu0 0
        %4408 = vmatpush1.bf16.msra.mxu0 0
        %4409 = vmatprep.mubr.bf16.mxu0 0
        %4410 = vmatmul.mubr.bf16.gmra.mrb[0].mxu0 %v4375
        %v4411 = vpop.f32.mrb[0].mxu0
        %v4412 = vadd.f32 0.0, %v4411
        %v4413 = vpop.f32.mrb[0].mxu0
        %v4414 = vpop.f32.mrb[0].mxu0
        %v4415 = vadd.f32 0.0, %v4414
        %v4416 = vpop.f32.mrb[0].mxu0
        %4417 = vdwg.mxu0
        %v4419 = vsel %vm3829, %v4187, 0
        %4421 = vmatprep.subr.bf16.mxu0 0
        %4422 = vmatpush1.bf16.msra.mxu0 %v3034
        %4423 = vmatprep.subr.bf16.mxu0 0
        %4424 = vmatpush1.bf16.msra.mxu0 0
        %4425 = vmatprep.subr.bf16.mxu0 0
        %4426 = vmatpush1.bf16.msra.mxu0 0
        %4427 = vmatprep.subr.bf16.mxu0 0
        %4428 = vmatpush1.bf16.msra.mxu0 0
        %4429 = vmatprep.subr.bf16.mxu0 0
        %4430 = vmatpush1.bf16.msra.mxu0 0
        %4431 = vmatprep.subr.bf16.mxu0 0
        %4432 = vmatpush1.bf16.msra.mxu0 0
        %4433 = vmatprep.subr.bf16.mxu0 0
        %4434 = vmatpush1.bf16.msra.mxu0 0
        %4435 = vmatprep.subr.bf16.mxu0 0
        %4436 = vmatpush1.bf16.msra.mxu0 0
        %4437 = vmatprep.subr.bf16.mxu0 0
        %4438 = vmatpush1.bf16.msra.mxu0 0
        %4439 = vmatprep.subr.bf16.mxu0 0
        %4440 = vmatpush1.bf16.msra.mxu0 0
        %4441 = vmatprep.subr.bf16.mxu0 0
        %4442 = vmatpush1.bf16.msra.mxu0 0
        %4443 = vmatprep.subr.bf16.mxu0 0
        %4444 = vmatpush1.bf16.msra.mxu0 0
        %4445 = vmatprep.subr.bf16.mxu0 0
        %4446 = vmatpush1.bf16.msra.mxu0 0
        %4447 = vmatprep.subr.bf16.mxu0 0
        %4448 = vmatpush1.bf16.msra.mxu0 0
        %4449 = vmatprep.subr.bf16.mxu0 0
        %4450 = vmatpush1.bf16.msra.mxu0 0
        %4451 = vmatprep.subr.bf16.mxu0 0
        %4452 = vmatpush1.bf16.msra.mxu0 0
        %4453 = vmatprep.mubr.bf16.mxu0 0
        %4454 = vmatmul.mubr.bf16.gmra.mrb[0].mxu0 %v4419
        %v4455 = vpop.f32.mrb[0].mxu0
        %v4456 = vadd.f32 0.0, %v4455
        %v4457 = vpop.f32.mrb[0].mxu0
        %v4458 = vpop.f32.mrb[0].mxu0
        %v4459 = vadd.f32 0.0, %v4458
        %v4460 = vpop.f32.mrb[0].mxu0
        %4461 = vdwg.mxu0
        %v4463 = vsel %vm3829, %v4188, 0
        %4465 = vmatprep.subr.bf16.mxu0 0
        %4466 = vmatpush1.bf16.msra.mxu0 %v3038
        %4467 = vmatprep.subr.bf16.mxu0 0
        %4468 = vmatpush1.bf16.msra.mxu0 0
        %4469 = vmatprep.subr.bf16.mxu0 0
        %4470 = vmatpush1.bf16.msra.mxu0 0
        %4471 = vmatprep.subr.bf16.mxu0 0
        %4472 = vmatpush1.bf16.msra.mxu0 0
        %4473 = vmatprep.subr.bf16.mxu0 0
        %4474 = vmatpush1.bf16.msra.mxu0 0
        %4475 = vmatprep.subr.bf16.mxu0 0
        %4476 = vmatpush1.bf16.msra.mxu0 0
        %4477 = vmatprep.subr.bf16.mxu0 0
        %4478 = vmatpush1.bf16.msra.mxu0 0
        %4479 = vmatprep.subr.bf16.mxu0 0
        %4480 = vmatpush1.bf16.msra.mxu0 0
        %4481 = vmatprep.subr.bf16.mxu0 0
        %4482 = vmatpush1.bf16.msra.mxu0 0
        %4483 = vmatprep.subr.bf16.mxu0 0
        %4484 = vmatpush1.bf16.msra.mxu0 0
        %4485 = vmatprep.subr.bf16.mxu0 0
        %4486 = vmatpush1.bf16.msra.mxu0 0
        %4487 = vmatprep.subr.bf16.mxu0 0
        %4488 = vmatpush1.bf16.msra.mxu0 0
        %4489 = vmatprep.subr.bf16.mxu0 0
        %4490 = vmatpush1.bf16.msra.mxu0 0
        %4491 = vmatprep.subr.bf16.mxu0 0
        %4492 = vmatpush1.bf16.msra.mxu0 0
        %4493 = vmatprep.subr.bf16.mxu0 0
        %4494 = vmatpush1.bf16.msra.mxu0 0
        %4495 = vmatprep.subr.bf16.mxu0 0
        %4496 = vmatpush1.bf16.msra.mxu0 0
        %4497 = vmatprep.mubr.bf16.mxu0 0
        %4498 = vmatmul.mubr.bf16.gmra.mrb[0].mxu0 %v4463
        %v4499 = vpop.f32.mrb[0].mxu0
        %v4500 = vadd.f32 0.0, %v4499
        %v4501 = vpop.f32.mrb[0].mxu0
        %v4502 = vpop.f32.mrb[0].mxu0
        %v4503 = vadd.f32 0.0, %v4502
        %v4504 = vpop.f32.mrb[0].mxu0
        %4505 = vdwg.mxu0
        %v4507 = vsel %vm3829, %v4189, 0
        %4509 = vmatprep.subr.bf16.mxu0 0
        %4510 = vmatpush1.bf16.msra.mxu0 %v3042
        %4511 = vmatprep.subr.bf16.mxu0 0
        %4512 = vmatpush1.bf16.msra.mxu0 0
        %4513 = vmatprep.subr.bf16.mxu0 0
        %4514 = vmatpush1.bf16.msra.mxu0 0
        %4515 = vmatprep.subr.bf16.mxu0 0
        %4516 = vmatpush1.bf16.msra.mxu0 0
        %4517 = vmatprep.subr.bf16.mxu0 0
        %4518 = vmatpush1.bf16.msra.mxu0 0
        %4519 = vmatprep.subr.bf16.mxu0 0
        %4520 = vmatpush1.bf16.msra.mxu0 0
        %4521 = vmatprep.subr.bf16.mxu0 0
        %4522 = vmatpush1.bf16.msra.mxu0 0
        %4523 = vmatprep.subr.bf16.mxu0 0
        %4524 = vmatpush1.bf16.msra.mxu0 0
        %4525 = vmatprep.subr.bf16.mxu0 0
        %4526 = vmatpush1.bf16.msra.mxu0 0
        %4527 = vmatprep.subr.bf16.mxu0 0
        %4528 = vmatpush1.bf16.msra.mxu0 0
        %4529 = vmatprep.subr.bf16.mxu0 0
        %4530 = vmatpush1.bf16.msra.mxu0 0
        %4531 = vmatprep.subr.bf16.mxu0 0
        %4532 = vmatpush1.bf16.msra.mxu0 0
        %4533 = vmatprep.subr.bf16.mxu0 0
        %4534 = vmatpush1.bf16.msra.mxu0 0
        %4535 = vmatprep.subr.bf16.mxu0 0
        %4536 = vmatpush1.bf16.msra.mxu0 0
        %4537 = vmatprep.subr.bf16.mxu0 0
        %4538 = vmatpush1.bf16.msra.mxu0 0
        %4539 = vmatprep.subr.bf16.mxu0 0
        %4540 = vmatpush1.bf16.msra.mxu0 0
        %4541 = vmatprep.mubr.bf16.mxu0 0
        %4542 = vmatmul.mubr.bf16.gmra.mrb[0].mxu0 %v4507
        %v4543 = vpop.f32.mrb[0].mxu0
        %v4544 = vadd.f32 0.0, %v4543
        %v4545 = vpop.f32.mrb[0].mxu0
        %v4546 = vpop.f32.mrb[0].mxu0
        %v4547 = vadd.f32 0.0, %v4546
        %v4548 = vpop.f32.mrb[0].mxu0
        %4549 = vdwg.mxu0
        %v4551 = vsel %vm3829, %v4190, 0
        %4553 = vmatprep.subr.bf16.mxu0 0
        %4554 = vmatpush1.bf16.msra.mxu0 %v3046
        %4555 = vmatprep.subr.bf16.mxu0 0
        %4556 = vmatpush1.bf16.msra.mxu0 0
        %4557 = vmatprep.subr.bf16.mxu0 0
        %4558 = vmatpush1.bf16.msra.mxu0 0
        %4559 = vmatprep.subr.bf16.mxu0 0
        %4560 = vmatpush1.bf16.msra.mxu0 0
        %4561 = vmatprep.subr.bf16.mxu0 0
        %4562 = vmatpush1.bf16.msra.mxu0 0
        %4563 = vmatprep.subr.bf16.mxu0 0
        %4564 = vmatpush1.bf16.msra.mxu0 0
        %4565 = vmatprep.subr.bf16.mxu0 0
        %4566 = vmatpush1.bf16.msra.mxu0 0
        %4567 = vmatprep.subr.bf16.mxu0 0
        %4568 = vmatpush1.bf16.msra.mxu0 0
        %4569 = vmatprep.subr.bf16.mxu0 0
        %4570 = vmatpush1.bf16.msra.mxu0 0
        %4571 = vmatprep.subr.bf16.mxu0 0
        %4572 = vmatpush1.bf16.msra.mxu0 0
        %4573 = vmatprep.subr.bf16.mxu0 0
        %4574 = vmatpush1.bf16.msra.mxu0 0
        %4575 = vmatprep.subr.bf16.mxu0 0
        %4576 = vmatpush1.bf16.msra.mxu0 0
        %4577 = vmatprep.subr.bf16.mxu0 0
        %4578 = vmatpush1.bf16.msra.mxu0 0
        %4579 = vmatprep.subr.bf16.mxu0 0
        %4580 = vmatpush1.bf16.msra.mxu0 0
        %4581 = vmatprep.subr.bf16.mxu0 0
        %4582 = vmatpush1.bf16.msra.mxu0 0
        %4583 = vmatprep.subr.bf16.mxu0 0
        %4584 = vmatpush1.bf16.msra.mxu0 0
        %4585 = vmatprep.mubr.bf16.mxu0 0
        %4586 = vmatmul.mubr.bf16.gmra.mrb[0].mxu0 %v4551
        %v4587 = vpop.f32.mrb[0].mxu0
        %v4588 = vadd.f32 0.0, %v4587
        %v4589 = vpop.f32.mrb[0].mxu0
        %v4590 = vpop.f32.mrb[0].mxu0
        %v4591 = vadd.f32 0.0, %v4590
        %v4592 = vpop.f32.mrb[0].mxu0
        %4593 = vdwg.mxu0
        %v4595 = vsel %vm3829, %v4191, 0
        %4597 = vmatprep.subr.bf16.mxu0 0
        %4598 = vmatpush1.bf16.msra.mxu0 %v3050
        %4599 = vmatprep.subr.bf16.mxu0 0
        %4600 = vmatpush1.bf16.msra.mxu0 0
        %4601 = vmatprep.subr.bf16.mxu0 0
        %4602 = vmatpush1.bf16.msra.mxu0 0
        %4603 = vmatprep.subr.bf16.mxu0 0
        %4604 = vmatpush1.bf16.msra.mxu0 0
        %4605 = vmatprep.subr.bf16.mxu0 0
        %4606 = vmatpush1.bf16.msra.mxu0 0
        %4607 = vmatprep.subr.bf16.mxu0 0
        %4608 = vmatpush1.bf16.msra.mxu0 0
        %4609 = vmatprep.subr.bf16.mxu0 0
        %4610 = vmatpush1.bf16.msra.mxu0 0
        %4611 = vmatprep.subr.bf16.mxu0 0
        %4612 = vmatpush1.bf16.msra.mxu0 0
        %4613 = vmatprep.subr.bf16.mxu0 0
        %4614 = vmatpush1.bf16.msra.mxu0 0
        %4615 = vmatprep.subr.bf16.mxu0 0
        %4616 = vmatpush1.bf16.msra.mxu0 0
        %4617 = vmatprep.subr.bf16.mxu0 0
        %4618 = vmatpush1.bf16.msra.mxu0 0
        %4619 = vmatprep.subr.bf16.mxu0 0
        %4620 = vmatpush1.bf16.msra.mxu0 0
        %4621 = vmatprep.subr.bf16.mxu0 0
        %4622 = vmatpush1.bf16.msra.mxu0 0
        %4623 = vmatprep.subr.bf16.mxu0 0
        %4624 = vmatpush1.bf16.msra.mxu0 0
        %4625 = vmatprep.subr.bf16.mxu0 0
        %4626 = vmatpush1.bf16.msra.mxu0 0
        %4627 = vmatprep.subr.bf16.mxu0 0
        %4628 = vmatpush1.bf16.msra.mxu0 0
        %4629 = vmatprep.mubr.bf16.mxu0 0
        %4630 = vmatmul.mubr.bf16.gmra.mrb[0].mxu0 %v4595
        %v4631 = vpop.f32.mrb[0].mxu0
        %v4632 = vadd.f32 0.0, %v4631
        %v4633 = vpop.f32.mrb[0].mxu0
        %v4634 = vpop.f32.mrb[0].mxu0
        %v4635 = vadd.f32 0.0, %v4634
        %v4636 = vpop.f32.mrb[0].mxu0
        %4637 = vdwg.mxu0
        %v4639 = vsel %vm3829, %v4192, 0
        %4641 = vmatprep.subr.bf16.mxu0 0
        %4642 = vmatpush1.bf16.msra.mxu0 %v3054
        %4643 = vmatprep.subr.bf16.mxu0 0
        %4644 = vmatpush1.bf16.msra.mxu0 0
        %4645 = vmatprep.subr.bf16.mxu0 0
        %4646 = vmatpush1.bf16.msra.mxu0 0
        %4647 = vmatprep.subr.bf16.mxu0 0
        %4648 = vmatpush1.bf16.msra.mxu0 0
        %4649 = vmatprep.subr.bf16.mxu0 0
        %4650 = vmatpush1.bf16.msra.mxu0 0
        %4651 = vmatprep.subr.bf16.mxu0 0
        %4652 = vmatpush1.bf16.msra.mxu0 0
        %4653 = vmatprep.subr.bf16.mxu0 0
        %4654 = vmatpush1.bf16.msra.mxu0 0
        %4655 = vmatprep.subr.bf16.mxu0 0
        %4656 = vmatpush1.bf16.msra.mxu0 0
        %4657 = vmatprep.subr.bf16.mxu0 0
        %4658 = vmatpush1.bf16.msra.mxu0 0
        %4659 = vmatprep.subr.bf16.mxu0 0
        %4660 = vmatpush1.bf16.msra.mxu0 0
        %4661 = vmatprep.subr.bf16.mxu0 0
        %4662 = vmatpush1.bf16.msra.mxu0 0
        %4663 = vmatprep.subr.bf16.mxu0 0
        %4664 = vmatpush1.bf16.msra.mxu0 0
        %4665 = vmatprep.subr.bf16.mxu0 0
        %4666 = vmatpush1.bf16.msra.mxu0 0
        %4667 = vmatprep.subr.bf16.mxu0 0
        %4668 = vmatpush1.bf16.msra.mxu0 0
        %4669 = vmatprep.subr.bf16.mxu0 0
        %4670 = vmatpush1.bf16.msra.mxu0 0
        %4671 = vmatprep.subr.bf16.mxu0 0
        %4672 = vmatpush1.bf16.msra.mxu0 0
        %4673 = vmatprep.mubr.bf16.mxu0 0
        %4674 = vmatmul.mubr.bf16.gmra.mrb[0].mxu0 %v4639
        %v4675 = vpop.f32.mrb[0].mxu0
        %v4676 = vadd.f32 0.0, %v4675
        %v4677 = vpop.f32.mrb[0].mxu0
        %v4678 = vpop.f32.mrb[0].mxu0
        %v4679 = vadd.f32 0.0, %v4678
        %v4680 = vpop.f32.mrb[0].mxu0
        %4681 = vdwg.mxu0
        %v4683 = vsel %vm3829, %v4193, 0
        %4685 = vmatprep.subr.bf16.mxu0 0
        %4686 = vmatpush1.bf16.msra.mxu0 %v3058
        %4687 = vmatprep.subr.bf16.mxu0 0
        %4688 = vmatpush1.bf16.msra.mxu0 0
        %4689 = vmatprep.subr.bf16.mxu0 0
        %4690 = vmatpush1.bf16.msra.mxu0 0
        %4691 = vmatprep.subr.bf16.mxu0 0
        %4692 = vmatpush1.bf16.msra.mxu0 0
        %4693 = vmatprep.subr.bf16.mxu0 0
        %4694 = vmatpush1.bf16.msra.mxu0 0
        %4695 = vmatprep.subr.bf16.mxu0 0
        %4696 = vmatpush1.bf16.msra.mxu0 0
        %4697 = vmatprep.subr.bf16.mxu0 0
        %4698 = vmatpush1.bf16.msra.mxu0 0
        %4699 = vmatprep.subr.bf16.mxu0 0
        %4700 = vmatpush1.bf16.msra.mxu0 0
        %4701 = vmatprep.subr.bf16.mxu0 0
        %4702 = vmatpush1.bf16.msra.mxu0 0
        %4703 = vmatprep.subr.bf16.mxu0 0
        %4704 = vmatpush1.bf16.msra.mxu0 0
        %4705 = vmatprep.subr.bf16.mxu0 0
        %4706 = vmatpush1.bf16.msra.mxu0 0
        %4707 = vmatprep.subr.bf16.mxu0 0
        %4708 = vmatpush1.bf16.msra.mxu0 0
        %4709 = vmatprep.subr.bf16.mxu0 0
        %4710 = vmatpush1.bf16.msra.mxu0 0
        %4711 = vmatprep.subr.bf16.mxu0 0
        %4712 = vmatpush1.bf16.msra.mxu0 0
        %4713 = vmatprep.subr.bf16.mxu0 0
        %4714 = vmatpush1.bf16.msra.mxu0 0
        %4715 = vmatprep.subr.bf16.mxu0 0
        %4716 = vmatpush1.bf16.msra.mxu0 0
        %4717 = vmatprep.mubr.bf16.mxu0 0
        %4718 = vmatmul.mubr.bf16.gmra.mrb[0].mxu0 %v4683
        %v4719 = vpop.f32.mrb[0].mxu0
        %v4720 = vadd.f32 0.0, %v4719
        %v4721 = vpop.f32.mrb[0].mxu0
        %v4722 = vpop.f32.mrb[0].mxu0
        %v4723 = vadd.f32 0.0, %v4722
        %v4724 = vpop.f32.mrb[0].mxu0
        %4725 = vdwg.mxu0
        %v4727 = vsel %vm3829, %v4194, 0
        %4729 = vmatprep.subr.bf16.mxu0 0
        %4730 = vmatpush1.bf16.msra.mxu0 %v3062
        %4731 = vmatprep.subr.bf16.mxu0 0
        %4732 = vmatpush1.bf16.msra.mxu0 0
        %4733 = vmatprep.subr.bf16.mxu0 0
        %4734 = vmatpush1.bf16.msra.mxu0 0
        %4735 = vmatprep.subr.bf16.mxu0 0
        %4736 = vmatpush1.bf16.msra.mxu0 0
        %4737 = vmatprep.subr.bf16.mxu0 0
        %4738 = vmatpush1.bf16.msra.mxu0 0
        %4739 = vmatprep.subr.bf16.mxu0 0
        %4740 = vmatpush1.bf16.msra.mxu0 0
        %4741 = vmatprep.subr.bf16.mxu0 0
        %4742 = vmatpush1.bf16.msra.mxu0 0
        %4743 = vmatprep.subr.bf16.mxu0 0
        %4744 = vmatpush1.bf16.msra.mxu0 0
        %4745 = vmatprep.subr.bf16.mxu0 0
        %4746 = vmatpush1.bf16.msra.mxu0 0
        %4747 = vmatprep.subr.bf16.mxu0 0
        %4748 = vmatpush1.bf16.msra.mxu0 0
        %4749 = vmatprep.subr.bf16.mxu0 0
        %4750 = vmatpush1.bf16.msra.mxu0 0
        %4751 = vmatprep.subr.bf16.mxu0 0
        %4752 = vmatpush1.bf16.msra.mxu0 0
        %4753 = vmatprep.subr.bf16.mxu0 0
        %4754 = vmatpush1.bf16.msra.mxu0 0
        %4755 = vmatprep.subr.bf16.mxu0 0
        %4756 = vmatpush1.bf16.msra.mxu0 0
        %4757 = vmatprep.subr.bf16.mxu0 0
        %4758 = vmatpush1.bf16.msra.mxu0 0
        %4759 = vmatprep.subr.bf16.mxu0 0
        %4760 = vmatpush1.bf16.msra.mxu0 0
        %4761 = vmatprep.mubr.bf16.mxu0 0
        %4762 = vmatmul.mubr.bf16.gmra.mrb[0].mxu0 %v4727
        %v4763 = vpop.f32.mrb[0].mxu0
        %v4764 = vadd.f32 0.0, %v4763
        %v4765 = vpop.f32.mrb[0].mxu0
        %v4766 = vpop.f32.mrb[0].mxu0
        %v4767 = vadd.f32 0.0, %v4766
        %v4768 = vpop.f32.mrb[0].mxu0
        %4769 = vdwg.mxu0
        %v4771 = vsel %vm3829, %v4195, 0
        %4773 = vmatprep.subr.bf16.mxu0 0
        %4774 = vmatpush1.bf16.msra.mxu0 %v3066
        %4775 = vmatprep.subr.bf16.mxu0 0
        %4776 = vmatpush1.bf16.msra.mxu0 0
        %4777 = vmatprep.subr.bf16.mxu0 0
        %4778 = vmatpush1.bf16.msra.mxu0 0
        %4779 = vmatprep.subr.bf16.mxu0 0
        %4780 = vmatpush1.bf16.msra.mxu0 0
        %4781 = vmatprep.subr.bf16.mxu0 0
        %4782 = vmatpush1.bf16.msra.mxu0 0
        %4783 = vmatprep.subr.bf16.mxu0 0
        %4784 = vmatpush1.bf16.msra.mxu0 0
        %4785 = vmatprep.subr.bf16.mxu0 0
        %4786 = vmatpush1.bf16.msra.mxu0 0
        %4787 = vmatprep.subr.bf16.mxu0 0
        %4788 = vmatpush1.bf16.msra.mxu0 0
        %4789 = vmatprep.subr.bf16.mxu0 0
        %4790 = vmatpush1.bf16.msra.mxu0 0
        %4791 = vmatprep.subr.bf16.mxu0 0
        %4792 = vmatpush1.bf16.msra.mxu0 0
        %4793 = vmatprep.subr.bf16.mxu0 0
        %4794 = vmatpush1.bf16.msra.mxu0 0
        %4795 = vmatprep.subr.bf16.mxu0 0
        %4796 = vmatpush1.bf16.msra.mxu0 0
        %4797 = vmatprep.subr.bf16.mxu0 0
        %4798 = vmatpush1.bf16.msra.mxu0 0
        %4799 = vmatprep.subr.bf16.mxu0 0
        %4800 = vmatpush1.bf16.msra.mxu0 0
        %4801 = vmatprep.subr.bf16.mxu0 0
        %4802 = vmatpush1.bf16.msra.mxu0 0
        %4803 = vmatprep.subr.bf16.mxu0 0
        %4804 = vmatpush1.bf16.msra.mxu0 0
        %4805 = vmatprep.mubr.bf16.mxu0 0
        %4806 = vmatmul.mubr.bf16.gmra.mrb[0].mxu0 %v4771
        %v4807 = vpop.f32.mrb[0].mxu0
        %v4808 = vadd.f32 0.0, %v4807
        %v4809 = vpop.f32.mrb[0].mxu0
        %v4810 = vpop.f32.mrb[0].mxu0
        %v4811 = vadd.f32 0.0, %v4810
        %v4812 = vpop.f32.mrb[0].mxu0
        %4813 = vdwg.mxu0
        %v4815 = vsel %vm3829, %v4196, 0
        %4817 = vmatprep.subr.bf16.mxu0 0
        %4818 = vmatpush1.bf16.msra.mxu0 %v3070
        %4819 = vmatprep.subr.bf16.mxu0 0
        %4820 = vmatpush1.bf16.msra.mxu0 0
        %4821 = vmatprep.subr.bf16.mxu0 0
        %4822 = vmatpush1.bf16.msra.mxu0 0
        %4823 = vmatprep.subr.bf16.mxu0 0
        %4824 = vmatpush1.bf16.msra.mxu0 0
        %4825 = vmatprep.subr.bf16.mxu0 0
        %4826 = vmatpush1.bf16.msra.mxu0 0
        %4827 = vmatprep.subr.bf16.mxu0 0
        %4828 = vmatpush1.bf16.msra.mxu0 0
        %4829 = vmatprep.subr.bf16.mxu0 0
        %4830 = vmatpush1.bf16.msra.mxu0 0
        %4831 = vmatprep.subr.bf16.mxu0 0
        %4832 = vmatpush1.bf16.msra.mxu0 0
        %4833 = vmatprep.subr.bf16.mxu0 0
        %4834 = vmatpush1.bf16.msra.mxu0 0
        %4835 = vmatprep.subr.bf16.mxu0 0
        %4836 = vmatpush1.bf16.msra.mxu0 0
        %4837 = vmatprep.subr.bf16.mxu0 0
        %4838 = vmatpush1.bf16.msra.mxu0 0
        %4839 = vmatprep.subr.bf16.mxu0 0
        %4840 = vmatpush1.bf16.msra.mxu0 0
        %4841 = vmatprep.subr.bf16.mxu0 0
        %4842 = vmatpush1.bf16.msra.mxu0 0
        %4843 = vmatprep.subr.bf16.mxu0 0
        %4844 = vmatpush1.bf16.msra.mxu0 0
        %4845 = vmatprep.subr.bf16.mxu0 0
        %4846 = vmatpush1.bf16.msra.mxu0 0
        %4847 = vmatprep.subr.bf16.mxu0 0
        %4848 = vmatpush1.bf16.msra.mxu0 0
        %4849 = vmatprep.mubr.bf16.mxu0 0
        %4850 = vmatmul.mubr.bf16.gmra.mrb[0].mxu0 %v4815
        %v4851 = vpop.f32.mrb[0].mxu0
        %v4852 = vadd.f32 0.0, %v4851
        %v4853 = vpop.f32.mrb[0].mxu0
        %v4854 = vpop.f32.mrb[0].mxu0
        %v4855 = vadd.f32 0.0, %v4854
        %v4856 = vpop.f32.mrb[0].mxu0
        %4857 = vdwg.mxu0
        %v4859 = vsel %vm3829, %v4197, 0
        %4861 = vmatprep.subr.bf16.mxu0 0
        %4862 = vmatpush1.bf16.msra.mxu0 %v3074
        %4863 = vmatprep.subr.bf16.mxu0 0
        %4864 = vmatpush1.bf16.msra.mxu0 0
        %4865 = vmatprep.subr.bf16.mxu0 0
        %4866 = vmatpush1.bf16.msra.mxu0 0
        %4867 = vmatprep.subr.bf16.mxu0 0
        %4868 = vmatpush1.bf16.msra.mxu0 0
        %4869 = vmatprep.subr.bf16.mxu0 0
        %4870 = vmatpush1.bf16.msra.mxu0 0
        %4871 = vmatprep.subr.bf16.mxu0 0
        %4872 = vmatpush1.bf16.msra.mxu0 0
        %4873 = vmatprep.subr.bf16.mxu0 0
        %4874 = vmatpush1.bf16.msra.mxu0 0
        %4875 = vmatprep.subr.bf16.mxu0 0
        %4876 = vmatpush1.bf16.msra.mxu0 0
        %4877 = vmatprep.subr.bf16.mxu0 0
        %4878 = vmatpush1.bf16.msra.mxu0 0
        %4879 = vmatprep.subr.bf16.mxu0 0
        %4880 = vmatpush1.bf16.msra.mxu0 0
        %4881 = vmatprep.subr.bf16.mxu0 0
        %4882 = vmatpush1.bf16.msra.mxu0 0
        %4883 = vmatprep.subr.bf16.mxu0 0
        %4884 = vmatpush1.bf16.msra.mxu0 0
        %4885 = vmatprep.subr.bf16.mxu0 0
        %4886 = vmatpush1.bf16.msra.mxu0 0
        %4887 = vmatprep.subr.bf16.mxu0 0
        %4888 = vmatpush1.bf16.msra.mxu0 0
        %4889 = vmatprep.subr.bf16.mxu0 0
        %4890 = vmatpush1.bf16.msra.mxu0 0
        %4891 = vmatprep.subr.bf16.mxu0 0
        %4892 = vmatpush1.bf16.msra.mxu0 0
        %4893 = vmatprep.mubr.bf16.mxu0 0
        %4894 = vmatmul.mubr.bf16.gmra.mrb[0].mxu0 %v4859
        %v4895 = vpop.f32.mrb[0].mxu0
        %v4896 = vadd.f32 0.0, %v4895
        %v4897 = vpop.f32.mrb[0].mxu0
        %v4898 = vpop.f32.mrb[0].mxu0
        %v4899 = vadd.f32 0.0, %v4898
        %v4900 = vpop.f32.mrb[0].mxu0
        %4901 = vdwg.mxu0
        %v4902 = vpack.c.bf16 %v4239, %v4236
        %v4903 = vpack.c.bf16 %v4283, %v4280
        %v4904 = vpack.c.bf16 %v4327, %v4324
        %v4905 = vpack.c.bf16 %v4371, %v4368
        %v4906 = vpack.c.bf16 %v4415, %v4412
        %v4907 = vpack.c.bf16 %v4459, %v4456
        %v4908 = vpack.c.bf16 %v4503, %v4500
        %v4909 = vpack.c.bf16 %v4547, %v4544
        %v4910 = vpack.c.bf16 %v4591, %v4588
        %v4911 = vpack.c.bf16 %v4635, %v4632
        %v4912 = vpack.c.bf16 %v4679, %v4676
        %v4913 = vpack.c.bf16 %v4723, %v4720
        %v4914 = vpack.c.bf16 %v4767, %v4764
        %v4915 = vpack.c.bf16 %v4811, %v4808
        %v4916 = vpack.c.bf16 %v4855, %v4852
        %v4917 = vpack.c.bf16 %v4899, %v4896
        %v4920 = vpack.i.b16 %v4903, %v4902
        %v4922 = vshrl.u32 %v4902, 16
        %v4923 = vshrl.u32 %v4903, 16
        %v4924 = vpack.i.b16 %v4923, %v4922
        %v4928 = vpack.i.b16 %v4905, %v4904
        %v4930 = vshrl.u32 %v4904, 16
        %v4931 = vshrl.u32 %v4905, 16
        %v4932 = vpack.i.b16 %v4931, %v4930
        %v4936 = vpack.i.b16 %v4907, %v4906
        %v4938 = vshrl.u32 %v4906, 16
        %v4939 = vshrl.u32 %v4907, 16
        %v4940 = vpack.i.b16 %v4939, %v4938
        %v4944 = vpack.i.b16 %v4909, %v4908
        %v4946 = vshrl.u32 %v4908, 16
        %v4947 = vshrl.u32 %v4909, 16
        %v4948 = vpack.i.b16 %v4947, %v4946
        %v4952 = vpack.i.b16 %v4911, %v4910
        %v4954 = vshrl.u32 %v4910, 16
        %v4955 = vshrl.u32 %v4911, 16
        %v4956 = vpack.i.b16 %v4955, %v4954
        %v4960 = vpack.i.b16 %v4913, %v4912
        %v4962 = vshrl.u32 %v4912, 16
        %v4963 = vshrl.u32 %v4913, 16
        %v4964 = vpack.i.b16 %v4963, %v4962
        %v4968 = vpack.i.b16 %v4915, %v4914
        %v4970 = vshrl.u32 %v4914, 16
        %v4971 = vshrl.u32 %v4915, 16
        %v4972 = vpack.i.b16 %v4971, %v4970
        %v4976 = vpack.i.b16 %v4917, %v4916
        %v4978 = vshrl.u32 %v4916, 16
        %v4979 = vshrl.u32 %v4917, 16
        %v4980 = vpack.i.b16 %v4979, %v4978
        %v4982 = vcombine.low %v4920, %v4936
        %v4983 = vcombine.high %v4920, %v4936
        %v4985 = vunpack.c.l.s4 1983009808
        %v4986 = vunpack.c.0.s8 %v4985
        %v4987 = vlaneseq
        %v4988 = vshrl.u32 %v4987, 7
        %v4989 = vsub.s32 %v4986, %v4988
        %v4990 = vrot.slane %v4982, %v4989
        %v4992 = vunpack.c.l.s4 1983009808
        %v4993 = vunpack.c.0.s8 %v4992
        %v4994 = vlaneseq
        %v4995 = vshrl.u32 %v4994, 7
        %v4996 = vsub.s32 %v4993, %v4995
        %v4997 = vrot.slane %v4983, %v4996
        %v4998 = vcombine.low %v4928, %v4944
        %v4999 = vcombine.high %v4928, %v4944
        %v5001 = vunpack.c.l.s4 1983009808
        %v5002 = vunpack.c.0.s8 %v5001
        %v5003 = vlaneseq
        %v5004 = vshrl.u32 %v5003, 7
        %v5005 = vsub.s32 %v5002, %v5004
        %v5006 = vrot.slane %v4998, %v5005
        %v5008 = vunpack.c.l.s4 1983009808
        %v5009 = vunpack.c.0.s8 %v5008
        %v5010 = vlaneseq
        %v5011 = vshrl.u32 %v5010, 7
        %v5012 = vsub.s32 %v5009, %v5011
        %v5013 = vrot.slane %v4999, %v5012
        %v5014 = vcombine.low %v4990, %v5006
        %v5015 = vcombine.high %v4990, %v5006
        %v5017 = vunpack.c.l.s4 1934713408
        %v5018 = vunpack.c.0.s8 %v5017
        %v5019 = vlaneseq
        %v5020 = vshrl.u32 %v5019, 7
        %v5021 = vsub.s32 %v5018, %v5020
        %v5022 = vrot.slane %v5014, %v5021
        %v5024 = vunpack.c.l.s4 1934713408
        %v5025 = vunpack.c.0.s8 %v5024
        %v5026 = vlaneseq
        %v5027 = vshrl.u32 %v5026, 7
        %v5028 = vsub.s32 %v5025, %v5027
        %v5029 = vrot.slane %v5015, %v5028
        %v5030 = vcombine.low %v4997, %v5013
        %v5031 = vcombine.high %v4997, %v5013
        %v5033 = vunpack.c.l.s4 1934713408
        %v5034 = vunpack.c.0.s8 %v5033
        %v5035 = vlaneseq
        %v5036 = vshrl.u32 %v5035, 7
        %v5037 = vsub.s32 %v5034, %v5036
        %v5038 = vrot.slane %v5030, %v5037
        %v5040 = vunpack.c.l.s4 1934713408
        %v5041 = vunpack.c.0.s8 %v5040
        %v5042 = vlaneseq
        %v5043 = vshrl.u32 %v5042, 7
        %v5044 = vsub.s32 %v5041, %v5043
        %v5045 = vrot.slane %v5031, %v5044
        %v5046 = vcombine.high %v5022, 0
        %v5047 = vcombine.high %v5029, 0
        %v5048 = vcombine.high %v5038, 0
        %v5049 = vcombine.high %v5045, 0
        %v5050 = vcombine.low %v4924, %v4940
        %v5051 = vcombine.high %v4924, %v4940
        %v5053 = vunpack.c.l.s4 1983009808
        %v5054 = vunpack.c.0.s8 %v5053
        %v5055 = vlaneseq
        %v5056 = vshrl.u32 %v5055, 7
        %v5057 = vsub.s32 %v5054, %v5056
        %v5058 = vrot.slane %v5050, %v5057
        %v5060 = vunpack.c.l.s4 1983009808
        %v5061 = vunpack.c.0.s8 %v5060
        %v5062 = vlaneseq
        %v5063 = vshrl.u32 %v5062, 7
        %v5064 = vsub.s32 %v5061, %v5063
        %v5065 = vrot.slane %v5051, %v5064
        %v5066 = vcombine.low %v4932, %v4948
        %v5067 = vcombine.high %v4932, %v4948
        %v5069 = vunpack.c.l.s4 1983009808
        %v5070 = vunpack.c.0.s8 %v5069
        %v5071 = vlaneseq
        %v5072 = vshrl.u32 %v5071, 7
        %v5073 = vsub.s32 %v5070, %v5072
        %v5074 = vrot.slane %v5066, %v5073
        %v5076 = vunpack.c.l.s4 1983009808
        %v5077 = vunpack.c.0.s8 %v5076
        %v5078 = vlaneseq
        %v5079 = vshrl.u32 %v5078, 7
        %v5080 = vsub.s32 %v5077, %v5079
        %v5081 = vrot.slane %v5067, %v5080
        %v5082 = vcombine.low %v5058, %v5074
        %v5083 = vcombine.high %v5058, %v5074
        %v5085 = vunpack.c.l.s4 1934713408
        %v5086 = vunpack.c.0.s8 %v5085
        %v5087 = vlaneseq
        %v5088 = vshrl.u32 %v5087, 7
        %v5089 = vsub.s32 %v5086, %v5088
        %v5090 = vrot.slane %v5082, %v5089
        %v5092 = vunpack.c.l.s4 1934713408
        %v5093 = vunpack.c.0.s8 %v5092
        %v5094 = vlaneseq
        %v5095 = vshrl.u32 %v5094, 7
        %v5096 = vsub.s32 %v5093, %v5095
        %v5097 = vrot.slane %v5083, %v5096
        %v5098 = vcombine.low %v5065, %v5081
        %v5099 = vcombine.high %v5065, %v5081
        %v5101 = vunpack.c.l.s4 1934713408
        %v5102 = vunpack.c.0.s8 %v5101
        %v5103 = vlaneseq
        %v5104 = vshrl.u32 %v5103, 7
        %v5105 = vsub.s32 %v5102, %v5104
        %v5106 = vrot.slane %v5098, %v5105
        %v5108 = vunpack.c.l.s4 1934713408
        %v5109 = vunpack.c.0.s8 %v5108
        %v5110 = vlaneseq
        %v5111 = vshrl.u32 %v5110, 7
        %v5112 = vsub.s32 %v5109, %v5111
        %v5113 = vrot.slane %v5099, %v5112
        %v5114 = vcombine.high %v5090, 0
        %v5115 = vcombine.high %v5097, 0
        %v5116 = vcombine.high %v5106, 0
        %v5117 = vcombine.high %v5113, 0
        %v5118 = vcombine.low %v4952, %v4968
        %v5119 = vcombine.high %v4952, %v4968
        %v5121 = vunpack.c.l.s4 1983009808
        %v5122 = vunpack.c.0.s8 %v5121
        %v5123 = vlaneseq
        %v5124 = vshrl.u32 %v5123, 7
        %v5125 = vsub.s32 %v5122, %v5124
        %v5126 = vrot.slane %v5118, %v5125
        %v5128 = vunpack.c.l.s4 1983009808
        %v5129 = vunpack.c.0.s8 %v5128
        %v5130 = vlaneseq
        %v5131 = vshrl.u32 %v5130, 7
        %v5132 = vsub.s32 %v5129, %v5131
        %v5133 = vrot.slane %v5119, %v5132
        %v5134 = vcombine.low %v4960, %v4976
        %v5135 = vcombine.high %v4960, %v4976
        %v5137 = vunpack.c.l.s4 1983009808
        %v5138 = vunpack.c.0.s8 %v5137
        %v5139 = vlaneseq
        %v5140 = vshrl.u32 %v5139, 7
        %v5141 = vsub.s32 %v5138, %v5140
        %v5142 = vrot.slane %v5134, %v5141
        %v5144 = vunpack.c.l.s4 1983009808
        %v5145 = vunpack.c.0.s8 %v5144
        %v5146 = vlaneseq
        %v5147 = vshrl.u32 %v5146, 7
        %v5148 = vsub.s32 %v5145, %v5147
        %v5149 = vrot.slane %v5135, %v5148
        %v5150 = vcombine.low %v5126, %v5142
        %v5151 = vcombine.high %v5126, %v5142
        %v5153 = vunpack.c.l.s4 1934713408
        %v5154 = vunpack.c.0.s8 %v5153
        %v5155 = vlaneseq
        %v5156 = vshrl.u32 %v5155, 7
        %v5157 = vsub.s32 %v5154, %v5156
        %v5158 = vrot.slane %v5150, %v5157
        %v5160 = vunpack.c.l.s4 1934713408
        %v5161 = vunpack.c.0.s8 %v5160
        %v5162 = vlaneseq
        %v5163 = vshrl.u32 %v5162, 7
        %v5164 = vsub.s32 %v5161, %v5163
        %v5165 = vrot.slane %v5151, %v5164
        %v5166 = vcombine.low %v5133, %v5149
        %v5167 = vcombine.high %v5133, %v5149
        %v5169 = vunpack.c.l.s4 1934713408
        %v5170 = vunpack.c.0.s8 %v5169
        %v5171 = vlaneseq
        %v5172 = vshrl.u32 %v5171, 7
        %v5173 = vsub.s32 %v5170, %v5172
        %v5174 = vrot.slane %v5166, %v5173
        %v5176 = vunpack.c.l.s4 1934713408
        %v5177 = vunpack.c.0.s8 %v5176
        %v5178 = vlaneseq
        %v5179 = vshrl.u32 %v5178, 7
        %v5180 = vsub.s32 %v5177, %v5179
        %v5181 = vrot.slane %v5167, %v5180
        %v5182 = vcombine.high %v5158, 0
        %v5183 = vcombine.high %v5165, 0
        %v5184 = vcombine.high %v5174, 0
        %v5185 = vcombine.high %v5181, 0
        %v5186 = vcombine.low %v4956, %v4972
        %v5187 = vcombine.high %v4956, %v4972
        %v5189 = vunpack.c.l.s4 1983009808
        %v5190 = vunpack.c.0.s8 %v5189
        %v5191 = vlaneseq
        %v5192 = vshrl.u32 %v5191, 7
        %v5193 = vsub.s32 %v5190, %v5192
        %v5194 = vrot.slane %v5186, %v5193
        %v5196 = vunpack.c.l.s4 1983009808
        %v5197 = vunpack.c.0.s8 %v5196
        %v5198 = vlaneseq
        %v5199 = vshrl.u32 %v5198, 7
        %v5200 = vsub.s32 %v5197, %v5199
        %v5201 = vrot.slane %v5187, %v5200
        %v5202 = vcombine.low %v4964, %v4980
        %v5203 = vcombine.high %v4964, %v4980
        %v5205 = vunpack.c.l.s4 1983009808
        %v5206 = vunpack.c.0.s8 %v5205
        %v5207 = vlaneseq
        %v5208 = vshrl.u32 %v5207, 7
        %v5209 = vsub.s32 %v5206, %v5208
        %v5210 = vrot.slane %v5202, %v5209
        %v5212 = vunpack.c.l.s4 1983009808
        %v5213 = vunpack.c.0.s8 %v5212
        %v5214 = vlaneseq
        %v5215 = vshrl.u32 %v5214, 7
        %v5216 = vsub.s32 %v5213, %v5215
        %v5217 = vrot.slane %v5203, %v5216
        %v5218 = vcombine.low %v5194, %v5210
        %v5219 = vcombine.high %v5194, %v5210
        %v5221 = vunpack.c.l.s4 1934713408
        %v5222 = vunpack.c.0.s8 %v5221
        %v5223 = vlaneseq
        %v5224 = vshrl.u32 %v5223, 7
        %v5225 = vsub.s32 %v5222, %v5224
        %v5226 = vrot.slane %v5218, %v5225
        %v5228 = vunpack.c.l.s4 1934713408
        %v5229 = vunpack.c.0.s8 %v5228
        %v5230 = vlaneseq
        %v5231 = vshrl.u32 %v5230, 7
        %v5232 = vsub.s32 %v5229, %v5231
        %v5233 = vrot.slane %v5219, %v5232
        %v5234 = vcombine.low %v5201, %v5217
        %v5235 = vcombine.high %v5201, %v5217
        %v5237 = vunpack.c.l.s4 1934713408
        %v5238 = vunpack.c.0.s8 %v5237
        %v5239 = vlaneseq
        %v5240 = vshrl.u32 %v5239, 7
        %v5241 = vsub.s32 %v5238, %v5240
        %v5242 = vrot.slane %v5234, %v5241
        %v5244 = vunpack.c.l.s4 1934713408
        %v5245 = vunpack.c.0.s8 %v5244
        %v5246 = vlaneseq
        %v5247 = vshrl.u32 %v5246, 7
        %v5248 = vsub.s32 %v5245, %v5247
        %v5249 = vrot.slane %v5235, %v5248
        %v5250 = vcombine.high %v5226, 0
        %v5251 = vcombine.high %v5233, 0
        %v5252 = vcombine.high %v5242, 0
        %v5253 = vcombine.high %v5249, 0
        %v5254 = vcombine.low %v5022, %v5029
        %v5256 = vunpack.c.l.s4 1983009808
        %v5257 = vunpack.c.0.s8 %v5256
        %v5258 = vlaneseq
        %v5259 = vshrl.u32 %v5258, 7
        %v5260 = vsub.s32 %v5257, %v5259
        %v5261 = vrot.slane %v5254, %v5260
        %v5262 = vcombine.low %v5046, %v5047
        %v5264 = vunpack.c.l.s4 1983009808
        %v5265 = vunpack.c.0.s8 %v5264
        %v5266 = vlaneseq
        %v5267 = vshrl.u32 %v5266, 7
        %v5268 = vsub.s32 %v5265, %v5267
        %v5269 = vrot.slane %v5262, %v5268
        %v5270 = vcombine.low %v5038, %v5045
        %v5272 = vunpack.c.l.s4 1983009808
        %v5273 = vunpack.c.0.s8 %v5272
        %v5274 = vlaneseq
        %v5275 = vshrl.u32 %v5274, 7
        %v5276 = vsub.s32 %v5273, %v5275
        %v5277 = vrot.slane %v5270, %v5276
        %v5278 = vcombine.low %v5048, %v5049
        %v5280 = vunpack.c.l.s4 1983009808
        %v5281 = vunpack.c.0.s8 %v5280
        %v5282 = vlaneseq
        %v5283 = vshrl.u32 %v5282, 7
        %v5284 = vsub.s32 %v5281, %v5283
        %v5285 = vrot.slane %v5278, %v5284
        %v5286 = vcombine.low %v5261, %v5269
        %v5287 = vcombine.high %v5261, %v5269
        %v5289 = vunpack.c.l.s4 1934713408
        %v5290 = vunpack.c.0.s8 %v5289
        %v5291 = vlaneseq
        %v5292 = vshrl.u32 %v5291, 7
        %v5293 = vsub.s32 %v5290, %v5292
        %v5294 = vrot.slane %v5286, %v5293
        %v5296 = vunpack.c.l.s4 1934713408
        %v5297 = vunpack.c.0.s8 %v5296
        %v5298 = vlaneseq
        %v5299 = vshrl.u32 %v5298, 7
        %v5300 = vsub.s32 %v5297, %v5299
        %v5301 = vrot.slane %v5287, %v5300
        %v5302 = vcombine.low %v5277, %v5285
        %v5303 = vcombine.high %v5277, %v5285
        %v5305 = vunpack.c.l.s4 1934713408
        %v5306 = vunpack.c.0.s8 %v5305
        %v5307 = vlaneseq
        %v5308 = vshrl.u32 %v5307, 7
        %v5309 = vsub.s32 %v5306, %v5308
        %v5310 = vrot.slane %v5302, %v5309
        %v5312 = vunpack.c.l.s4 1934713408
        %v5313 = vunpack.c.0.s8 %v5312
        %v5314 = vlaneseq
        %v5315 = vshrl.u32 %v5314, 7
        %v5316 = vsub.s32 %v5313, %v5315
        %v5317 = vrot.slane %v5303, %v5316
        %v5318 = vcombine.low %v5294, %v5310
        %v5319 = vcombine.high %v5294, %v5310
        %v5320 = vcombine.low %v5301, %v5317
        %v5321 = vcombine.high %v5301, %v5317
        %v5322 = vcombine.low %v5090, %v5097
        %v5324 = vunpack.c.l.s4 1983009808
        %v5325 = vunpack.c.0.s8 %v5324
        %v5326 = vlaneseq
        %v5327 = vshrl.u32 %v5326, 7
        %v5328 = vsub.s32 %v5325, %v5327
        %v5329 = vrot.slane %v5322, %v5328
        %v5330 = vcombine.low %v5114, %v5115
        %v5332 = vunpack.c.l.s4 1983009808
        %v5333 = vunpack.c.0.s8 %v5332
        %v5334 = vlaneseq
        %v5335 = vshrl.u32 %v5334, 7
        %v5336 = vsub.s32 %v5333, %v5335
        %v5337 = vrot.slane %v5330, %v5336
        %v5338 = vcombine.low %v5106, %v5113
        %v5340 = vunpack.c.l.s4 1983009808
        %v5341 = vunpack.c.0.s8 %v5340
        %v5342 = vlaneseq
        %v5343 = vshrl.u32 %v5342, 7
        %v5344 = vsub.s32 %v5341, %v5343
        %v5345 = vrot.slane %v5338, %v5344
        %v5346 = vcombine.low %v5116, %v5117
        %v5348 = vunpack.c.l.s4 1983009808
        %v5349 = vunpack.c.0.s8 %v5348
        %v5350 = vlaneseq
        %v5351 = vshrl.u32 %v5350, 7
        %v5352 = vsub.s32 %v5349, %v5351
        %v5353 = vrot.slane %v5346, %v5352
        %v5354 = vcombine.low %v5329, %v5337
        %v5355 = vcombine.high %v5329, %v5337
        %v5357 = vunpack.c.l.s4 1934713408
        %v5358 = vunpack.c.0.s8 %v5357
        %v5359 = vlaneseq
        %v5360 = vshrl.u32 %v5359, 7
        %v5361 = vsub.s32 %v5358, %v5360
        %v5362 = vrot.slane %v5354, %v5361
        %v5364 = vunpack.c.l.s4 1934713408
        %v5365 = vunpack.c.0.s8 %v5364
        %v5366 = vlaneseq
        %v5367 = vshrl.u32 %v5366, 7
        %v5368 = vsub.s32 %v5365, %v5367
        %v5369 = vrot.slane %v5355, %v5368
        %v5370 = vcombine.low %v5345, %v5353
        %v5371 = vcombine.high %v5345, %v5353
        %v5373 = vunpack.c.l.s4 1934713408
        %v5374 = vunpack.c.0.s8 %v5373
        %v5375 = vlaneseq
        %v5376 = vshrl.u32 %v5375, 7
        %v5377 = vsub.s32 %v5374, %v5376
        %v5378 = vrot.slane %v5370, %v5377
        %v5380 = vunpack.c.l.s4 1934713408
        %v5381 = vunpack.c.0.s8 %v5380
        %v5382 = vlaneseq
        %v5383 = vshrl.u32 %v5382, 7
        %v5384 = vsub.s32 %v5381, %v5383
        %v5385 = vrot.slane %v5371, %v5384
        %v5386 = vcombine.low %v5362, %v5378
        %v5387 = vcombine.high %v5362, %v5378
        %v5388 = vcombine.low %v5369, %v5385
        %v5389 = vcombine.high %v5369, %v5385
        %v5390 = vcombine.low %v5158, %v5165
        %v5392 = vunpack.c.l.s4 1983009808
        %v5393 = vunpack.c.0.s8 %v5392
        %v5394 = vlaneseq
        %v5395 = vshrl.u32 %v5394, 7
        %v5396 = vsub.s32 %v5393, %v5395
        %v5397 = vrot.slane %v5390, %v5396
        %v5398 = vcombine.low %v5182, %v5183
        %v5400 = vunpack.c.l.s4 1983009808
        %v5401 = vunpack.c.0.s8 %v5400
        %v5402 = vlaneseq
        %v5403 = vshrl.u32 %v5402, 7
        %v5404 = vsub.s32 %v5401, %v5403
        %v5405 = vrot.slane %v5398, %v5404
        %v5406 = vcombine.low %v5174, %v5181
        %v5408 = vunpack.c.l.s4 1983009808
        %v5409 = vunpack.c.0.s8 %v5408
        %v5410 = vlaneseq
        %v5411 = vshrl.u32 %v5410, 7
        %v5412 = vsub.s32 %v5409, %v5411
        %v5413 = vrot.slane %v5406, %v5412
        %v5414 = vcombine.low %v5184, %v5185
        %v5416 = vunpack.c.l.s4 1983009808
        %v5417 = vunpack.c.0.s8 %v5416
        %v5418 = vlaneseq
        %v5419 = vshrl.u32 %v5418, 7
        %v5420 = vsub.s32 %v5417, %v5419
        %v5421 = vrot.slane %v5414, %v5420
        %v5422 = vcombine.low %v5397, %v5405
        %v5423 = vcombine.high %v5397, %v5405
        %v5425 = vunpack.c.l.s4 1934713408
        %v5426 = vunpack.c.0.s8 %v5425
        %v5427 = vlaneseq
        %v5428 = vshrl.u32 %v5427, 7
        %v5429 = vsub.s32 %v5426, %v5428
        %v5430 = vrot.slane %v5422, %v5429
        %v5432 = vunpack.c.l.s4 1934713408
        %v5433 = vunpack.c.0.s8 %v5432
        %v5434 = vlaneseq
        %v5435 = vshrl.u32 %v5434, 7
        %v5436 = vsub.s32 %v5433, %v5435
        %v5437 = vrot.slane %v5423, %v5436
        %v5438 = vcombine.low %v5413, %v5421
        %v5439 = vcombine.high %v5413, %v5421
        %v5441 = vunpack.c.l.s4 1934713408
        %v5442 = vunpack.c.0.s8 %v5441
        %v5443 = vlaneseq
        %v5444 = vshrl.u32 %v5443, 7
        %v5445 = vsub.s32 %v5442, %v5444
        %v5446 = vrot.slane %v5438, %v5445
        %v5448 = vunpack.c.l.s4 1934713408
        %v5449 = vunpack.c.0.s8 %v5448
        %v5450 = vlaneseq
        %v5451 = vshrl.u32 %v5450, 7
        %v5452 = vsub.s32 %v5449, %v5451
        %v5453 = vrot.slane %v5439, %v5452
        %v5454 = vcombine.low %v5430, %v5446
        %v5455 = vcombine.high %v5430, %v5446
        %v5456 = vcombine.low %v5437, %v5453
        %v5457 = vcombine.high %v5437, %v5453
        %v5458 = vcombine.low %v5226, %v5233
        %v5460 = vunpack.c.l.s4 1983009808
        %v5461 = vunpack.c.0.s8 %v5460
        %v5462 = vlaneseq
        %v5463 = vshrl.u32 %v5462, 7
        %v5464 = vsub.s32 %v5461, %v5463
        %v5465 = vrot.slane %v5458, %v5464
        %v5466 = vcombine.low %v5250, %v5251
        %v5468 = vunpack.c.l.s4 1983009808
        %v5469 = vunpack.c.0.s8 %v5468
        %v5470 = vlaneseq
        %v5471 = vshrl.u32 %v5470, 7
        %v5472 = vsub.s32 %v5469, %v5471
        %v5473 = vrot.slane %v5466, %v5472
        %v5474 = vcombine.low %v5242, %v5249
        %v5476 = vunpack.c.l.s4 1983009808
        %v5477 = vunpack.c.0.s8 %v5476
        %v5478 = vlaneseq
        %v5479 = vshrl.u32 %v5478, 7
        %v5480 = vsub.s32 %v5477, %v5479
        %v5481 = vrot.slane %v5474, %v5480
        %v5482 = vcombine.low %v5252, %v5253
        %v5484 = vunpack.c.l.s4 1983009808
        %v5485 = vunpack.c.0.s8 %v5484
        %v5486 = vlaneseq
        %v5487 = vshrl.u32 %v5486, 7
        %v5488 = vsub.s32 %v5485, %v5487
        %v5489 = vrot.slane %v5482, %v5488
        %v5490 = vcombine.low %v5465, %v5473
        %v5491 = vcombine.high %v5465, %v5473
        %v5493 = vunpack.c.l.s4 1934713408
        %v5494 = vunpack.c.0.s8 %v5493
        %v5495 = vlaneseq
        %v5496 = vshrl.u32 %v5495, 7
        %v5497 = vsub.s32 %v5494, %v5496
        %v5498 = vrot.slane %v5490, %v5497
        %v5500 = vunpack.c.l.s4 1934713408
        %v5501 = vunpack.c.0.s8 %v5500
        %v5502 = vlaneseq
        %v5503 = vshrl.u32 %v5502, 7
        %v5504 = vsub.s32 %v5501, %v5503
        %v5505 = vrot.slane %v5491, %v5504
        %v5506 = vcombine.low %v5481, %v5489
        %v5507 = vcombine.high %v5481, %v5489
        %v5509 = vunpack.c.l.s4 1934713408
        %v5510 = vunpack.c.0.s8 %v5509
        %v5511 = vlaneseq
        %v5512 = vshrl.u32 %v5511, 7
        %v5513 = vsub.s32 %v5510, %v5512
        %v5514 = vrot.slane %v5506, %v5513
        %v5516 = vunpack.c.l.s4 1934713408
        %v5517 = vunpack.c.0.s8 %v5516
        %v5518 = vlaneseq
        %v5519 = vshrl.u32 %v5518, 7
        %v5520 = vsub.s32 %v5517, %v5519
        %v5521 = vrot.slane %v5507, %v5520
        %v5522 = vcombine.low %v5498, %v5514
        %v5523 = vcombine.high %v5498, %v5514
        %v5524 = vcombine.low %v5505, %v5521
        %v5525 = vcombine.high %v5505, %v5521
        %v5528 = vpack.i.b16 %v5386, %v5318
        %v5529 = vshrl.u32 %v5318, 16
        %v5530 = vshrl.u32 %v5386, 16
        %v5531 = vpack.i.b16 %v5530, %v5529
        %v5534 = vpack.i.b16 %v5387, %v5319
        %v5535 = vshrl.u32 %v5319, 16
        %v5536 = vshrl.u32 %v5387, 16
        %v5537 = vpack.i.b16 %v5536, %v5535
        %v5540 = vpack.i.b16 %v5388, %v5320
        %v5541 = vshrl.u32 %v5320, 16
        %v5542 = vshrl.u32 %v5388, 16
        %v5543 = vpack.i.b16 %v5542, %v5541
        %v5546 = vpack.i.b16 %v5389, %v5321
        %v5547 = vshrl.u32 %v5321, 16
        %v5548 = vshrl.u32 %v5389, 16
        %v5549 = vpack.i.b16 %v5548, %v5547
        %v5552 = vpack.i.b16 %v5522, %v5454
        %v5553 = vshrl.u32 %v5454, 16
        %v5554 = vshrl.u32 %v5522, 16
        %v5555 = vpack.i.b16 %v5554, %v5553
        %v5558 = vpack.i.b16 %v5523, %v5455
        %v5559 = vshrl.u32 %v5455, 16
        %v5560 = vshrl.u32 %v5523, 16
        %v5561 = vpack.i.b16 %v5560, %v5559
        %v5564 = vpack.i.b16 %v5524, %v5456
        %v5565 = vshrl.u32 %v5456, 16
        %v5566 = vshrl.u32 %v5524, 16
        %v5567 = vpack.i.b16 %v5566, %v5565
        %v5570 = vpack.i.b16 %v5525, %v5457
        %v5571 = vshrl.u32 %v5457, 16
        %v5572 = vshrl.u32 %v5525, 16
        %v5573 = vpack.i.b16 %v5572, %v5571
        %5574 = vrot.lane.b32.xlu0 %v5531, 32
        %v5575 = vpop.permute.xlu0 %5574
        %5576 = vrot.lane.b32.xlu0 %v5555, 32
        %v5577 = vpop.permute.xlu0 %5576
        %5578 = vrot.lane.b32.xlu0 %v5534, 64
        %v5579 = vpop.permute.xlu0 %5578
        %5580 = vrot.lane.b32.xlu0 %v5558, 64
        %v5581 = vpop.permute.xlu0 %5580
        %5582 = vrot.lane.b32.xlu0 %v5537, 96
        %v5583 = vpop.permute.xlu0 %5582
        %5584 = vrot.lane.b32.xlu0 %v5561, 96
        %v5585 = vpop.permute.xlu0 %5584
        %5586 = vrot.lane.b32.xlu0 %v5543, 32
        %v5587 = vpop.permute.xlu0 %5586
        %5588 = vrot.lane.b32.xlu0 %v5567, 32
        %v5589 = vpop.permute.xlu0 %5588
        %5590 = vrot.lane.b32.xlu0 %v5546, 64
        %v5591 = vpop.permute.xlu0 %5590
        %5592 = vrot.lane.b32.xlu0 %v5570, 64
        %v5593 = vpop.permute.xlu0 %5592
        %5594 = vrot.lane.b32.xlu0 %v5549, 96
        %v5595 = vpop.permute.xlu0 %5594
        %5596 = vrot.lane.b32.xlu0 %v5573, 96
        %v5597 = vpop.permute.xlu0 %5596
        %v5600 = vsel %vm3076, %v5528, %v5575
        %v5603 = vsel %vm3076, %v5552, %v5577
        %vm5604 = vcmask 523264
        %v5606 = vsel %vm5604, %v5600, %v5579
        %v5608 = vsel %vm5604, %v5603, %v5581
        %vm5609 = vcmask 785408
        %v5611 = vsel %vm5609, %v5606, %v5583
        %v5614 = vsel %vm5609, %v5608, %v5585
        %v5618 = vsel %vm3076, %v5540, %v5587
        %v5621 = vsel %vm3076, %v5564, %v5589
        %v5623 = vsel %vm5604, %v5618, %v5591
        %v5625 = vsel %vm5604, %v5621, %v5593
        %v5627 = vsel %vm5609, %v5623, %v5595
        %v5630 = vsel %vm5609, %v5625, %v5597
        %v5632 = vld [vmem:[#allocation7] sm:$0xff]
        %v5633 = vld [vmem:[#allocation7 + $0x8] sm:$0xff]
        %v5634 = vld [vmem:[#allocation7 + $0x10] sm:$0xff]
        %v5635 = vld [vmem:[#allocation7 + $0x18] sm:$0xff]
        %v5636 = vld [vmem:[#allocation7 + $0x20] sm:$0xff]
        %v5637 = vld [vmem:[#allocation7 + $0x28] sm:$0xff]
        %v5638 = vld [vmem:[#allocation7 + $0x30] sm:$0xff]
        %v5639 = vld [vmem:[#allocation7 + $0x38] sm:$0xff]
        %v5640 = vld [vmem:[#allocation7 + $0x40] sm:$0xff]
        %v5641 = vld [vmem:[#allocation7 + $0x48] sm:$0xff]
        %v5642 = vld [vmem:[#allocation7 + $0x50] sm:$0xff]
        %v5643 = vld [vmem:[#allocation7 + $0x58] sm:$0xff]
        %v5644 = vld [vmem:[#allocation7 + $0x60] sm:$0xff]
        %v5645 = vld [vmem:[#allocation7 + $0x68] sm:$0xff]
        %v5646 = vld [vmem:[#allocation7 + $0x70] sm:$0xff]
        %v5647 = vld [vmem:[#allocation7 + $0x78] sm:$0xff]
        %v5648 = vld [vmem:[#allocation7 + $0x80] sm:$0xff]
        %v5649 = vld [vmem:[#allocation7 + $0x88] sm:$0xff]
        %v5650 = vld [vmem:[#allocation7 + $0x90] sm:$0xff]
        %v5651 = vld [vmem:[#allocation7 + $0x98] sm:$0xff]
        %v5652 = vld [vmem:[#allocation7 + $0xa0] sm:$0xff]
        %v5653 = vld [vmem:[#allocation7 + $0xa8] sm:$0xff]
        %v5654 = vld [vmem:[#allocation7 + $0xb0] sm:$0xff]
        %v5655 = vld [vmem:[#allocation7 + $0xb8] sm:$0xff]
        %v5656 = vld [vmem:[#allocation7 + $0xc0] sm:$0xff]
        %v5657 = vld [vmem:[#allocation7 + $0xc8] sm:$0xff]
        %v5658 = vld [vmem:[#allocation7 + $0xd0] sm:$0xff]
        %v5659 = vld [vmem:[#allocation7 + $0xd8] sm:$0xff]
        %v5660 = vld [vmem:[#allocation7 + $0xe0] sm:$0xff]
        %v5661 = vld [vmem:[#allocation7 + $0xe8] sm:$0xff]
        %v5662 = vld [vmem:[#allocation7 + $0xf0] sm:$0xff]
        %v5663 = vld [vmem:[#allocation7 + $0xf8] sm:$0xff]
        %v5664 = vld [vmem:[%s3] sm:$0x3]
        %v5666 = vlaneseq
        %v5667 = vshrl.u32 %v5666, 7
        %v5668 = vsub.s32 0, %v5667
        %v5669 = vrot.slane %v5664, %v5668
        %v5670 = vlaneseq
        %v5671 = vshrl.u32 %v5670, 7
        %v5672 = vsub.s32 1, %v5671
        %v5673 = vrot.slane %v5664, %v5672
        %v5708 = vunpack.c.l.b16 %v5632
        %v5709 = vunpack.c.h.b16 %v5632
        %v5710 = vunpack.c.l.b16 %v5633
        %v5711 = vunpack.c.h.b16 %v5633
        %v5712 = vunpack.c.l.b16 %v5634
        %v5713 = vunpack.c.h.b16 %v5634
        %v5714 = vunpack.c.l.b16 %v5635
        %v5715 = vunpack.c.h.b16 %v5635
        %v5716 = vunpack.c.l.b16 %v5636
        %v5717 = vunpack.c.h.b16 %v5636
        %v5718 = vunpack.c.l.b16 %v5637
        %v5719 = vunpack.c.h.b16 %v5637
        %v5720 = vunpack.c.l.b16 %v5638
        %v5721 = vunpack.c.h.b16 %v5638
        %v5722 = vunpack.c.l.b16 %v5639
        %v5723 = vunpack.c.h.b16 %v5639
        %v5724 = vunpack.c.l.b16 %v5640
        %v5725 = vunpack.c.h.b16 %v5640
        %v5726 = vunpack.c.l.b16 %v5641
        %v5727 = vunpack.c.h.b16 %v5641
        %v5728 = vunpack.c.l.b16 %v5642
        %v5729 = vunpack.c.h.b16 %v5642
        %v5730 = vunpack.c.l.b16 %v5643
        %v5731 = vunpack.c.h.b16 %v5643
        %v5732 = vunpack.c.l.b16 %v5644
        %v5733 = vunpack.c.h.b16 %v5644
        %v5734 = vunpack.c.l.b16 %v5645
        %v5735 = vunpack.c.h.b16 %v5645
        %v5736 = vunpack.c.l.b16 %v5646
        %v5737 = vunpack.c.h.b16 %v5646
        %v5738 = vunpack.c.l.b16 %v5647
        %v5739 = vunpack.c.h.b16 %v5647
        %v5740 = vunpack.c.l.b16 %v5648
        %v5741 = vunpack.c.h.b16 %v5648
        %v5742 = vunpack.c.l.b16 %v5649
        %v5743 = vunpack.c.h.b16 %v5649
        %v5744 = vunpack.c.l.b16 %v5650
        %v5745 = vunpack.c.h.b16 %v5650
        %v5746 = vunpack.c.l.b16 %v5651
        %v5747 = vunpack.c.h.b16 %v5651
        %v5748 = vunpack.c.l.b16 %v5652
        %v5749 = vunpack.c.h.b16 %v5652
        %v5750 = vunpack.c.l.b16 %v5653
        %v5751 = vunpack.c.h.b16 %v5653
        %v5752 = vunpack.c.l.b16 %v5654
        %v5753 = vunpack.c.h.b16 %v5654
        %v5754 = vunpack.c.l.b16 %v5655
        %v5755 = vunpack.c.h.b16 %v5655
        %v5756 = vunpack.c.l.b16 %v5656
        %v5757 = vunpack.c.h.b16 %v5656
        %v5758 = vunpack.c.l.b16 %v5657
        %v5759 = vunpack.c.h.b16 %v5657
        %v5760 = vunpack.c.l.b16 %v5658
        %v5761 = vunpack.c.h.b16 %v5658
        %v5762 = vunpack.c.l.b16 %v5659
        %v5763 = vunpack.c.h.b16 %v5659
        %v5764 = vunpack.c.l.b16 %v5660
        %v5765 = vunpack.c.h.b16 %v5660
        %v5766 = vunpack.c.l.b16 %v5661
        %v5767 = vunpack.c.h.b16 %v5661
        %v5768 = vunpack.c.l.b16 %v5662
        %v5769 = vunpack.c.h.b16 %v5662
        %v5770 = vunpack.c.l.b16 %v5663
        %v5771 = vunpack.c.h.b16 %v5663
        %v5772 = vpack.c.b16 %v5710, %v5708
        %v5773 = vpack.c.b16 %v5711, %v5709
        %v5774 = vpack.c.b16 %v5714, %v5712
        %v5775 = vpack.c.b16 %v5715, %v5713
        %v5776 = vpack.c.b16 %v5718, %v5716
        %v5777 = vpack.c.b16 %v5719, %v5717
        %v5778 = vpack.c.b16 %v5722, %v5720
        %v5779 = vpack.c.b16 %v5723, %v5721
        %v5780 = vpack.c.b16 %v5726, %v5724
        %v5781 = vpack.c.b16 %v5727, %v5725
        %v5782 = vpack.c.b16 %v5730, %v5728
        %v5783 = vpack.c.b16 %v5731, %v5729
        %v5784 = vpack.c.b16 %v5734, %v5732
        %v5785 = vpack.c.b16 %v5735, %v5733
        %v5786 = vpack.c.b16 %v5738, %v5736
        %v5787 = vpack.c.b16 %v5739, %v5737
        %v5788 = vpack.c.b16 %v5742, %v5740
        %v5789 = vpack.c.b16 %v5743, %v5741
        %v5790 = vpack.c.b16 %v5746, %v5744
        %v5791 = vpack.c.b16 %v5747, %v5745
        %v5792 = vpack.c.b16 %v5750, %v5748
        %v5793 = vpack.c.b16 %v5751, %v5749
        %v5794 = vpack.c.b16 %v5754, %v5752
        %v5795 = vpack.c.b16 %v5755, %v5753
        %v5796 = vpack.c.b16 %v5758, %v5756
        %v5797 = vpack.c.b16 %v5759, %v5757
        %v5798 = vpack.c.b16 %v5762, %v5760
        %v5799 = vpack.c.b16 %v5763, %v5761
        %v5800 = vpack.c.b16 %v5766, %v5764
        %v5801 = vpack.c.b16 %v5767, %v5765
        %v5802 = vpack.c.b16 %v5770, %v5768
        %v5803 = vpack.c.b16 %v5771, %v5769
        %5836 = vmatprep.subr.bf16.mxu0 %v5773
        %5837 = vmatpush1.bf16.msra.mxu0 %v5772
        %5838 = vmatprep.subr.bf16.mxu0 %v5775
        %5839 = vmatpush1.bf16.msra.mxu0 %v5774
        %5840 = vmatprep.subr.bf16.mxu0 %v5777
        %5841 = vmatpush1.bf16.msra.mxu0 %v5776
        %5842 = vmatprep.subr.bf16.mxu0 %v5779
        %5843 = vmatpush1.bf16.msra.mxu0 %v5778
        %5844 = vmatprep.subr.bf16.mxu0 %v5781
        %5845 = vmatpush1.bf16.msra.mxu0 %v5780
        %5846 = vmatprep.subr.bf16.mxu0 %v5783
        %5847 = vmatpush1.bf16.msra.mxu0 %v5782
        %5848 = vmatprep.subr.bf16.mxu0 %v5785
        %5849 = vmatpush1.bf16.msra.mxu0 %v5784
        %5850 = vmatprep.subr.bf16.mxu0 %v5787
        %5851 = vmatpush1.bf16.msra.mxu0 %v5786
        %5852 = vmatprep.subr.bf16.mxu0 %v5789
        %5853 = vmatpush1.bf16.msra.mxu0 %v5788
        %5854 = vmatprep.subr.bf16.mxu0 %v5791
        %5855 = vmatpush1.bf16.msra.mxu0 %v5790
        %5856 = vmatprep.subr.bf16.mxu0 %v5793
        %5857 = vmatpush1.bf16.msra.mxu0 %v5792
        %5858 = vmatprep.subr.bf16.mxu0 %v5795
        %5859 = vmatpush1.bf16.msra.mxu0 %v5794
        %5860 = vmatprep.subr.bf16.mxu0 %v5797
        %5861 = vmatpush1.bf16.msra.mxu0 %v5796
        %5862 = vmatprep.subr.bf16.mxu0 %v5799
        %5863 = vmatpush1.bf16.msra.mxu0 %v5798
        %5864 = vmatprep.subr.bf16.mxu0 %v5801
        %5865 = vmatpush1.bf16.msra.mxu0 %v5800
        %5866 = vmatprep.subr.bf16.mxu0 %v5803
        %5867 = vmatpush1.bf16.msra.mxu0 %v5802
        %5868 = vmatprep.mubr.bf16.mxu0 %v5627
        %5869 = vmatmul.mubr.bf16.gmra.mrb[0].mxu0 %v5611
        %v5870 = vpop.f32.mrb[0].mxu0
        %v5871 = vadd.f32 %v5669, %v5870
        %v5872 = vpop.f32.mrb[0].mxu0
        %v5873 = vadd.f32 %v5673, %v5872
        %v5874 = vpop.f32.mrb[0].mxu0
        %v5875 = vadd.f32 %v5669, %v5874
        %v5876 = vpop.f32.mrb[0].mxu0
        %v5877 = vadd.f32 %v5673, %v5876
        %5878 = vmatprep.mubr.bf16.mxu0 %v5630
        %5879 = vmatmul.mubr.bf16.gmra.mrb[0].mxu0 %v5614
        %v5880 = vpop.f32.mrb[0].mxu0
        %v5881 = vadd.f32 %v5669, %v5880
        %v5882 = vpop.f32.mrb[0].mxu0
        %v5883 = vadd.f32 %v5673, %v5882
        %v5884 = vpop.f32.mrb[0].mxu0
        %v5885 = vadd.f32 %v5669, %v5884
        %v5886 = vpop.f32.mrb[0].mxu0
        %v5887 = vadd.f32 %v5673, %v5886
        %5888 = vdwg.mxu0
        %5889 = vst [vmem:[%s245] sm:$0xff] %v5871
        %5890 = vst [vmem:[%s245 + $0x8] sm:$0xff] %v5873
        %5891 = vst [vmem:[%s245 + $0x10] sm:$0xff] %v5875
        %5892 = vst [vmem:[%s245 + $0x18] sm:$0xff] %v5877
        %5893 = vst [vmem:[%s245 + $0x20] sm:$0xff] %v5881
        %5894 = vst [vmem:[%s245 + $0x28] sm:$0xff] %v5883
        %5895 = vst [vmem:[%s245 + $0x30] sm:$0xff] %v5885
        %5896 = vst [vmem:[%s245 + $0x38] sm:$0xff] %v5887
        %s5897 = sand.u32 %s119, 1
        %s5898 = scalar_lea.sflag [#allocation4], %s5897
        %s5899 = sand.u32 %s119, 1
        %s5900 = smul.addr %s5899, 64
        %s5901 = scalar_lea.vmem [#allocation8], %s5900
        // Predicated region
        $region49: #{tpu_custom_call.1} parent=35 // pred_check
          %p5902 = pneg %p129
        $region50: #{tpu_custom_call.1} parent=35 // pred_check_branch
          %5904 = sbr.rel (%p5902) target = $region52
        $region51: #{tpu_custom_call.1} parent=35 // pred_region
          %s5905 = smul.u32 2, %s22
          %s5907 = ssub.s32 1024, 1024
          %5908 = vsyncadd %s5898, %s5907
          %s5909 = smul.addr %s5905, 4
          %s5910 = smul.addr %s5909, 128
          %s5911 = scalar_lea.hbm %s4, %s5910
          %s5912 = sshll.u32 %s5901, 4
          %s5913 = int_to_ptr.vmem [resolvable:$true] %s5912
          %5918 = dma.vmem_to_hbm [thread:$0]  %s5913, 1024, %s5911, %s5898, 256, 256, 16
        $region52: #{tpu_custom_call.1} parent=35 // pred_fallthru
          _
      $region36: #{tpu_custom_call.1} parent=5 // pred_fallthru
        _
      %p5919 = scmp.le.s32.totalorder 2, %s17
      // Predicated region
      $region53: #{tpu_custom_call.1} parent=5 // pred_check
        %p5920 = pneg %p5919
      $region54: #{tpu_custom_call.1} parent=5 // pred_check_branch
        %5922 = sbr.rel (%p5920) target = $region56
      $region55: #{tpu_custom_call.1} parent=5 // pred_region
        %s5923 = ssub.s32 %s17, 2
        // Predicated region
        $region57: #{tpu_custom_call.1} parent=55 // pred_check
          %p5924 = pneg %p135
        $region58: #{tpu_custom_call.1} parent=55 // pred_check_branch
          %5926 = sbr.rel (%p5924) target = $region60
        $region59: #{tpu_custom_call.1} parent=55 // pred_region
          %s5927 = sand.u32 %s120, 1
          %s5928 = scalar_lea.sflag [#allocation4], %s5927
          %s5929 = sand.u32 %s120, 1
          %s5930 = smul.addr %s5929, 64
          %s5931 = scalar_lea.vmem [#allocation8], %s5930
          %5932 = dma.done %s5928, 1024
        $region60: #{tpu_custom_call.1} parent=55 // pred_fallthru
          _
      $region56: #{tpu_custom_call.1} parent=5 // pred_fallthru
        _
    $region6: #{tpu_custom_call.1} parent=1 // loop_footer
      %s21 = sadd.s32 1, %s17
    $region7: #{tpu_custom_call.1} parent=1 // loop_footer_branch
      %16 = sbr.rel target = $region3
    $region8: #{tpu_custom_call.1} parent=1 // loop_exit
      _
    %5933 = vsyncpa [#allocation3], 1
    %s5934 = scalar_lea.sflag [#allocation3], 1
    %5935 = vsyncpa %s5934, 1
    %5936 = vsyncpa [#allocation6], 1
    %5937 = vsyncpa [#allocation4], 1
    %s5938 = scalar_lea.sflag [#allocation4], 1
    %5939 = vsyncpa %s5938, 1

</llo_original>
